<compile_context>
chip_gen: v5e
topology: v5e:2x2
jax: 0.10.0
libtpu: 0.0.40
codegen_flags: <defaults>
</compile_context>

<pallas_src>
import math

import jax
import jax.numpy as jnp
from jax.experimental import pallas as pl
from jax.experimental.pallas import tpu as pltpu

NUM_HEADS = 4
BN_EPS = 1e-5


def _gnn_kernel(is_cross_ref,                      # SMEM (L,) i32 scalar-prefetch
                x_in_ref,                          # (2B, N, D) f32 initial descriptors
                wq_ref, bq_ref, wk_ref, bk_ref, wv_ref, bv_ref,
                wm_ref, bm_ref,
                w1x_ref, w1m_ref, b1_ref, gamma_ref, beta_ref,
                w2_ref, b2_ref,
                out_ref,                           # (2B, N, D) f32 output
                state_ref):                        # (2B, N, D) f32 VMEM carry
    layer = pl.program_id(0)

    # Load the initial descriptors into the carry once; afterwards state_ref
    # holds the running descriptors across all grid (= layer) steps.
    @pl.when(layer == 0)
    def _():
        state_ref[...] = x_in_ref[...]

    x = state_ref[...]                             # (SB, N, D) f32, pre-update
    SB, N, D = x.shape
    B = SB // 2
    H = NUM_HEADS
    dm = D // H

    # Attention source: 'self' -> own set, 'cross' -> the other set (swap halves).
    swapped = jnp.concatenate([x[B:], x[:B]], axis=0)
    is_cross = is_cross_ref[layer]
    src = jnp.where(is_cross == 1, swapped, x)     # (SB, N, D)

    # Fold (set, batch, token) into one MXU row dim; bf16 operands, f32 accum.
    x2d = x.reshape(SB * N, D).astype(jnp.bfloat16)
    s2d = src.reshape(SB * N, D).astype(jnp.bfloat16)

    scale = 1.0 / math.sqrt(dm)
    message = jnp.zeros((SB * N, D), jnp.float32)

    for h in range(H):                             # static unroll over 4 heads
        # Per-head projections: heads selected by indexing the leading (major)
        # axis of pre-split weights -> no lane slicing of activations.
        qh = jnp.dot(x2d, wq_ref[h], preferred_element_type=jnp.float32) + bq_ref[h]
        kh = jnp.dot(s2d, wk_ref[h], preferred_element_type=jnp.float32) + bk_ref[h]
        vh = jnp.dot(s2d, wv_ref[h], preferred_element_type=jnp.float32) + bv_ref[h]
        qh = qh.reshape(SB, N, dm).astype(jnp.bfloat16)
        kh = kh.reshape(SB, N, dm).astype(jnp.bfloat16)
        vh = vh.reshape(SB, N, dm).astype(jnp.bfloat16)

        scores = jnp.einsum('bnd,bmd->bnm', qh, kh,
                            preferred_element_type=jnp.float32) * scale
        scores = scores - jnp.max(scores, axis=-1, keepdims=True)   # f32 softmax
        p = jnp.exp(scores)
        denom = jnp.sum(p, axis=-1, keepdims=True)
        p = p * pl.reciprocal(denom, approx=True)                   # EUP, frees VALU

        ctx = jnp.einsum('bnm,bmd->bnd', p.astype(jnp.bfloat16), vh,
                         preferred_element_type=jnp.float32)        # (SB, N, dm)

        # Merge conv applied per head: an extra MXU accumulate instead of a
        # lane-axis concat of the head outputs.
        message = message + jnp.dot(ctx.reshape(SB * N, dm).astype(jnp.bfloat16),
                                    wm_ref[h], preferred_element_type=jnp.float32)

    message = message + bm_ref[...]                # (SB*N, D)

    # MLP first conv with the [x | message] channel-concat folded into split
    # weights: y1 = x @ W1x + message @ W1m + b1.
    y1 = (jnp.dot(x2d, w1x_ref[...], preferred_element_type=jnp.float32)
          + jnp.dot(message.astype(jnp.bfloat16), w1m_ref[...],
                    preferred_element_type=jnp.float32)
          + b1_ref[...])                           # (SB*N, 2D)

    # BatchNorm1d, training-mode batch stats, one pass, per descriptor set
    # (PyTorch applies the module separately to desc0 and desc1).
    y1 = y1.reshape(2, B * N, 2 * D)
    mean = jnp.mean(y1, axis=1, keepdims=True)
    mean_sq = jnp.mean(y1 * y1, axis=1, keepdims=True)
    var = mean_sq - mean * mean
    y1 = (y1 - mean) * jax.lax.rsqrt(var + BN_EPS)
    y1 = y1 * gamma_ref[...] + beta_ref[...]
    y1 = jnp.maximum(y1, 0.0).reshape(SB * N, 2 * D)

    delta = (jnp.dot(y1.astype(jnp.bfloat16), w2_ref[...],
                     preferred_element_type=jnp.float32) + b2_ref[...])

    new_x = x + delta.reshape(SB, N, D)            # residual update (GNNLayer)
    state_ref[...] = new_x                         # carry for the next layer
    out_ref[...] = new_x                           # single HBM writeback at grid end


def init_layer_params(key, D):
    """One GNNLayer's AttentionalPropagation params, pre-arranged for the kernel."""
    h = NUM_HEADS
    keys = jax.random.split(key, 11)

    def u(k, shape, fan_in):
        bound = 1.0 / math.sqrt(fan_in)
        return jax.random.uniform(k, shape, jnp.float32, -bound, bound)

    # PyTorch Conv1d(kernel_size=1) weights are (out_ch, in_ch).
    Wq, bq = u(keys[0], (D, D), D), u(keys[1], (D,), D)
    Wk, bk = u(keys[2], (D, D), D), u(keys[3], (D,), D)
    Wv, bv = u(keys[4], (D, D), D), u(keys[5], (D,), D)
    Wm, bm = u(keys[6], (D, D), D), u(keys[7], (D,), D)
    W1, b1 = u(keys[8], (2 * D, 2 * D), 2 * D), u(keys[9], (2 * D,), 2 * D)
    W2 = u(keys[10], (D, 2 * D), 2 * D)
    b2 = jnp.zeros((D,), jnp.float32)              # nn.init.constant_(mlp[-1].bias, 0.)
    gamma = jnp.ones((2 * D,), jnp.float32)        # BatchNorm1d affine defaults
    beta = jnp.zeros((2 * D,), jnp.float32)

    # PyTorch's view(b, dim, h, n) maps channel c -> (d, head) with c = d*h+head,
    # i.e. head `hd` owns output channels hd::h of q/k/v and input channels hd::h
    # of the merge conv.  Pre-split per head so the kernel indexes a major axis.
    def split_out(W, b):                           # -> (H, D, dm) bf16, (H, 1, dm) f32
        ws = jnp.stack([W[hd::h, :].T for hd in range(h)], axis=0)
        bs = jnp.stack([b[hd::h][None, :] for hd in range(h)], axis=0)
        return ws.astype(jnp.bfloat16), bs

    wq, bq_ = split_out(Wq, bq)
    wk, bk_ = split_out(Wk, bk)
    wv, bv_ = split_out(Wv, bv)
    wm = jnp.stack([Wm[:, hd::h].T for hd in range(h)], axis=0).astype(jnp.bfloat16)

    return dict(
        wq=wq, bq=bq_, wk=wk, bk=bk_, wv=wv, bv=bv_,
        wm=wm, bm=bm[None, :],
        w1x=W1[:, :D].T.astype(jnp.bfloat16),      # [x | message] concat folded into
        w1m=W1[:, D:].T.astype(jnp.bfloat16),      # split first-conv weights
        b1=b1[None, :], gamma=gamma[None, :], beta=beta[None, :],
        w2=W2.T.astype(jnp.bfloat16), b2=b2[None, :],
    )


_PARAM_ORDER = ('wq', 'bq', 'wk', 'bk', 'wv', 'bv', 'wm', 'bm',
                'w1x', 'w1m', 'b1', 'gamma', 'beta', 'w2', 'b2')


def attentional_gnn(desc0, desc1, layer_types, layer_params):
    """desc0, desc1: (B, D, N) in PyTorch NCL layout.  Returns the same layout."""
    B, D, N = desc0.shape
    L = len(layer_types)
    assert L == len(layer_params) and L >= 1

    # (B, D, N) -> (B, N, D); stack both descriptor sets along the batch axis so
    # the whole GNN runs in ONE pallas_call with shared per-layer weights.
    x0 = jnp.transpose(desc0, (0, 2, 1)).astype(jnp.float32)
    x1 = jnp.transpose(desc1, (0, 2, 1)).astype(jnp.float32)
    x = jnp.concatenate([x0, x1], axis=0)                      # (2B, N, D)

    is_cross = jnp.asarray([1 if t == 'cross' else 0 for t in layer_types],
                           dtype=jnp.int32)                    # scalar-prefetch table

    # Stack per-layer weights along a leading layer axis for BlockSpec pipelining.
    w_args = [jnp.stack([p[name] for p in layer_params], axis=0)
              for name in _PARAM_ORDER]

    def full_spec():
        return pl.BlockSpec((2 * B, N, D), lambda layer, ic: (0, 0, 0))

    def w_spec(arr):
        zeros = (0,) * (arr.ndim - 1)
        return pl.BlockSpec((None,) + arr.shape[1:],           # squeeze layer axis
                            lambda layer, ic: (layer,) + zeros)

    out = pl.pallas_call(
        _gnn_kernel,
        grid_spec=pltpu.PrefetchScalarGridSpec(
            num_scalar_prefetch=1,
            grid=(L,),                                         # sequential over layers
            in_specs=[full_spec()] + [w_spec(a) for a in w_args],
            out_specs=full_spec(),                             # constant index ->
            scratch_shapes=[pltpu.VMEM((2 * B, N, D), jnp.float32)],  # single store
        ),
        out_shape=jax.ShapeDtypeStruct((2 * B, N, D), jnp.float32),
        # Layers form a dependent chain -> "arbitrary".  NOTE(v7x): sharding the
        # two descriptor sets across both TensorCores would forbid fusing the
        # layer chain (cross layers need the peer's pre-update state); at these
        # shapes launch/DMA overhead dominates, so full fusion wins.
        # pltpu.CompilerParams(vmem_limit_bytes=...) is the knob to raise once
        # tiles grow beyond demo size (v5e scoped default is 16 MiB).
        compiler_params=pltpu.CompilerParams(
            dimension_semantics=("arbitrary",)),
    )(is_cross, x, *w_args)

    return (jnp.transpose(out[:B], (0, 2, 1)),
            jnp.transpose(out[B:], (0, 2, 1)))


if __name__ == "__main__":
    key = jax.random.PRNGKey(0)
    B, D, N = 2, 32, 8                     # feature_dim=32, 4 heads -> head dim 8
    layer_types = ['self', 'cross']        # AttentionalGNN(feature_dim=32, [...])

    k0, k1, kp = jax.random.split(key, 3)
    desc0 = jax.random.normal(k0, (B, D, N), jnp.float32)
    desc1 = jax.random.normal(k1, (B, D, N), jnp.float32)

    layer_keys = jax.random.split(kp, len(layer_types))
    layer_params = [init_layer_params(k, D) for k in layer_keys]

    out0, out1 = attentional_gnn(desc0, desc1, layer_types, layer_params)
    out0, out1 = jax.block_until_ready((out0, out1))

    assert out0.shape == (B, D, N) and out1.shape == (B, D, N)
    assert bool(jnp.all(jnp.isfinite(out0))) and bool(jnp.all(jnp.isfinite(out1)))
    print("KERNEL_OK")
</pallas_src>

<mosaic_0001>
module attributes {stable_mosaic.version = 11 : i64} {
  func.func @_gnn_kernel(%arg0: i32, %arg1: memref<2xi32, #tpu.memory_space<smem>>, %arg2: memref<4x8x32xf32, #tpu.memory_space<vmem>>, %arg3: memref<1x4x32x8xbf16, #tpu.memory_space<vmem>>, %arg4: memref<1x4x1x8xf32, #tpu.memory_space<vmem>>, %arg5: memref<1x4x32x8xbf16, #tpu.memory_space<vmem>>, %arg6: memref<1x4x1x8xf32, #tpu.memory_space<vmem>>, %arg7: memref<1x4x32x8xbf16, #tpu.memory_space<vmem>>, %arg8: memref<1x4x1x8xf32, #tpu.memory_space<vmem>>, %arg9: memref<1x4x8x32xbf16, #tpu.memory_space<vmem>>, %arg10: memref<1x1x32xf32, #tpu.memory_space<vmem>>, %arg11: memref<1x32x64xbf16, #tpu.memory_space<vmem>>, %arg12: memref<1x32x64xbf16, #tpu.memory_space<vmem>>, %arg13: memref<1x1x64xf32, #tpu.memory_space<vmem>>, %arg14: memref<1x1x64xf32, #tpu.memory_space<vmem>>, %arg15: memref<1x1x64xf32, #tpu.memory_space<vmem>>, %arg16: memref<1x64x32xbf16, #tpu.memory_space<vmem>>, %arg17: memref<1x1x32xf32, #tpu.memory_space<vmem>>, %arg18: memref<4x8x32xf32, #tpu.memory_space<vmem>>, %arg19: memref<4x8x32xf32, #tpu.memory_space<vmem>>) attributes {dimension_semantics = [#tpu.dimension_semantics<arbitrary>], iteration_bounds = array<i64: 2>, scalar_prefetch = 1 : i64, scratch_operands = 1 : i64, tpu.core_type = #tpu.core_type<tc>, window_params = [{pipeline_mode = #tpu.pipeline_mode<synchronous>, transform_indices = @transform_0, window_bounds = array<i64: 4, 8, 32>}, {transform_indices = @transform_1, window_bounds = array<i64: 1, 4, 32, 8>}, {transform_indices = @transform_2, window_bounds = array<i64: 1, 4, 1, 8>}, {transform_indices = @transform_3, window_bounds = array<i64: 1, 4, 32, 8>}, {transform_indices = @transform_4, window_bounds = array<i64: 1, 4, 1, 8>}, {transform_indices = @transform_5, window_bounds = array<i64: 1, 4, 32, 8>}, {transform_indices = @transform_6, window_bounds = array<i64: 1, 4, 1, 8>}, {transform_indices = @transform_7, window_bounds = array<i64: 1, 4, 8, 32>}, {transform_indices = @transform_8, window_bounds = array<i64: 1, 1, 32>}, {transform_indices = @transform_9, window_bounds = array<i64: 1, 32, 64>}, {transform_indices = @transform_10, window_bounds = array<i64: 1, 32, 64>}, {transform_indices = @transform_11, window_bounds = array<i64: 1, 1, 64>}, {transform_indices = @transform_12, window_bounds = array<i64: 1, 1, 64>}, {transform_indices = @transform_13, window_bounds = array<i64: 1, 1, 64>}, {transform_indices = @transform_14, window_bounds = array<i64: 1, 64, 32>}, {transform_indices = @transform_15, window_bounds = array<i64: 1, 1, 32>}, {pipeline_mode = #tpu.pipeline_mode<synchronous>, transform_indices = @transform_16, window_bounds = array<i64: 4, 8, 32>}]} {
    %c0_i32 = arith.constant 0 : i32
    %0 = arith.cmpi eq, %arg0, %c0_i32 : i32
    %1 = arith.extui %0 : i1 to i32
    %c0_i32_0 = arith.constant 0 : i32
    %2 = arith.cmpi ne, %1, %c0_i32_0 : i32
    scf.if %2 {
      %c0_187 = arith.constant 0 : index
      %c0_188 = arith.constant 0 : index
      %c0_189 = arith.constant 0 : index
      %268 = vector.load %arg2[%c0_187, %c0_188, %c0_189] : memref<4x8x32xf32, #tpu.memory_space<vmem>>, vector<4x8x32xf32>
      %c0_190 = arith.constant 0 : index
      %c0_191 = arith.constant 0 : index
      %c0_192 = arith.constant 0 : index
      %269 = vector.load %arg19[%c0_190, %c0_191, %c0_192] : memref<4x8x32xf32, #tpu.memory_space<vmem>>, vector<4x8x32xf32>
      tpu.vector_store %arg19[%c0_190, %c0_191, %c0_192], %268 {strides = array<i32>} : memref<4x8x32xf32, #tpu.memory_space<vmem>>, vector<4x8x32xf32>,
    } else {
    }
    %c0 = arith.constant 0 : index
    %c0_1 = arith.constant 0 : index
    %c0_2 = arith.constant 0 : index
    %3 = vector.load %arg19[%c0, %c0_1, %c0_2] : memref<4x8x32xf32, #tpu.memory_space<vmem>>, vector<4x8x32xf32>
    %4 = vector.extract_strided_slice %3 {offsets = [2, 0, 0], sizes = [2, 8, 32], strides = [1, 1, 1]} : vector<4x8x32xf32> to vector<2x8x32xf32>
    %5 = vector.extract_strided_slice %3 {offsets = [0, 0, 0], sizes = [2, 8, 32], strides = [1, 1, 1]} : vector<4x8x32xf32> to vector<2x8x32xf32>
    %6 = tpu.concatenate %4, %5 in 0 : vector<2x8x32xf32>, vector<2x8x32xf32> -> vector<4x8x32xf32>
    %7 = arith.index_cast %arg0 : i32 to index
    %8 = memref.load %arg1[%7] : memref<2xi32, #tpu.memory_space<smem>>
    %c1_i32 = arith.constant 1 : i32
    %9 = arith.cmpi eq, %8, %c1_i32 : i32
    %10 = arith.select %9, %6, %3 : vector<4x8x32xf32>
    %11 = vector.shape_cast %3 : vector<4x8x32xf32> to vector<32x32xf32>
    %12 = arith.truncf %11 : vector<32x32xf32> to vector<32x32xbf16>
    %13 = vector.shape_cast %10 : vector<4x8x32xf32> to vector<32x32xf32>
    %14 = arith.truncf %13 : vector<32x32xf32> to vector<32x32xbf16>
    %cst = arith.constant 0.000000e+00 : f32
    %15 = vector.broadcast %cst : f32 to vector<32x32xf32>
    %c0_3 = arith.constant 0 : index
    %c0_4 = arith.constant 0 : index
    %c0_5 = arith.constant 0 : index
    %c0_6 = arith.constant 0 : index
    %16 = vector.load %arg3[%c0_3, %c0_4, %c0_5, %c0_6] : memref<1x4x32x8xbf16, #tpu.memory_space<vmem>>, vector<1x1x32x8xbf16>
    %17 = vector.shape_cast %16 : vector<1x1x32x8xbf16> to vector<32x8xbf16>
    %cst_7 = arith.constant dense<0.000000e+00> : vector<32x8xf32>
    %18 = tpu.matmul %12, %17, %cst_7 {dimension_numbers = #tpu.dot_dimension_numbers<[1], [0], [0], [1], [0, 0, 1, 1], [], []>} : vector<32x32xbf16>, vector<32x8xbf16>, vector<32x8xf32> -> vector<32x8xf32>
    %c0_8 = arith.constant 0 : index
    %c0_9 = arith.constant 0 : index
    %c0_10 = arith.constant 0 : index
    %c0_11 = arith.constant 0 : index
    %19 = vector.load %arg4[%c0_8, %c0_9, %c0_10, %c0_11] : memref<1x4x1x8xf32, #tpu.memory_space<vmem>>, vector<1x1x1x8xf32>
    %20 = vector.shape_cast %19 : vector<1x1x1x8xf32> to vector<1x8xf32>
    %21 = vector.broadcast %20 : vector<1x8xf32> to vector<32x8xf32>
    %22 = arith.addf %18, %21 : vector<32x8xf32>
    %c0_12 = arith.constant 0 : index
    %c0_13 = arith.constant 0 : index
    %c0_14 = arith.constant 0 : index
    %c0_15 = arith.constant 0 : index
    %23 = vector.load %arg5[%c0_12, %c0_13, %c0_14, %c0_15] : memref<1x4x32x8xbf16, #tpu.memory_space<vmem>>, vector<1x1x32x8xbf16>
    %24 = vector.shape_cast %23 : vector<1x1x32x8xbf16> to vector<32x8xbf16>
    %cst_16 = arith.constant dense<0.000000e+00> : vector<32x8xf32>
    %25 = tpu.matmul %14, %24, %cst_16 {dimension_numbers = #tpu.dot_dimension_numbers<[1], [0], [0], [1], [0, 0, 1, 1], [], []>} : vector<32x32xbf16>, vector<32x8xbf16>, vector<32x8xf32> -> vector<32x8xf32>
    %c0_17 = arith.constant 0 : index
    %c0_18 = arith.constant 0 : index
    %c0_19 = arith.constant 0 : index
    %c0_20 = arith.constant 0 : index
    %26 = vector.load %arg6[%c0_17, %c0_18, %c0_19, %c0_20] : memref<1x4x1x8xf32, #tpu.memory_space<vmem>>, vector<1x1x1x8xf32>
    %27 = vector.shape_cast %26 : vector<1x1x1x8xf32> to vector<1x8xf32>
    %28 = vector.broadcast %27 : vector<1x8xf32> to vector<32x8xf32>
    %29 = arith.addf %25, %28 : vector<32x8xf32>
    %c0_21 = arith.constant 0 : index
    %c0_22 = arith.constant 0 : index
    %c0_23 = arith.constant 0 : index
    %c0_24 = arith.constant 0 : index
    %30 = vector.load %arg7[%c0_21, %c0_22, %c0_23, %c0_24] : memref<1x4x32x8xbf16, #tpu.memory_space<vmem>>, vector<1x1x32x8xbf16>
    %31 = vector.shape_cast %30 : vector<1x1x32x8xbf16> to vector<32x8xbf16>
    %cst_25 = arith.constant dense<0.000000e+00> : vector<32x8xf32>
    %32 = tpu.matmul %14, %31, %cst_25 {dimension_numbers = #tpu.dot_dimension_numbers<[1], [0], [0], [1], [0, 0, 1, 1], [], []>} : vector<32x32xbf16>, vector<32x8xbf16>, vector<32x8xf32> -> vector<32x8xf32>
    %c0_26 = arith.constant 0 : index
    %c0_27 = arith.constant 0 : index
    %c0_28 = arith.constant 0 : index
    %c0_29 = arith.constant 0 : index
    %33 = vector.load %arg8[%c0_26, %c0_27, %c0_28, %c0_29] : memref<1x4x1x8xf32, #tpu.memory_space<vmem>>, vector<1x1x1x8xf32>
    %34 = vector.shape_cast %33 : vector<1x1x1x8xf32> to vector<1x8xf32>
    %35 = vector.broadcast %34 : vector<1x8xf32> to vector<32x8xf32>
    %36 = arith.addf %32, %35 : vector<32x8xf32>
    %37 = vector.shape_cast %22 : vector<32x8xf32> to vector<4x8x8xf32>
    %38 = arith.truncf %37 : vector<4x8x8xf32> to vector<4x8x8xbf16>
    %39 = vector.shape_cast %29 : vector<32x8xf32> to vector<4x8x8xf32>
    %40 = arith.truncf %39 : vector<4x8x8xf32> to vector<4x8x8xbf16>
    %41 = vector.shape_cast %36 : vector<32x8xf32> to vector<4x8x8xf32>
    %42 = arith.truncf %41 : vector<4x8x8xf32> to vector<4x8x8xbf16>
    "tpu.trace_start"() <{level = 10 : i32, message = "bnd,bmd->bnm"}> : () -> ()
    %cst_30 = arith.constant dense<0.000000e+00> : vector<4x8x8xf32>
    %43 = tpu.matmul %38, %40, %cst_30 {dimension_numbers = #tpu.dot_dimension_numbers<[2], [2], [1], [1], [0, 0, 0, 1, 1, 1], [0], [0]>} : vector<4x8x8xbf16>, vector<4x8x8xbf16>, vector<4x8x8xf32> -> vector<4x8x8xf32>
    "tpu.trace_stop"() : () -> ()
    %cst_31 = arith.constant 0.353553385 : f32
    %44 = vector.broadcast %cst_31 : f32 to vector<4x8x8xf32>
    %45 = arith.mulf %43, %44 : vector<4x8x8xf32>
    %cst_32 = arith.constant dense<0xFF800000> : vector<4x8xf32>
    %46 = vector.multi_reduction <maximumf>, %45, %cst_32 [2] : vector<4x8x8xf32> to vector<4x8xf32>
    %47 = vector.shape_cast %46 : vector<4x8xf32> to vector<4x8x1xf32>
    %48 = vector.broadcast %47 : vector<4x8x1xf32> to vector<4x8x8xf32>
    %49 = arith.subf %45, %48 : vector<4x8x8xf32>
    %50 = math.exp %49 : vector<4x8x8xf32>
    %cst_33 = arith.constant dense<0.000000e+00> : vector<4x8xf32>
    %51 = vector.multi_reduction <add>, %50, %cst_33 [2] : vector<4x8x8xf32> to vector<4x8xf32>
    %52 = vector.shape_cast %51 : vector<4x8xf32> to vector<4x8x1xf32>
    %53 = tpu.reciprocal %52 {approx = true} : vector<4x8x1xf32> -> vector<4x8x1xf32>
    %54 = vector.broadcast %53 : vector<4x8x1xf32> to vector<4x8x8xf32>
    %55 = arith.mulf %50, %54 : vector<4x8x8xf32>
    %56 = arith.truncf %55 : vector<4x8x8xf32> to vector<4x8x8xbf16>
    "tpu.trace_start"() <{level = 10 : i32, message = "bnm,bmd->bnd"}> : () -> ()
    %cst_34 = arith.constant dense<0.000000e+00> : vector<4x8x8xf32>
    %57 = tpu.matmul %56, %42, %cst_34 {dimension_numbers = #tpu.dot_dimension_numbers<[2], [1], [1], [2], [0, 0, 0, 1, 1, 2], [0], [0]>} : vector<4x8x8xbf16>, vector<4x8x8xbf16>, vector<4x8x8xf32> -> vector<4x8x8xf32>
    "tpu.trace_stop"() : () -> ()
    %58 = vector.shape_cast %57 : vector<4x8x8xf32> to vector<32x8xf32>
    %59 = arith.truncf %58 : vector<32x8xf32> to vector<32x8xbf16>
    %c0_35 = arith.constant 0 : index
    %c0_36 = arith.constant 0 : index
    %c0_37 = arith.constant 0 : index
    %c0_38 = arith.constant 0 : index
    %60 = vector.load %arg9[%c0_35, %c0_36, %c0_37, %c0_38] : memref<1x4x8x32xbf16, #tpu.memory_space<vmem>>, vector<1x1x8x32xbf16>
    %61 = vector.shape_cast %60 : vector<1x1x8x32xbf16> to vector<8x32xbf16>
    %cst_39 = arith.constant dense<0.000000e+00> : vector<32x32xf32>
    %62 = tpu.matmul %59, %61, %cst_39 {dimension_numbers = #tpu.dot_dimension_numbers<[1], [0], [0], [1], [0, 0, 1, 1], [], []>} : vector<32x8xbf16>, vector<8x32xbf16>, vector<32x32xf32> -> vector<32x32xf32>
    %63 = arith.addf %15, %62 : vector<32x32xf32>
    %c0_40 = arith.constant 0 : index
    %c1 = arith.constant 1 : index
    %c0_41 = arith.constant 0 : index
    %c0_42 = arith.constant 0 : index
    %64 = vector.load %arg3[%c0_40, %c1, %c0_41, %c0_42] : memref<1x4x32x8xbf16, #tpu.memory_space<vmem>>, vector<1x1x32x8xbf16>
    %65 = vector.shape_cast %64 : vector<1x1x32x8xbf16> to vector<32x8xbf16>
    %cst_43 = arith.constant dense<0.000000e+00> : vector<32x8xf32>
    %66 = tpu.matmul %12, %65, %cst_43 {dimension_numbers = #tpu.dot_dimension_numbers<[1], [0], [0], [1], [0, 0, 1, 1], [], []>} : vector<32x32xbf16>, vector<32x8xbf16>, vector<32x8xf32> -> vector<32x8xf32>
    %c0_44 = arith.constant 0 : index
    %c1_45 = arith.constant 1 : index
    %c0_46 = arith.constant 0 : index
    %c0_47 = arith.constant 0 : index
    %67 = vector.load %arg4[%c0_44, %c1_45, %c0_46, %c0_47] : memref<1x4x1x8xf32, #tpu.memory_space<vmem>>, vector<1x1x1x8xf32>
    %68 = vector.shape_cast %67 : vector<1x1x1x8xf32> to vector<1x8xf32>
    %69 = vector.broadcast %68 : vector<1x8xf32> to vector<32x8xf32>
    %70 = arith.addf %66, %69 : vector<32x8xf32>
    %c0_48 = arith.constant 0 : index
    %c1_49 = arith.constant 1 : index
    %c0_50 = arith.constant 0 : index
    %c0_51 = arith.constant 0 : index
    %71 = vector.load %arg5[%c0_48, %c1_49, %c0_50, %c0_51] : memref<1x4x32x8xbf16, #tpu.memory_space<vmem>>, vector<1x1x32x8xbf16>
    %72 = vector.shape_cast %71 : vector<1x1x32x8xbf16> to vector<32x8xbf16>
    %cst_52 = arith.constant dense<0.000000e+00> : vector<32x8xf32>
    %73 = tpu.matmul %14, %72, %cst_52 {dimension_numbers = #tpu.dot_dimension_numbers<[1], [0], [0], [1], [0, 0, 1, 1], [], []>} : vector<32x32xbf16>, vector<32x8xbf16>, vector<32x8xf32> -> vector<32x8xf32>
    %c0_53 = arith.constant 0 : index
    %c1_54 = arith.constant 1 : index
    %c0_55 = arith.constant 0 : index
    %c0_56 = arith.constant 0 : index
    %74 = vector.load %arg6[%c0_53, %c1_54, %c0_55, %c0_56] : memref<1x4x1x8xf32, #tpu.memory_space<vmem>>, vector<1x1x1x8xf32>
    %75 = vector.shape_cast %74 : vector<1x1x1x8xf32> to vector<1x8xf32>
    %76 = vector.broadcast %75 : vector<1x8xf32> to vector<32x8xf32>
    %77 = arith.addf %73, %76 : vector<32x8xf32>
    %c0_57 = arith.constant 0 : index
    %c1_58 = arith.constant 1 : index
    %c0_59 = arith.constant 0 : index
    %c0_60 = arith.constant 0 : index
    %78 = vector.load %arg7[%c0_57, %c1_58, %c0_59, %c0_60] : memref<1x4x32x8xbf16, #tpu.memory_space<vmem>>, vector<1x1x32x8xbf16>
    %79 = vector.shape_cast %78 : vector<1x1x32x8xbf16> to vector<32x8xbf16>
    %cst_61 = arith.constant dense<0.000000e+00> : vector<32x8xf32>
    %80 = tpu.matmul %14, %79, %cst_61 {dimension_numbers = #tpu.dot_dimension_numbers<[1], [0], [0], [1], [0, 0, 1, 1], [], []>} : vector<32x32xbf16>, vector<32x8xbf16>, vector<32x8xf32> -> vector<32x8xf32>
    %c0_62 = arith.constant 0 : index
    %c1_63 = arith.constant 1 : index
    %c0_64 = arith.constant 0 : index
    %c0_65 = arith.constant 0 : index
    %81 = vector.load %arg8[%c0_62, %c1_63, %c0_64, %c0_65] : memref<1x4x1x8xf32, #tpu.memory_space<vmem>>, vector<1x1x1x8xf32>
    %82 = vector.shape_cast %81 : vector<1x1x1x8xf32> to vector<1x8xf32>
    %83 = vector.broadcast %82 : vector<1x8xf32> to vector<32x8xf32>
    %84 = arith.addf %80, %83 : vector<32x8xf32>
    %85 = vector.shape_cast %70 : vector<32x8xf32> to vector<4x8x8xf32>
    %86 = arith.truncf %85 : vector<4x8x8xf32> to vector<4x8x8xbf16>
    %87 = vector.shape_cast %77 : vector<32x8xf32> to vector<4x8x8xf32>
    %88 = arith.truncf %87 : vector<4x8x8xf32> to vector<4x8x8xbf16>
    %89 = vector.shape_cast %84 : vector<32x8xf32> to vector<4x8x8xf32>
    %90 = arith.truncf %89 : vector<4x8x8xf32> to vector<4x8x8xbf16>
    "tpu.trace_start"() <{level = 10 : i32, message = "bnd,bmd->bnm"}> : () -> ()
    %cst_66 = arith.constant dense<0.000000e+00> : vector<4x8x8xf32>
    %91 = tpu.matmul %86, %88, %cst_66 {dimension_numbers = #tpu.dot_dimension_numbers<[2], [2], [1], [1], [0, 0, 0, 1, 1, 1], [0], [0]>} : vector<4x8x8xbf16>, vector<4x8x8xbf16>, vector<4x8x8xf32> -> vector<4x8x8xf32>
    "tpu.trace_stop"() : () -> ()
    %cst_67 = arith.constant 0.353553385 : f32
    %92 = vector.broadcast %cst_67 : f32 to vector<4x8x8xf32>
    %93 = arith.mulf %91, %92 : vector<4x8x8xf32>
    %cst_68 = arith.constant dense<0xFF800000> : vector<4x8xf32>
    %94 = vector.multi_reduction <maximumf>, %93, %cst_68 [2] : vector<4x8x8xf32> to vector<4x8xf32>
    %95 = vector.shape_cast %94 : vector<4x8xf32> to vector<4x8x1xf32>
    %96 = vector.broadcast %95 : vector<4x8x1xf32> to vector<4x8x8xf32>
    %97 = arith.subf %93, %96 : vector<4x8x8xf32>
    %98 = math.exp %97 : vector<4x8x8xf32>
    %cst_69 = arith.constant dense<0.000000e+00> : vector<4x8xf32>
    %99 = vector.multi_reduction <add>, %98, %cst_69 [2] : vector<4x8x8xf32> to vector<4x8xf32>
    %100 = vector.shape_cast %99 : vector<4x8xf32> to vector<4x8x1xf32>
    %101 = tpu.reciprocal %100 {approx = true} : vector<4x8x1xf32> -> vector<4x8x1xf32>
    %102 = vector.broadcast %101 : vector<4x8x1xf32> to vector<4x8x8xf32>
    %103 = arith.mulf %98, %102 : vector<4x8x8xf32>
    %104 = arith.truncf %103 : vector<4x8x8xf32> to vector<4x8x8xbf16>
    "tpu.trace_start"() <{level = 10 : i32, message = "bnm,bmd->bnd"}> : () -> ()
    %cst_70 = arith.constant dense<0.000000e+00> : vector<4x8x8xf32>
    %105 = tpu.matmul %104, %90, %cst_70 {dimension_numbers = #tpu.dot_dimension_numbers<[2], [1], [1], [2], [0, 0, 0, 1, 1, 2], [0], [0]>} : vector<4x8x8xbf16>, vector<4x8x8xbf16>, vector<4x8x8xf32> -> vector<4x8x8xf32>
    "tpu.trace_stop"() : () -> ()
    %106 = vector.shape_cast %105 : vector<4x8x8xf32> to vector<32x8xf32>
    %107 = arith.truncf %106 : vector<32x8xf32> to vector<32x8xbf16>
    %c0_71 = arith.constant 0 : index
    %c1_72 = arith.constant 1 : index
    %c0_73 = arith.constant 0 : index
    %c0_74 = arith.constant 0 : index
    %108 = vector.load %arg9[%c0_71, %c1_72, %c0_73, %c0_74] : memref<1x4x8x32xbf16, #tpu.memory_space<vmem>>, vector<1x1x8x32xbf16>
    %109 = vector.shape_cast %108 : vector<1x1x8x32xbf16> to vector<8x32xbf16>
    %cst_75 = arith.constant dense<0.000000e+00> : vector<32x32xf32>
    %110 = tpu.matmul %107, %109, %cst_75 {dimension_numbers = #tpu.dot_dimension_numbers<[1], [0], [0], [1], [0, 0, 1, 1], [], []>} : vector<32x8xbf16>, vector<8x32xbf16>, vector<32x32xf32> -> vector<32x32xf32>
    %111 = arith.addf %63, %110 : vector<32x32xf32>
    %c0_76 = arith.constant 0 : index
    %c2 = arith.constant 2 : index
    %c0_77 = arith.constant 0 : index
    %c0_78 = arith.constant 0 : index
    %112 = vector.load %arg3[%c0_76, %c2, %c0_77, %c0_78] : memref<1x4x32x8xbf16, #tpu.memory_space<vmem>>, vector<1x1x32x8xbf16>
    %113 = vector.shape_cast %112 : vector<1x1x32x8xbf16> to vector<32x8xbf16>
    %cst_79 = arith.constant dense<0.000000e+00> : vector<32x8xf32>
    %114 = tpu.matmul %12, %113, %cst_79 {dimension_numbers = #tpu.dot_dimension_numbers<[1], [0], [0], [1], [0, 0, 1, 1], [], []>} : vector<32x32xbf16>, vector<32x8xbf16>, vector<32x8xf32> -> vector<32x8xf32>
    %c0_80 = arith.constant 0 : index
    %c2_81 = arith.constant 2 : index
    %c0_82 = arith.constant 0 : index
    %c0_83 = arith.constant 0 : index
    %115 = vector.load %arg4[%c0_80, %c2_81, %c0_82, %c0_83] : memref<1x4x1x8xf32, #tpu.memory_space<vmem>>, vector<1x1x1x8xf32>
    %116 = vector.shape_cast %115 : vector<1x1x1x8xf32> to vector<1x8xf32>
    %117 = vector.broadcast %116 : vector<1x8xf32> to vector<32x8xf32>
    %118 = arith.addf %114, %117 : vector<32x8xf32>
    %c0_84 = arith.constant 0 : index
    %c2_85 = arith.constant 2 : index
    %c0_86 = arith.constant 0 : index
    %c0_87 = arith.constant 0 : index
    %119 = vector.load %arg5[%c0_84, %c2_85, %c0_86, %c0_87] : memref<1x4x32x8xbf16, #tpu.memory_space<vmem>>, vector<1x1x32x8xbf16>
    %120 = vector.shape_cast %119 : vector<1x1x32x8xbf16> to vector<32x8xbf16>
    %cst_88 = arith.constant dense<0.000000e+00> : vector<32x8xf32>
    %121 = tpu.matmul %14, %120, %cst_88 {dimension_numbers = #tpu.dot_dimension_numbers<[1], [0], [0], [1], [0, 0, 1, 1], [], []>} : vector<32x32xbf16>, vector<32x8xbf16>, vector<32x8xf32> -> vector<32x8xf32>
    %c0_89 = arith.constant 0 : index
    %c2_90 = arith.constant 2 : index
    %c0_91 = arith.constant 0 : index
    %c0_92 = arith.constant 0 : index
    %122 = vector.load %arg6[%c0_89, %c2_90, %c0_91, %c0_92] : memref<1x4x1x8xf32, #tpu.memory_space<vmem>>, vector<1x1x1x8xf32>
    %123 = vector.shape_cast %122 : vector<1x1x1x8xf32> to vector<1x8xf32>
    %124 = vector.broadcast %123 : vector<1x8xf32> to vector<32x8xf32>
    %125 = arith.addf %121, %124 : vector<32x8xf32>
    %c0_93 = arith.constant 0 : index
    %c2_94 = arith.constant 2 : index
    %c0_95 = arith.constant 0 : index
    %c0_96 = arith.constant 0 : index
    %126 = vector.load %arg7[%c0_93, %c2_94, %c0_95, %c0_96] : memref<1x4x32x8xbf16, #tpu.memory_space<vmem>>, vector<1x1x32x8xbf16>
    %127 = vector.shape_cast %126 : vector<1x1x32x8xbf16> to vector<32x8xbf16>
    %cst_97 = arith.constant dense<0.000000e+00> : vector<32x8xf32>
    %128 = tpu.matmul %14, %127, %cst_97 {dimension_numbers = #tpu.dot_dimension_numbers<[1], [0], [0], [1], [0, 0, 1, 1], [], []>} : vector<32x32xbf16>, vector<32x8xbf16>, vector<32x8xf32> -> vector<32x8xf32>
    %c0_98 = arith.constant 0 : index
    %c2_99 = arith.constant 2 : index
    %c0_100 = arith.constant 0 : index
    %c0_101 = arith.constant 0 : index
    %129 = vector.load %arg8[%c0_98, %c2_99, %c0_100, %c0_101] : memref<1x4x1x8xf32, #tpu.memory_space<vmem>>, vector<1x1x1x8xf32>
    %130 = vector.shape_cast %129 : vector<1x1x1x8xf32> to vector<1x8xf32>
    %131 = vector.broadcast %130 : vector<1x8xf32> to vector<32x8xf32>
    %132 = arith.addf %128, %131 : vector<32x8xf32>
    %133 = vector.shape_cast %118 : vector<32x8xf32> to vector<4x8x8xf32>
    %134 = arith.truncf %133 : vector<4x8x8xf32> to vector<4x8x8xbf16>
    %135 = vector.shape_cast %125 : vector<32x8xf32> to vector<4x8x8xf32>
    %136 = arith.truncf %135 : vector<4x8x8xf32> to vector<4x8x8xbf16>
    %137 = vector.shape_cast %132 : vector<32x8xf32> to vector<4x8x8xf32>
    %138 = arith.truncf %137 : vector<4x8x8xf32> to vector<4x8x8xbf16>
    "tpu.trace_start"() <{level = 10 : i32, message = "bnd,bmd->bnm"}> : () -> ()
    %cst_102 = arith.constant dense<0.000000e+00> : vector<4x8x8xf32>
    %139 = tpu.matmul %134, %136, %cst_102 {dimension_numbers = #tpu.dot_dimension_numbers<[2], [2], [1], [1], [0, 0, 0, 1, 1, 1], [0], [0]>} : vector<4x8x8xbf16>, vector<4x8x8xbf16>, vector<4x8x8xf32> -> vector<4x8x8xf32>
    "tpu.trace_stop"() : () -> ()
    %cst_103 = arith.constant 0.353553385 : f32
    %140 = vector.broadcast %cst_103 : f32 to vector<4x8x8xf32>
    %141 = arith.mulf %139, %140 : vector<4x8x8xf32>
    %cst_104 = arith.constant dense<0xFF800000> : vector<4x8xf32>
    %142 = vector.multi_reduction <maximumf>, %141, %cst_104 [2] : vector<4x8x8xf32> to vector<4x8xf32>
    %143 = vector.shape_cast %142 : vector<4x8xf32> to vector<4x8x1xf32>
    %144 = vector.broadcast %143 : vector<4x8x1xf32> to vector<4x8x8xf32>
    %145 = arith.subf %141, %144 : vector<4x8x8xf32>
    %146 = math.exp %145 : vector<4x8x8xf32>
    %cst_105 = arith.constant dense<0.000000e+00> : vector<4x8xf32>
    %147 = vector.multi_reduction <add>, %146, %cst_105 [2] : vector<4x8x8xf32> to vector<4x8xf32>
    %148 = vector.shape_cast %147 : vector<4x8xf32> to vector<4x8x1xf32>
    %149 = tpu.reciprocal %148 {approx = true} : vector<4x8x1xf32> -> vector<4x8x1xf32>
    %150 = vector.broadcast %149 : vector<4x8x1xf32> to vector<4x8x8xf32>
    %151 = arith.mulf %146, %150 : vector<4x8x8xf32>
    %152 = arith.truncf %151 : vector<4x8x8xf32> to vector<4x8x8xbf16>
    "tpu.trace_start"() <{level = 10 : i32, message = "bnm,bmd->bnd"}> : () -> ()
    %cst_106 = arith.constant dense<0.000000e+00> : vector<4x8x8xf32>
    %153 = tpu.matmul %152, %138, %cst_106 {dimension_numbers = #tpu.dot_dimension_numbers<[2], [1], [1], [2], [0, 0, 0, 1, 1, 2], [0], [0]>} : vector<4x8x8xbf16>, vector<4x8x8xbf16>, vector<4x8x8xf32> -> vector<4x8x8xf32>
    "tpu.trace_stop"() : () -> ()
    %154 = vector.shape_cast %153 : vector<4x8x8xf32> to vector<32x8xf32>
    %155 = arith.truncf %154 : vector<32x8xf32> to vector<32x8xbf16>
    %c0_107 = arith.constant 0 : index
    %c2_108 = arith.constant 2 : index
    %c0_109 = arith.constant 0 : index
    %c0_110 = arith.constant 0 : index
    %156 = vector.load %arg9[%c0_107, %c2_108, %c0_109, %c0_110] : memref<1x4x8x32xbf16, #tpu.memory_space<vmem>>, vector<1x1x8x32xbf16>
    %157 = vector.shape_cast %156 : vector<1x1x8x32xbf16> to vector<8x32xbf16>
    %cst_111 = arith.constant dense<0.000000e+00> : vector<32x32xf32>
    %158 = tpu.matmul %155, %157, %cst_111 {dimension_numbers = #tpu.dot_dimension_numbers<[1], [0], [0], [1], [0, 0, 1, 1], [], []>} : vector<32x8xbf16>, vector<8x32xbf16>, vector<32x32xf32> -> vector<32x32xf32>
    %159 = arith.addf %111, %158 : vector<32x32xf32>
    %c0_112 = arith.constant 0 : index
    %c3 = arith.constant 3 : index
    %c0_113 = arith.constant 0 : index
    %c0_114 = arith.constant 0 : index
    %160 = vector.load %arg3[%c0_112, %c3, %c0_113, %c0_114] : memref<1x4x32x8xbf16, #tpu.memory_space<vmem>>, vector<1x1x32x8xbf16>
    %161 = vector.shape_cast %160 : vector<1x1x32x8xbf16> to vector<32x8xbf16>
    %cst_115 = arith.constant dense<0.000000e+00> : vector<32x8xf32>
    %162 = tpu.matmul %12, %161, %cst_115 {dimension_numbers = #tpu.dot_dimension_numbers<[1], [0], [0], [1], [0, 0, 1, 1], [], []>} : vector<32x32xbf16>, vector<32x8xbf16>, vector<32x8xf32> -> vector<32x8xf32>
    %c0_116 = arith.constant 0 : index
    %c3_117 = arith.constant 3 : index
    %c0_118 = arith.constant 0 : index
    %c0_119 = arith.constant 0 : index
    %163 = vector.load %arg4[%c0_116, %c3_117, %c0_118, %c0_119] : memref<1x4x1x8xf32, #tpu.memory_space<vmem>>, vector<1x1x1x8xf32>
    %164 = vector.shape_cast %163 : vector<1x1x1x8xf32> to vector<1x8xf32>
    %165 = vector.broadcast %164 : vector<1x8xf32> to vector<32x8xf32>
    %166 = arith.addf %162, %165 : vector<32x8xf32>
    %c0_120 = arith.constant 0 : index
    %c3_121 = arith.constant 3 : index
    %c0_122 = arith.constant 0 : index
    %c0_123 = arith.constant 0 : index
    %167 = vector.load %arg5[%c0_120, %c3_121, %c0_122, %c0_123] : memref<1x4x32x8xbf16, #tpu.memory_space<vmem>>, vector<1x1x32x8xbf16>
    %168 = vector.shape_cast %167 : vector<1x1x32x8xbf16> to vector<32x8xbf16>
    %cst_124 = arith.constant dense<0.000000e+00> : vector<32x8xf32>
    %169 = tpu.matmul %14, %168, %cst_124 {dimension_numbers = #tpu.dot_dimension_numbers<[1], [0], [0], [1], [0, 0, 1, 1], [], []>} : vector<32x32xbf16>, vector<32x8xbf16>, vector<32x8xf32> -> vector<32x8xf32>
    %c0_125 = arith.constant 0 : index
    %c3_126 = arith.constant 3 : index
    %c0_127 = arith.constant 0 : index
    %c0_128 = arith.constant 0 : index
    %170 = vector.load %arg6[%c0_125, %c3_126, %c0_127, %c0_128] : memref<1x4x1x8xf32, #tpu.memory_space<vmem>>, vector<1x1x1x8xf32>
    %171 = vector.shape_cast %170 : vector<1x1x1x8xf32> to vector<1x8xf32>
    %172 = vector.broadcast %171 : vector<1x8xf32> to vector<32x8xf32>
    %173 = arith.addf %169, %172 : vector<32x8xf32>
    %c0_129 = arith.constant 0 : index
    %c3_130 = arith.constant 3 : index
    %c0_131 = arith.constant 0 : index
    %c0_132 = arith.constant 0 : index
    %174 = vector.load %arg7[%c0_129, %c3_130, %c0_131, %c0_132] : memref<1x4x32x8xbf16, #tpu.memory_space<vmem>>, vector<1x1x32x8xbf16>
    %175 = vector.shape_cast %174 : vector<1x1x32x8xbf16> to vector<32x8xbf16>
    %cst_133 = arith.constant dense<0.000000e+00> : vector<32x8xf32>
    %176 = tpu.matmul %14, %175, %cst_133 {dimension_numbers = #tpu.dot_dimension_numbers<[1], [0], [0], [1], [0, 0, 1, 1], [], []>} : vector<32x32xbf16>, vector<32x8xbf16>, vector<32x8xf32> -> vector<32x8xf32>
    %c0_134 = arith.constant 0 : index
    %c3_135 = arith.constant 3 : index
    %c0_136 = arith.constant 0 : index
    %c0_137 = arith.constant 0 : index
    %177 = vector.load %arg8[%c0_134, %c3_135, %c0_136, %c0_137] : memref<1x4x1x8xf32, #tpu.memory_space<vmem>>, vector<1x1x1x8xf32>
    %178 = vector.shape_cast %177 : vector<1x1x1x8xf32> to vector<1x8xf32>
    %179 = vector.broadcast %178 : vector<1x8xf32> to vector<32x8xf32>
    %180 = arith.addf %176, %179 : vector<32x8xf32>
    %181 = vector.shape_cast %166 : vector<32x8xf32> to vector<4x8x8xf32>
    %182 = arith.truncf %181 : vector<4x8x8xf32> to vector<4x8x8xbf16>
    %183 = vector.shape_cast %173 : vector<32x8xf32> to vector<4x8x8xf32>
    %184 = arith.truncf %183 : vector<4x8x8xf32> to vector<4x8x8xbf16>
    %185 = vector.shape_cast %180 : vector<32x8xf32> to vector<4x8x8xf32>
    %186 = arith.truncf %185 : vector<4x8x8xf32> to vector<4x8x8xbf16>
    "tpu.trace_start"() <{level = 10 : i32, message = "bnd,bmd->bnm"}> : () -> ()
    %cst_138 = arith.constant dense<0.000000e+00> : vector<4x8x8xf32>
    %187 = tpu.matmul %182, %184, %cst_138 {dimension_numbers = #tpu.dot_dimension_numbers<[2], [2], [1], [1], [0, 0, 0, 1, 1, 1], [0], [0]>} : vector<4x8x8xbf16>, vector<4x8x8xbf16>, vector<4x8x8xf32> -> vector<4x8x8xf32>
    "tpu.trace_stop"() : () -> ()
    %cst_139 = arith.constant 0.353553385 : f32
    %188 = vector.broadcast %cst_139 : f32 to vector<4x8x8xf32>
    %189 = arith.mulf %187, %188 : vector<4x8x8xf32>
    %cst_140 = arith.constant dense<0xFF800000> : vector<4x8xf32>
    %190 = vector.multi_reduction <maximumf>, %189, %cst_140 [2] : vector<4x8x8xf32> to vector<4x8xf32>
    %191 = vector.shape_cast %190 : vector<4x8xf32> to vector<4x8x1xf32>
    %192 = vector.broadcast %191 : vector<4x8x1xf32> to vector<4x8x8xf32>
    %193 = arith.subf %189, %192 : vector<4x8x8xf32>
    %194 = math.exp %193 : vector<4x8x8xf32>
    %cst_141 = arith.constant dense<0.000000e+00> : vector<4x8xf32>
    %195 = vector.multi_reduction <add>, %194, %cst_141 [2] : vector<4x8x8xf32> to vector<4x8xf32>
    %196 = vector.shape_cast %195 : vector<4x8xf32> to vector<4x8x1xf32>
    %197 = tpu.reciprocal %196 {approx = true} : vector<4x8x1xf32> -> vector<4x8x1xf32>
    %198 = vector.broadcast %197 : vector<4x8x1xf32> to vector<4x8x8xf32>
    %199 = arith.mulf %194, %198 : vector<4x8x8xf32>
    %200 = arith.truncf %199 : vector<4x8x8xf32> to vector<4x8x8xbf16>
    "tpu.trace_start"() <{level = 10 : i32, message = "bnm,bmd->bnd"}> : () -> ()
    %cst_142 = arith.constant dense<0.000000e+00> : vector<4x8x8xf32>
    %201 = tpu.matmul %200, %186, %cst_142 {dimension_numbers = #tpu.dot_dimension_numbers<[2], [1], [1], [2], [0, 0, 0, 1, 1, 2], [0], [0]>} : vector<4x8x8xbf16>, vector<4x8x8xbf16>, vector<4x8x8xf32> -> vector<4x8x8xf32>
    "tpu.trace_stop"() : () -> ()
    %202 = vector.shape_cast %201 : vector<4x8x8xf32> to vector<32x8xf32>
    %203 = arith.truncf %202 : vector<32x8xf32> to vector<32x8xbf16>
    %c0_143 = arith.constant 0 : index
    %c3_144 = arith.constant 3 : index
    %c0_145 = arith.constant 0 : index
    %c0_146 = arith.constant 0 : index
    %204 = vector.load %arg9[%c0_143, %c3_144, %c0_145, %c0_146] : memref<1x4x8x32xbf16, #tpu.memory_space<vmem>>, vector<1x1x8x32xbf16>
    %205 = vector.shape_cast %204 : vector<1x1x8x32xbf16> to vector<8x32xbf16>
    %cst_147 = arith.constant dense<0.000000e+00> : vector<32x32xf32>
    %206 = tpu.matmul %203, %205, %cst_147 {dimension_numbers = #tpu.dot_dimension_numbers<[1], [0], [0], [1], [0, 0, 1, 1], [], []>} : vector<32x8xbf16>, vector<8x32xbf16>, vector<32x32xf32> -> vector<32x32xf32>
    %207 = arith.addf %159, %206 : vector<32x32xf32>
    %c0_148 = arith.constant 0 : index
    %c0_149 = arith.constant 0 : index
    %c0_150 = arith.constant 0 : index
    %208 = vector.load %arg10[%c0_148, %c0_149, %c0_150] : memref<1x1x32xf32, #tpu.memory_space<vmem>>, vector<1x1x32xf32>
    %209 = vector.shape_cast %208 : vector<1x1x32xf32> to vector<1x32xf32>
    %210 = vector.broadcast %209 : vector<1x32xf32> to vector<32x32xf32>
    %211 = arith.addf %207, %210 : vector<32x32xf32>
    %c0_151 = arith.constant 0 : index
    %c0_152 = arith.constant 0 : index
    %c0_153 = arith.constant 0 : index
    %212 = vector.load %arg11[%c0_151, %c0_152, %c0_153] : memref<1x32x64xbf16, #tpu.memory_space<vmem>>, vector<1x32x64xbf16>
    %213 = vector.shape_cast %212 : vector<1x32x64xbf16> to vector<32x64xbf16>
    %cst_154 = arith.constant dense<0.000000e+00> : vector<32x64xf32>
    %214 = tpu.matmul %12, %213, %cst_154 {dimension_numbers = #tpu.dot_dimension_numbers<[1], [0], [0], [1], [0, 0, 1, 1], [], []>} : vector<32x32xbf16>, vector<32x64xbf16>, vector<32x64xf32> -> vector<32x64xf32>
    %215 = arith.truncf %211 : vector<32x32xf32> to vector<32x32xbf16>
    %c0_155 = arith.constant 0 : index
    %c0_156 = arith.constant 0 : index
    %c0_157 = arith.constant 0 : index
    %216 = vector.load %arg12[%c0_155, %c0_156, %c0_157] : memref<1x32x64xbf16, #tpu.memory_space<vmem>>, vector<1x32x64xbf16>
    %217 = vector.shape_cast %216 : vector<1x32x64xbf16> to vector<32x64xbf16>
    %cst_158 = arith.constant dense<0.000000e+00> : vector<32x64xf32>
    %218 = tpu.matmul %215, %217, %cst_158 {dimension_numbers = #tpu.dot_dimension_numbers<[1], [0], [0], [1], [0, 0, 1, 1], [], []>} : vector<32x32xbf16>, vector<32x64xbf16>, vector<32x64xf32> -> vector<32x64xf32>
    %219 = arith.addf %214, %218 : vector<32x64xf32>
    %c0_159 = arith.constant 0 : index
    %c0_160 = arith.constant 0 : index
    %c0_161 = arith.constant 0 : index
    %220 = vector.load %arg13[%c0_159, %c0_160, %c0_161] : memref<1x1x64xf32, #tpu.memory_space<vmem>>, vector<1x1x64xf32>
    %221 = vector.shape_cast %220 : vector<1x1x64xf32> to vector<1x64xf32>
    %222 = vector.broadcast %221 : vector<1x64xf32> to vector<32x64xf32>
    %223 = arith.addf %219, %222 : vector<32x64xf32>
    %224 = vector.shape_cast %223 : vector<32x64xf32> to vector<2x16x64xf32>
    %cst_162 = arith.constant dense<0.000000e+00> : vector<2x64xf32>
    %225 = vector.multi_reduction <add>, %224, %cst_162 [1] : vector<2x16x64xf32> to vector<2x64xf32>
    %226 = vector.shape_cast %225 : vector<2x64xf32> to vector<2x1x64xf32>
    %cst_163 = arith.constant 1.600000e+01 : f32
    %227 = vector.broadcast %cst_163 : f32 to vector<2x1x64xf32>
    %228 = arith.divf %226, %227 : vector<2x1x64xf32>
    %229 = arith.mulf %224, %224 : vector<2x16x64xf32>
    %cst_164 = arith.constant dense<0.000000e+00> : vector<2x64xf32>
    %230 = vector.multi_reduction <add>, %229, %cst_164 [1] : vector<2x16x64xf32> to vector<2x64xf32>
    %231 = vector.shape_cast %230 : vector<2x64xf32> to vector<2x1x64xf32>
    %cst_165 = arith.constant 1.600000e+01 : f32
    %232 = vector.broadcast %cst_165 : f32 to vector<2x1x64xf32>
    %233 = arith.divf %231, %232 : vector<2x1x64xf32>
    %234 = arith.mulf %228, %228 : vector<2x1x64xf32>
    %235 = arith.subf %233, %234 : vector<2x1x64xf32>
    %236 = vector.broadcast %228 : vector<2x1x64xf32> to vector<2x16x64xf32>
    %237 = arith.subf %224, %236 : vector<2x16x64xf32>
    %cst_166 = arith.constant 9.99999974E-6 : f32
    %238 = vector.broadcast %cst_166 : f32 to vector<2x1x64xf32>
    %239 = arith.addf %235, %238 : vector<2x1x64xf32>
    %240 = math.rsqrt %239 : vector<2x1x64xf32>
    %241 = vector.broadcast %240 : vector<2x1x64xf32> to vector<2x16x64xf32>
    %242 = arith.mulf %237, %241 : vector<2x16x64xf32>
    %c0_167 = arith.constant 0 : index
    %c0_168 = arith.constant 0 : index
    %c0_169 = arith.constant 0 : index
    %243 = vector.load %arg14[%c0_167, %c0_168, %c0_169] : memref<1x1x64xf32, #tpu.memory_space<vmem>>, vector<1x1x64xf32>
    %244 = vector.shape_cast %243 : vector<1x1x64xf32> to vector<1x64xf32>
    %245 = vector.shape_cast %244 : vector<1x64xf32> to vector<1x1x64xf32>
    %246 = vector.broadcast %245 : vector<1x1x64xf32> to vector<2x16x64xf32>
    %247 = arith.mulf %242, %246 : vector<2x16x64xf32>
    %c0_170 = arith.constant 0 : index
    %c0_171 = arith.constant 0 : index
    %c0_172 = arith.constant 0 : index
    %248 = vector.load %arg15[%c0_170, %c0_171, %c0_172] : memref<1x1x64xf32, #tpu.memory_space<vmem>>, vector<1x1x64xf32>
    %249 = vector.shape_cast %248 : vector<1x1x64xf32> to vector<1x64xf32>
    %250 = vector.shape_cast %249 : vector<1x64xf32> to vector<1x1x64xf32>
    %251 = vector.broadcast %250 : vector<1x1x64xf32> to vector<2x16x64xf32>
    %252 = arith.addf %247, %251 : vector<2x16x64xf32>
    %cst_173 = arith.constant 0.000000e+00 : f32
    %253 = vector.broadcast %cst_173 : f32 to vector<2x16x64xf32>
    %254 = arith.maximumf %252, %253 : vector<2x16x64xf32>
    %255 = vector.shape_cast %254 : vector<2x16x64xf32> to vector<32x64xf32>
    %256 = arith.truncf %255 : vector<32x64xf32> to vector<32x64xbf16>
    %c0_174 = arith.constant 0 : index
    %c0_175 = arith.constant 0 : index
    %c0_176 = arith.constant 0 : index
    %257 = vector.load %arg16[%c0_174, %c0_175, %c0_176] : memref<1x64x32xbf16, #tpu.memory_space<vmem>>, vector<1x64x32xbf16>
    %258 = vector.shape_cast %257 : vector<1x64x32xbf16> to vector<64x32xbf16>
    %cst_177 = arith.constant dense<0.000000e+00> : vector<32x32xf32>
    %259 = tpu.matmul %256, %258, %cst_177 {dimension_numbers = #tpu.dot_dimension_numbers<[1], [0], [0], [1], [0, 0, 1, 1], [], []>} : vector<32x64xbf16>, vector<64x32xbf16>, vector<32x32xf32> -> vector<32x32xf32>
    %c0_178 = arith.constant 0 : index
    %c0_179 = arith.constant 0 : index
    %c0_180 = arith.constant 0 : index
    %260 = vector.load %arg17[%c0_178, %c0_179, %c0_180] : memref<1x1x32xf32, #tpu.memory_space<vmem>>, vector<1x1x32xf32>
    %261 = vector.shape_cast %260 : vector<1x1x32xf32> to vector<1x32xf32>
    %262 = vector.broadcast %261 : vector<1x32xf32> to vector<32x32xf32>
    %263 = arith.addf %259, %262 : vector<32x32xf32>
    %264 = vector.shape_cast %263 : vector<32x32xf32> to vector<4x8x32xf32>
    %265 = arith.addf %3, %264 : vector<4x8x32xf32>
    %c0_181 = arith.constant 0 : index
    %c0_182 = arith.constant 0 : index
    %c0_183 = arith.constant 0 : index
    %266 = vector.load %arg19[%c0_181, %c0_182, %c0_183] : memref<4x8x32xf32, #tpu.memory_space<vmem>>, vector<4x8x32xf32>
    tpu.vector_store %arg19[%c0_181, %c0_182, %c0_183], %265 {strides = array<i32>} : memref<4x8x32xf32, #tpu.memory_space<vmem>>, vector<4x8x32xf32>,
    %c0_184 = arith.constant 0 : index
    %c0_185 = arith.constant 0 : index
    %c0_186 = arith.constant 0 : index
    %267 = vector.load %arg18[%c0_184, %c0_185, %c0_186] : memref<4x8x32xf32, #tpu.memory_space<vmem>>, vector<4x8x32xf32>
    tpu.vector_store %arg18[%c0_184, %c0_185, %c0_186], %265 {strides = array<i32>} : memref<4x8x32xf32, #tpu.memory_space<vmem>>, vector<4x8x32xf32>,
    return
  }
  func.func @transform_0(%arg0: i32, %arg1: memref<2xi32, #tpu.memory_space<smem>>) -> (i32, i32, i32) {
    %c0_i32 = arith.constant 0 : i32
    %c0_i32_0 = arith.constant 0 : i32
    %c0_i32_1 = arith.constant 0 : i32
    %c0_i32_2 = arith.constant 0 : i32
    return %c0_i32, %c0_i32_0, %c0_i32_1 : i32, i32, i32
  }
  func.func @transform_1(%arg0: i32, %arg1: memref<2xi32, #tpu.memory_space<smem>>) -> (i32, i32, i32, i32) {
    %c0_i32 = arith.constant 0 : i32
    %c0_i32_0 = arith.constant 0 : i32
    %c0_i32_1 = arith.constant 0 : i32
    %c0_i32_2 = arith.constant 0 : i32
    return %arg0, %c0_i32, %c0_i32_0, %c0_i32_1 : i32, i32, i32, i32
  }
  func.func @transform_2(%arg0: i32, %arg1: memref<2xi32, #tpu.memory_space<smem>>) -> (i32, i32, i32, i32) {
    %c0_i32 = arith.constant 0 : i32
    %c0_i32_0 = arith.constant 0 : i32
    %c0_i32_1 = arith.constant 0 : i32
    %c0_i32_2 = arith.constant 0 : i32
    return %arg0, %c0_i32, %c0_i32_0, %c0_i32_1 : i32, i32, i32, i32
  }
  func.func @transform_3(%arg0: i32, %arg1: memref<2xi32, #tpu.memory_space<smem>>) -> (i32, i32, i32, i32) {
    %c0_i32 = arith.constant 0 : i32
    %c0_i32_0 = arith.constant 0 : i32
    %c0_i32_1 = arith.constant 0 : i32
    %c0_i32_2 = arith.constant 0 : i32
    return %arg0, %c0_i32, %c0_i32_0, %c0_i32_1 : i32, i32, i32, i32
  }
  func.func @transform_4(%arg0: i32, %arg1: memref<2xi32, #tpu.memory_space<smem>>) -> (i32, i32, i32, i32) {
    %c0_i32 = arith.constant 0 : i32
    %c0_i32_0 = arith.constant 0 : i32
    %c0_i32_1 = arith.constant 0 : i32
    %c0_i32_2 = arith.constant 0 : i32
    return %arg0, %c0_i32, %c0_i32_0, %c0_i32_1 : i32, i32, i32, i32
  }
  func.func @transform_5(%arg0: i32, %arg1: memref<2xi32, #tpu.memory_space<smem>>) -> (i32, i32, i32, i32) {
    %c0_i32 = arith.constant 0 : i32
    %c0_i32_0 = arith.constant 0 : i32
    %c0_i32_1 = arith.constant 0 : i32
    %c0_i32_2 = arith.constant 0 : i32
    return %arg0, %c0_i32, %c0_i32_0, %c0_i32_1 : i32, i32, i32, i32
  }
  func.func @transform_6(%arg0: i32, %arg1: memref<2xi32, #tpu.memory_space<smem>>) -> (i32, i32, i32, i32) {
    %c0_i32 = arith.constant 0 : i32
    %c0_i32_0 = arith.constant 0 : i32
    %c0_i32_1 = arith.constant 0 : i32
    %c0_i32_2 = arith.constant 0 : i32
    return %arg0, %c0_i32, %c0_i32_0, %c0_i32_1 : i32, i32, i32, i32
  }
  func.func @transform_7(%arg0: i32, %arg1: memref<2xi32, #tpu.memory_space<smem>>) -> (i32, i32, i32, i32) {
    %c0_i32 = arith.constant 0 : i32
    %c0_i32_0 = arith.constant 0 : i32
    %c0_i32_1 = arith.constant 0 : i32
    %c0_i32_2 = arith.constant 0 : i32
    return %arg0, %c0_i32, %c0_i32_0, %c0_i32_1 : i32, i32, i32, i32
  }
  func.func @transform_8(%arg0: i32, %arg1: memref<2xi32, #tpu.memory_space<smem>>) -> (i32, i32, i32) {
    %c0_i32 = arith.constant 0 : i32
    %c0_i32_0 = arith.constant 0 : i32
    %c0_i32_1 = arith.constant 0 : i32
    return %arg0, %c0_i32, %c0_i32_0 : i32, i32, i32
  }
  func.func @transform_9(%arg0: i32, %arg1: memref<2xi32, #tpu.memory_space<smem>>) -> (i32, i32, i32) {
    %c0_i32 = arith.constant 0 : i32
    %c0_i32_0 = arith.constant 0 : i32
    %c0_i32_1 = arith.constant 0 : i32
    return %arg0, %c0_i32, %c0_i32_0 : i32, i32, i32
  }
  func.func @transform_10(%arg0: i32, %arg1: memref<2xi32, #tpu.memory_space<smem>>) -> (i32, i32, i32) {
    %c0_i32 = arith.constant 0 : i32
    %c0_i32_0 = arith.constant 0 : i32
    %c0_i32_1 = arith.constant 0 : i32
    return %arg0, %c0_i32, %c0_i32_0 : i32, i32, i32
  }
  func.func @transform_11(%arg0: i32, %arg1: memref<2xi32, #tpu.memory_space<smem>>) -> (i32, i32, i32) {
    %c0_i32 = arith.constant 0 : i32
    %c0_i32_0 = arith.constant 0 : i32
    %c0_i32_1 = arith.constant 0 : i32
    return %arg0, %c0_i32, %c0_i32_0 : i32, i32, i32
  }
  func.func @transform_12(%arg0: i32, %arg1: memref<2xi32, #tpu.memory_space<smem>>) -> (i32, i32, i32) {
    %c0_i32 = arith.constant 0 : i32
    %c0_i32_0 = arith.constant 0 : i32
    %c0_i32_1 = arith.constant 0 : i32
    return %arg0, %c0_i32, %c0_i32_0 : i32, i32, i32
  }
  func.func @transform_13(%arg0: i32, %arg1: memref<2xi32, #tpu.memory_space<smem>>) -> (i32, i32, i32) {
    %c0_i32 = arith.constant 0 : i32
    %c0_i32_0 = arith.constant 0 : i32
    %c0_i32_1 = arith.constant 0 : i32
    return %arg0, %c0_i32, %c0_i32_0 : i32, i32, i32
  }
  func.func @transform_14(%arg0: i32, %arg1: memref<2xi32, #tpu.memory_space<smem>>) -> (i32, i32, i32) {
    %c0_i32 = arith.constant 0 : i32
    %c0_i32_0 = arith.constant 0 : i32
    %c0_i32_1 = arith.constant 0 : i32
    return %arg0, %c0_i32, %c0_i32_0 : i32, i32, i32
  }
  func.func @transform_15(%arg0: i32, %arg1: memref<2xi32, #tpu.memory_space<smem>>) -> (i32, i32, i32) {
    %c0_i32 = arith.constant 0 : i32
    %c0_i32_0 = arith.constant 0 : i32
    %c0_i32_1 = arith.constant 0 : i32
    return %arg0, %c0_i32, %c0_i32_0 : i32, i32, i32
  }
  func.func @transform_16(%arg0: i32, %arg1: memref<2xi32, #tpu.memory_space<smem>>) -> (i32, i32, i32) {
    %c0_i32 = arith.constant 0 : i32
    %c0_i32_0 = arith.constant 0 : i32
    %c0_i32_1 = arith.constant 0 : i32
    %c0_i32_2 = arith.constant 0 : i32
    return %c0_i32, %c0_i32_0, %c0_i32_1 : i32, i32, i32
  }
}

</mosaic_0001>

<llo_original>
// kernel: tpu_custom_call.1
$region0: #{tpu_custom_call.1}
  #allocation0 [shape = 'u32[]', space=smem, size = 0x4, offset = 0x4, fixed_abs, tag = 'smem constant byte address 0x4 - core index']
  #allocation1 [shape = 'u32[72,128]{1,0:T(1,128)}', space=vmem, size = 0x9000, scoped, tag = 'internal scratch']
  #allocation2 [shape = 'f32[4,8,32]{2,1,0:T(8,128)}', space=vmem, size = 0x4000, scoped, tag = 'scratch operand']
  #allocation3 [shape = 's32[1]{0}', space=sflag, size = 0x4, scoped, tag = 'scoped memory for tpu_custom_call.1']
  #allocation4 [shape = 'u8[512]{0}', space=smem, size = 0x200, scoped, tag = 'prefetched SMEM operand 0']
  %s0 = inlined_call_operand.vmem [shape: s32[2], index: 0, kind: input, shape index: {}]
  %s1 = inlined_call_operand.vmem [shape: f32[4,8,32], index: 1, kind: input, shape index: {}]
  %s2 = inlined_call_operand.vmem [shape: bf16[2,4,32,8], index: 2, kind: input, shape index: {}]
  %s3 = inlined_call_operand.vmem [shape: f32[2,4,1,8], index: 3, kind: input, shape index: {}]
  %s4 = inlined_call_operand.vmem [shape: bf16[2,4,32,8], index: 4, kind: input, shape index: {}]
  %s5 = inlined_call_operand.vmem [shape: f32[2,4,1,8], index: 5, kind: input, shape index: {}]
  %s6 = inlined_call_operand.vmem [shape: bf16[2,4,32,8], index: 6, kind: input, shape index: {}]
  %s7 = inlined_call_operand.vmem [shape: f32[2,4,1,8], index: 7, kind: input, shape index: {}]
  %s8 = inlined_call_operand.vmem [shape: bf16[2,4,8,32], index: 8, kind: input, shape index: {}]
  %s9 = inlined_call_operand.vmem [shape: f32[2,1,32], index: 9, kind: input, shape index: {}]
  %s10 = inlined_call_operand.vmem [shape: bf16[2,32,64], index: 10, kind: input, shape index: {}]
  %s11 = inlined_call_operand.vmem [shape: bf16[2,32,64], index: 11, kind: input, shape index: {}]
  %s12 = inlined_call_operand.vmem [shape: f32[2,1,64], index: 12, kind: input, shape index: {}]
  %s13 = inlined_call_operand.vmem [shape: f32[2,1,64], index: 13, kind: input, shape index: {}]
  %s14 = inlined_call_operand.vmem [shape: f32[2,1,64], index: 14, kind: input, shape index: {}]
  %s15 = inlined_call_operand.vmem [shape: bf16[2,64,32], index: 15, kind: input, shape index: {}]
  %s16 = inlined_call_operand.vmem [shape: f32[2,1,32], index: 16, kind: input, shape index: {}]
  %s17 = inlined_call_operand.hbm [shape: f32[4,8,32], index: 17, kind: output, shape index: {}]
  %s18 = sld [smem:[#allocation0]]
  $region101: #{tpu_custom_call.1} parent=0
    _
  %s20 = ssub.s32 1, %s18
  %s21 = scalar_select 0, %s20, %s18
  %s23 = sshll.u32 %s0, 4
  %s24 = int_to_ptr.vmem [resolvable:$true] %s23
  %26 = dma.vmem_to_smem %s24, 16, [#allocation4], [#allocation3]
  %28 = dma.done [#allocation3], 16
  %29 = sfence
  $region1: #{tpu_custom_call.1} parent=0
    #allocation5 [shape = 'u8[16384]{0}', space=vmem, size = 0x4000, scoped, tag = 'output window, operand 0, single buffered']
    #allocation6 [shape = 's32[2]{0}', space=sflag, size = 0x8, scoped, tag = 'scoped memory for tpu_custom_call.1']
    %30 = vsyncpa [#allocation6], 0
    loop: start=0, step=1, limit=4
    $region2: #{tpu_custom_call.1} parent=1 // loop_pre_header
      _
    $region3: #{tpu_custom_call.1} parent=1 // loop_header
      %s32 = sphi 0, %s36
      %p33 = scmp.ge.s32.totalorder %s32, 4
      %s40 = sphi 0, %s40
      %s42 = sphi 0, %s40
      %s43 = sphi 0, %s42
      %s57 = sphi 0, %s43
      %s63 = sphi 0, %s65
      %s66 = sphi 0, %s63
      %s67 = sphi 0, %s66
      %s83 = sphi 0, %s67
      %s89 = sphi 0, %s91
      %s92 = sphi 0, %s89
      %s93 = sphi 0, %s92
      %s109 = sphi 0, %s93
      %s115 = sphi 0, %s117
      %s118 = sphi 0, %s115
      %s119 = sphi 0, %s118
      %s135 = sphi 0, %s119
      %s141 = sphi 0, %s143
      %s144 = sphi 0, %s141
      %s145 = sphi 0, %s144
      %s161 = sphi 0, %s145
      %s167 = sphi 0, %s169
      %s170 = sphi 0, %s167
      %s171 = sphi 0, %s170
      %s187 = sphi 0, %s171
      %s193 = sphi 0, %s195
      %s196 = sphi 0, %s193
      %s197 = sphi 0, %s196
      %s213 = sphi 0, %s197
      %s219 = sphi 0, %s221
      %s222 = sphi 0, %s219
      %s223 = sphi 0, %s222
      %s239 = sphi 0, %s223
      %s245 = sphi 0, %s247
      %s248 = sphi 0, %s245
      %s249 = sphi 0, %s248
      %s265 = sphi 0, %s249
      %s271 = sphi 0, %s273
      %s274 = sphi 0, %s271
      %s275 = sphi 0, %s274
      %s291 = sphi 0, %s275
      %s297 = sphi 0, %s299
      %s300 = sphi 0, %s297
      %s301 = sphi 0, %s300
      %s317 = sphi 0, %s301
      %s323 = sphi 0, %s325
      %s326 = sphi 0, %s323
      %s327 = sphi 0, %s326
      %s343 = sphi 0, %s327
      %s349 = sphi 0, %s351
      %s352 = sphi 0, %s349
      %s353 = sphi 0, %s352
      %s369 = sphi 0, %s353
      %s375 = sphi 0, %s377
      %s378 = sphi 0, %s375
      %s379 = sphi 0, %s378
      %s395 = sphi 0, %s379
      %s401 = sphi 0, %s403
      %s404 = sphi 0, %s401
      %s405 = sphi 0, %s404
      %s421 = sphi 0, %s405
      %s427 = sphi 0, %s429
      %s430 = sphi 0, %s427
      %s431 = sphi 0, %s430
      %s447 = sphi 0, %s431
      %s451 = sphi 0, %s451
      %s453 = sphi 0, %s451
      %s454 = sphi 0, %s453
      %s468 = sphi 0, %s454
    $region4: #{tpu_custom_call.1} parent=1 // loop_header_branch
      %35 = sbr.rel (%p33) target = $region8
    $region5: #{tpu_custom_call.1} parent=1 // loop_body
      %s37 = ssub.s32 %s32, 1
      %s38 = ssub.s32 %s32, 2
      %s39 = sadd.s32 %s32, 1
      %s41 = sadd.s32 %s40, 1
      %p44 = scmp.eq.s32.totalorder %s32, 1
      %p45 = scmp.ne.s32.totalorder %s40, %s42
      %p46 = scmp.eq.s32.totalorder %s32, 0
      %p47 = por %p45, %p46
      %p48 = scmp.ne.s32.totalorder %s40, %s42
      %p49 = scmp.eq.s32.totalorder %s37, 1
      %p50 = por %p48, %p49
      %p51 = scmp.ne.s32.totalorder %s42, %s43
      %p52 = scmp.eq.s32.totalorder %s37, 0
      %p53 = por %p51, %p52
      %p54 = scmp.ne.s32.totalorder %s42, %s43
      %p55 = scmp.eq.s32.totalorder %s38, 1
      %p56 = por %p54, %p55
      %p58 = scmp.ne.s32.totalorder %s43, %s57
      %p59 = scmp.eq.s32.totalorder %s38, 0
      %p60 = por %p58, %p59
      %s61 = ssub.s32 %s32, %s39
      %p62 = scmp.eq.s32.totalorder %s61, 0
      %s64 = sadd.s32 %s63, 1
      %s65 = scalar_select %p62, %s63, %s64
      %p68 = pneg %p62
      %p69 = scmp.eq.s32.totalorder %s32, 1
      %p70 = por %p68, %p69
      %p71 = scmp.ne.s32.totalorder %s63, %s66
      %p72 = scmp.eq.s32.totalorder %s32, 0
      %p73 = por %p71, %p72
      %p74 = scmp.ne.s32.totalorder %s63, %s66
      %p75 = scmp.eq.s32.totalorder %s37, 1
      %p76 = por %p74, %p75
      %p77 = scmp.ne.s32.totalorder %s66, %s67
      %p78 = scmp.eq.s32.totalorder %s37, 0
      %p79 = por %p77, %p78
      %p80 = scmp.ne.s32.totalorder %s66, %s67
      %p81 = scmp.eq.s32.totalorder %s38, 1
      %p82 = por %p80, %p81
      %p84 = scmp.ne.s32.totalorder %s67, %s83
      %p85 = scmp.eq.s32.totalorder %s38, 0
      %p86 = por %p84, %p85
      %s87 = ssub.s32 %s32, %s39
      %p88 = scmp.eq.s32.totalorder %s87, 0
      %s90 = sadd.s32 %s89, 1
      %s91 = scalar_select %p88, %s89, %s90
      %p94 = pneg %p88
      %p95 = scmp.eq.s32.totalorder %s32, 1
      %p96 = por %p94, %p95
      %p97 = scmp.ne.s32.totalorder %s89, %s92
      %p98 = scmp.eq.s32.totalorder %s32, 0
      %p99 = por %p97, %p98
      %p100 = scmp.ne.s32.totalorder %s89, %s92
      %p101 = scmp.eq.s32.totalorder %s37, 1
      %p102 = por %p100, %p101
      %p103 = scmp.ne.s32.totalorder %s92, %s93
      %p104 = scmp.eq.s32.totalorder %s37, 0
      %p105 = por %p103, %p104
      %p106 = scmp.ne.s32.totalorder %s92, %s93
      %p107 = scmp.eq.s32.totalorder %s38, 1
      %p108 = por %p106, %p107
      %p110 = scmp.ne.s32.totalorder %s93, %s109
      %p111 = scmp.eq.s32.totalorder %s38, 0
      %p112 = por %p110, %p111
      %s113 = ssub.s32 %s32, %s39
      %p114 = scmp.eq.s32.totalorder %s113, 0
      %s116 = sadd.s32 %s115, 1
      %s117 = scalar_select %p114, %s115, %s116
      %p120 = pneg %p114
      %p121 = scmp.eq.s32.totalorder %s32, 1
      %p122 = por %p120, %p121
      %p123 = scmp.ne.s32.totalorder %s115, %s118
      %p124 = scmp.eq.s32.totalorder %s32, 0
      %p125 = por %p123, %p124
      %p126 = scmp.ne.s32.totalorder %s115, %s118
      %p127 = scmp.eq.s32.totalorder %s37, 1
      %p128 = por %p126, %p127
      %p129 = scmp.ne.s32.totalorder %s118, %s119
      %p130 = scmp.eq.s32.totalorder %s37, 0
      %p131 = por %p129, %p130
      %p132 = scmp.ne.s32.totalorder %s118, %s119
      %p133 = scmp.eq.s32.totalorder %s38, 1
      %p134 = por %p132, %p133
      %p136 = scmp.ne.s32.totalorder %s119, %s135
      %p137 = scmp.eq.s32.totalorder %s38, 0
      %p138 = por %p136, %p137
      %s139 = ssub.s32 %s32, %s39
      %p140 = scmp.eq.s32.totalorder %s139, 0
      %s142 = sadd.s32 %s141, 1
      %s143 = scalar_select %p140, %s141, %s142
      %p146 = pneg %p140
      %p147 = scmp.eq.s32.totalorder %s32, 1
      %p148 = por %p146, %p147
      %p149 = scmp.ne.s32.totalorder %s141, %s144
      %p150 = scmp.eq.s32.totalorder %s32, 0
      %p151 = por %p149, %p150
      %p152 = scmp.ne.s32.totalorder %s141, %s144
      %p153 = scmp.eq.s32.totalorder %s37, 1
      %p154 = por %p152, %p153
      %p155 = scmp.ne.s32.totalorder %s144, %s145
      %p156 = scmp.eq.s32.totalorder %s37, 0
      %p157 = por %p155, %p156
      %p158 = scmp.ne.s32.totalorder %s144, %s145
      %p159 = scmp.eq.s32.totalorder %s38, 1
      %p160 = por %p158, %p159
      %p162 = scmp.ne.s32.totalorder %s145, %s161
      %p163 = scmp.eq.s32.totalorder %s38, 0
      %p164 = por %p162, %p163
      %s165 = ssub.s32 %s32, %s39
      %p166 = scmp.eq.s32.totalorder %s165, 0
      %s168 = sadd.s32 %s167, 1
      %s169 = scalar_select %p166, %s167, %s168
      %p172 = pneg %p166
      %p173 = scmp.eq.s32.totalorder %s32, 1
      %p174 = por %p172, %p173
      %p175 = scmp.ne.s32.totalorder %s167, %s170
      %p176 = scmp.eq.s32.totalorder %s32, 0
      %p177 = por %p175, %p176
      %p178 = scmp.ne.s32.totalorder %s167, %s170
      %p179 = scmp.eq.s32.totalorder %s37, 1
      %p180 = por %p178, %p179
      %p181 = scmp.ne.s32.totalorder %s170, %s171
      %p182 = scmp.eq.s32.totalorder %s37, 0
      %p183 = por %p181, %p182
      %p184 = scmp.ne.s32.totalorder %s170, %s171
      %p185 = scmp.eq.s32.totalorder %s38, 1
      %p186 = por %p184, %p185
      %p188 = scmp.ne.s32.totalorder %s171, %s187
      %p189 = scmp.eq.s32.totalorder %s38, 0
      %p190 = por %p188, %p189
      %s191 = ssub.s32 %s32, %s39
      %p192 = scmp.eq.s32.totalorder %s191, 0
      %s194 = sadd.s32 %s193, 1
      %s195 = scalar_select %p192, %s193, %s194
      %p198 = pneg %p192
      %p199 = scmp.eq.s32.totalorder %s32, 1
      %p200 = por %p198, %p199
      %p201 = scmp.ne.s32.totalorder %s193, %s196
      %p202 = scmp.eq.s32.totalorder %s32, 0
      %p203 = por %p201, %p202
      %p204 = scmp.ne.s32.totalorder %s193, %s196
      %p205 = scmp.eq.s32.totalorder %s37, 1
      %p206 = por %p204, %p205
      %p207 = scmp.ne.s32.totalorder %s196, %s197
      %p208 = scmp.eq.s32.totalorder %s37, 0
      %p209 = por %p207, %p208
      %p210 = scmp.ne.s32.totalorder %s196, %s197
      %p211 = scmp.eq.s32.totalorder %s38, 1
      %p212 = por %p210, %p211
      %p214 = scmp.ne.s32.totalorder %s197, %s213
      %p215 = scmp.eq.s32.totalorder %s38, 0
      %p216 = por %p214, %p215
      %s217 = ssub.s32 %s32, %s39
      %p218 = scmp.eq.s32.totalorder %s217, 0
      %s220 = sadd.s32 %s219, 1
      %s221 = scalar_select %p218, %s219, %s220
      %p224 = pneg %p218
      %p225 = scmp.eq.s32.totalorder %s32, 1
      %p226 = por %p224, %p225
      %p227 = scmp.ne.s32.totalorder %s219, %s222
      %p228 = scmp.eq.s32.totalorder %s32, 0
      %p229 = por %p227, %p228
      %p230 = scmp.ne.s32.totalorder %s219, %s222
      %p231 = scmp.eq.s32.totalorder %s37, 1
      %p232 = por %p230, %p231
      %p233 = scmp.ne.s32.totalorder %s222, %s223
      %p234 = scmp.eq.s32.totalorder %s37, 0
      %p235 = por %p233, %p234
      %p236 = scmp.ne.s32.totalorder %s222, %s223
      %p237 = scmp.eq.s32.totalorder %s38, 1
      %p238 = por %p236, %p237
      %p240 = scmp.ne.s32.totalorder %s223, %s239
      %p241 = scmp.eq.s32.totalorder %s38, 0
      %p242 = por %p240, %p241
      %s243 = ssub.s32 %s32, %s39
      %p244 = scmp.eq.s32.totalorder %s243, 0
      %s246 = sadd.s32 %s245, 1
      %s247 = scalar_select %p244, %s245, %s246
      %p250 = pneg %p244
      %p251 = scmp.eq.s32.totalorder %s32, 1
      %p252 = por %p250, %p251
      %p253 = scmp.ne.s32.totalorder %s245, %s248
      %p254 = scmp.eq.s32.totalorder %s32, 0
      %p255 = por %p253, %p254
      %p256 = scmp.ne.s32.totalorder %s245, %s248
      %p257 = scmp.eq.s32.totalorder %s37, 1
      %p258 = por %p256, %p257
      %p259 = scmp.ne.s32.totalorder %s248, %s249
      %p260 = scmp.eq.s32.totalorder %s37, 0
      %p261 = por %p259, %p260
      %p262 = scmp.ne.s32.totalorder %s248, %s249
      %p263 = scmp.eq.s32.totalorder %s38, 1
      %p264 = por %p262, %p263
      %p266 = scmp.ne.s32.totalorder %s249, %s265
      %p267 = scmp.eq.s32.totalorder %s38, 0
      %p268 = por %p266, %p267
      %s269 = ssub.s32 %s32, %s39
      %p270 = scmp.eq.s32.totalorder %s269, 0
      %s272 = sadd.s32 %s271, 1
      %s273 = scalar_select %p270, %s271, %s272
      %p276 = pneg %p270
      %p277 = scmp.eq.s32.totalorder %s32, 1
      %p278 = por %p276, %p277
      %p279 = scmp.ne.s32.totalorder %s271, %s274
      %p280 = scmp.eq.s32.totalorder %s32, 0
      %p281 = por %p279, %p280
      %p282 = scmp.ne.s32.totalorder %s271, %s274
      %p283 = scmp.eq.s32.totalorder %s37, 1
      %p284 = por %p282, %p283
      %p285 = scmp.ne.s32.totalorder %s274, %s275
      %p286 = scmp.eq.s32.totalorder %s37, 0
      %p287 = por %p285, %p286
      %p288 = scmp.ne.s32.totalorder %s274, %s275
      %p289 = scmp.eq.s32.totalorder %s38, 1
      %p290 = por %p288, %p289
      %p292 = scmp.ne.s32.totalorder %s275, %s291
      %p293 = scmp.eq.s32.totalorder %s38, 0
      %p294 = por %p292, %p293
      %s295 = ssub.s32 %s32, %s39
      %p296 = scmp.eq.s32.totalorder %s295, 0
      %s298 = sadd.s32 %s297, 1
      %s299 = scalar_select %p296, %s297, %s298
      %p302 = pneg %p296
      %p303 = scmp.eq.s32.totalorder %s32, 1
      %p304 = por %p302, %p303
      %p305 = scmp.ne.s32.totalorder %s297, %s300
      %p306 = scmp.eq.s32.totalorder %s32, 0
      %p307 = por %p305, %p306
      %p308 = scmp.ne.s32.totalorder %s297, %s300
      %p309 = scmp.eq.s32.totalorder %s37, 1
      %p310 = por %p308, %p309
      %p311 = scmp.ne.s32.totalorder %s300, %s301
      %p312 = scmp.eq.s32.totalorder %s37, 0
      %p313 = por %p311, %p312
      %p314 = scmp.ne.s32.totalorder %s300, %s301
      %p315 = scmp.eq.s32.totalorder %s38, 1
      %p316 = por %p314, %p315
      %p318 = scmp.ne.s32.totalorder %s301, %s317
      %p319 = scmp.eq.s32.totalorder %s38, 0
      %p320 = por %p318, %p319
      %s321 = ssub.s32 %s32, %s39
      %p322 = scmp.eq.s32.totalorder %s321, 0
      %s324 = sadd.s32 %s323, 1
      %s325 = scalar_select %p322, %s323, %s324
      %p328 = pneg %p322
      %p329 = scmp.eq.s32.totalorder %s32, 1
      %p330 = por %p328, %p329
      %p331 = scmp.ne.s32.totalorder %s323, %s326
      %p332 = scmp.eq.s32.totalorder %s32, 0
      %p333 = por %p331, %p332
      %p334 = scmp.ne.s32.totalorder %s323, %s326
      %p335 = scmp.eq.s32.totalorder %s37, 1
      %p336 = por %p334, %p335
      %p337 = scmp.ne.s32.totalorder %s326, %s327
      %p338 = scmp.eq.s32.totalorder %s37, 0
      %p339 = por %p337, %p338
      %p340 = scmp.ne.s32.totalorder %s326, %s327
      %p341 = scmp.eq.s32.totalorder %s38, 1
      %p342 = por %p340, %p341
      %p344 = scmp.ne.s32.totalorder %s327, %s343
      %p345 = scmp.eq.s32.totalorder %s38, 0
      %p346 = por %p344, %p345
      %s347 = ssub.s32 %s32, %s39
      %p348 = scmp.eq.s32.totalorder %s347, 0
      %s350 = sadd.s32 %s349, 1
      %s351 = scalar_select %p348, %s349, %s350
      %p354 = pneg %p348
      %p355 = scmp.eq.s32.totalorder %s32, 1
      %p356 = por %p354, %p355
      %p357 = scmp.ne.s32.totalorder %s349, %s352
      %p358 = scmp.eq.s32.totalorder %s32, 0
      %p359 = por %p357, %p358
      %p360 = scmp.ne.s32.totalorder %s349, %s352
      %p361 = scmp.eq.s32.totalorder %s37, 1
      %p362 = por %p360, %p361
      %p363 = scmp.ne.s32.totalorder %s352, %s353
      %p364 = scmp.eq.s32.totalorder %s37, 0
      %p365 = por %p363, %p364
      %p366 = scmp.ne.s32.totalorder %s352, %s353
      %p367 = scmp.eq.s32.totalorder %s38, 1
      %p368 = por %p366, %p367
      %p370 = scmp.ne.s32.totalorder %s353, %s369
      %p371 = scmp.eq.s32.totalorder %s38, 0
      %p372 = por %p370, %p371
      %s373 = ssub.s32 %s32, %s39
      %p374 = scmp.eq.s32.totalorder %s373, 0
      %s376 = sadd.s32 %s375, 1
      %s377 = scalar_select %p374, %s375, %s376
      %p380 = pneg %p374
      %p381 = scmp.eq.s32.totalorder %s32, 1
      %p382 = por %p380, %p381
      %p383 = scmp.ne.s32.totalorder %s375, %s378
      %p384 = scmp.eq.s32.totalorder %s32, 0
      %p385 = por %p383, %p384
      %p386 = scmp.ne.s32.totalorder %s375, %s378
      %p387 = scmp.eq.s32.totalorder %s37, 1
      %p388 = por %p386, %p387
      %p389 = scmp.ne.s32.totalorder %s378, %s379
      %p390 = scmp.eq.s32.totalorder %s37, 0
      %p391 = por %p389, %p390
      %p392 = scmp.ne.s32.totalorder %s378, %s379
      %p393 = scmp.eq.s32.totalorder %s38, 1
      %p394 = por %p392, %p393
      %p396 = scmp.ne.s32.totalorder %s379, %s395
      %p397 = scmp.eq.s32.totalorder %s38, 0
      %p398 = por %p396, %p397
      %s399 = ssub.s32 %s32, %s39
      %p400 = scmp.eq.s32.totalorder %s399, 0
      %s402 = sadd.s32 %s401, 1
      %s403 = scalar_select %p400, %s401, %s402
      %p406 = pneg %p400
      %p407 = scmp.eq.s32.totalorder %s32, 1
      %p408 = por %p406, %p407
      %p409 = scmp.ne.s32.totalorder %s401, %s404
      %p410 = scmp.eq.s32.totalorder %s32, 0
      %p411 = por %p409, %p410
      %p412 = scmp.ne.s32.totalorder %s401, %s404
      %p413 = scmp.eq.s32.totalorder %s37, 1
      %p414 = por %p412, %p413
      %p415 = scmp.ne.s32.totalorder %s404, %s405
      %p416 = scmp.eq.s32.totalorder %s37, 0
      %p417 = por %p415, %p416
      %p418 = scmp.ne.s32.totalorder %s404, %s405
      %p419 = scmp.eq.s32.totalorder %s38, 1
      %p420 = por %p418, %p419
      %p422 = scmp.ne.s32.totalorder %s405, %s421
      %p423 = scmp.eq.s32.totalorder %s38, 0
      %p424 = por %p422, %p423
      %s425 = ssub.s32 %s32, %s39
      %p426 = scmp.eq.s32.totalorder %s425, 0
      %s428 = sadd.s32 %s427, 1
      %s429 = scalar_select %p426, %s427, %s428
      %p432 = pneg %p426
      %p433 = scmp.eq.s32.totalorder %s32, 1
      %p434 = por %p432, %p433
      %p435 = scmp.ne.s32.totalorder %s427, %s430
      %p436 = scmp.eq.s32.totalorder %s32, 0
      %p437 = por %p435, %p436
      %p438 = scmp.ne.s32.totalorder %s427, %s430
      %p439 = scmp.eq.s32.totalorder %s37, 1
      %p440 = por %p438, %p439
      %p441 = scmp.ne.s32.totalorder %s430, %s431
      %p442 = scmp.eq.s32.totalorder %s37, 0
      %p443 = por %p441, %p442
      %p444 = scmp.ne.s32.totalorder %s430, %s431
      %p445 = scmp.eq.s32.totalorder %s38, 1
      %p446 = por %p444, %p445
      %p448 = scmp.ne.s32.totalorder %s431, %s447
      %p449 = scmp.eq.s32.totalorder %s38, 0
      %p450 = por %p448, %p449
      %s452 = sadd.s32 %s451, 1
      %p455 = scmp.eq.s32.totalorder %s32, 1
      %p456 = scmp.ne.s32.totalorder %s451, %s453
      %p457 = scmp.eq.s32.totalorder %s32, 0
      %p458 = por %p456, %p457
      %p459 = scmp.ne.s32.totalorder %s451, %s453
      %p460 = scmp.eq.s32.totalorder %s37, 1
      %p461 = por %p459, %p460
      %p462 = scmp.ne.s32.totalorder %s453, %s454
      %p463 = scmp.eq.s32.totalorder %s37, 0
      %p464 = por %p462, %p463
      %p465 = scmp.ne.s32.totalorder %s453, %s454
      %p466 = scmp.eq.s32.totalorder %s38, 1
      %p467 = por %p465, %p466
      %p469 = scmp.ne.s32.totalorder %s454, %s468
      %p470 = scmp.eq.s32.totalorder %s38, 0
      %p471 = por %p469, %p470
      %p472 = scmp.le.s32.totalorder 1, %s32
      %p473 = scmp.lt.s32.totalorder %s32, 3
      %p474 = pnand %p472, %p473
      %p475 = pneg %p474
      // Predicated region
      $region9: #{tpu_custom_call.1} parent=5 // pred_check
        _
      $region10: #{tpu_custom_call.1} parent=5 // pred_check_branch
        %477 = sbr.rel (%p474) target = $region12
      $region11: #{tpu_custom_call.1} parent=5 // pred_region
        %s478 = ssub.s32 %s32, 1
        // Predicated region
        $region13: #{tpu_custom_call.1} parent=11 // pred_check
          %p479 = pneg %p53
        $region14: #{tpu_custom_call.1} parent=11 // pred_check_branch
          %481 = sbr.rel (%p479) target = $region16
        $region15: #{tpu_custom_call.1} parent=11 // pred_region
          _
        $region16: #{tpu_custom_call.1} parent=11 // pred_fallthru
          _
      $region12: #{tpu_custom_call.1} parent=5 // pred_fallthru
        _
      %p482 = scmp.lt.s32.totalorder %s32, 2
      // Predicated region
      $region17: #{tpu_custom_call.1} parent=5 // pred_check
        %p483 = pneg %p482
      $region18: #{tpu_custom_call.1} parent=5 // pred_check_branch
        %485 = sbr.rel (%p483) target = $region20
      $region19: #{tpu_custom_call.1} parent=5 // pred_region
        // Predicated region
        $region21: #{tpu_custom_call.1} parent=19 // pred_check
          %p486 = pneg %p73
        $region22: #{tpu_custom_call.1} parent=19 // pred_check_branch
          %488 = sbr.rel (%p486) target = $region24
        $region23: #{tpu_custom_call.1} parent=19 // pred_region
          %p489 = scmp.lt.s32.totalorder %s32, 1
          %s490 = scalar_select %p489, %s32, 1
          %s491 = smul.addr %s490, 16
          %s492 = smul.addr %s491, 4
          %s493 = scalar_lea.vmem %s2, %s492
        $region24: #{tpu_custom_call.1} parent=19 // pred_fallthru
          _
        // Predicated region
        $region25: #{tpu_custom_call.1} parent=19 // pred_check
          %p494 = pneg %p99
        $region26: #{tpu_custom_call.1} parent=19 // pred_check_branch
          %496 = sbr.rel (%p494) target = $region28
        $region27: #{tpu_custom_call.1} parent=19 // pred_region
          %p497 = scmp.lt.s32.totalorder %s32, 1
          %s498 = scalar_select %p497, %s32, 1
          %s499 = smul.addr %s498, 4
          %s500 = scalar_lea.vmem %s3, %s499
        $region28: #{tpu_custom_call.1} parent=19 // pred_fallthru
          _
        // Predicated region
        $region29: #{tpu_custom_call.1} parent=19 // pred_check
          %p501 = pneg %p125
        $region30: #{tpu_custom_call.1} parent=19 // pred_check_branch
          %503 = sbr.rel (%p501) target = $region32
        $region31: #{tpu_custom_call.1} parent=19 // pred_region
          %p504 = scmp.lt.s32.totalorder %s32, 1
          %s505 = scalar_select %p504, %s32, 1
          %s506 = smul.addr %s505, 16
          %s507 = smul.addr %s506, 4
          %s508 = scalar_lea.vmem %s4, %s507
        $region32: #{tpu_custom_call.1} parent=19 // pred_fallthru
          _
        // Predicated region
        $region33: #{tpu_custom_call.1} parent=19 // pred_check
          %p509 = pneg %p151
        $region34: #{tpu_custom_call.1} parent=19 // pred_check_branch
          %511 = sbr.rel (%p509) target = $region36
        $region35: #{tpu_custom_call.1} parent=19 // pred_region
          %p512 = scmp.lt.s32.totalorder %s32, 1
          %s513 = scalar_select %p512, %s32, 1
          %s514 = smul.addr %s513, 4
          %s515 = scalar_lea.vmem %s5, %s514
        $region36: #{tpu_custom_call.1} parent=19 // pred_fallthru
          _
        // Predicated region
        $region37: #{tpu_custom_call.1} parent=19 // pred_check
          %p516 = pneg %p177
        $region38: #{tpu_custom_call.1} parent=19 // pred_check_branch
          %518 = sbr.rel (%p516) target = $region40
        $region39: #{tpu_custom_call.1} parent=19 // pred_region
          %p519 = scmp.lt.s32.totalorder %s32, 1
          %s520 = scalar_select %p519, %s32, 1
          %s521 = smul.addr %s520, 16
          %s522 = smul.addr %s521, 4
          %s523 = scalar_lea.vmem %s6, %s522
        $region40: #{tpu_custom_call.1} parent=19 // pred_fallthru
          _
        // Predicated region
        $region41: #{tpu_custom_call.1} parent=19 // pred_check
          %p524 = pneg %p203
        $region42: #{tpu_custom_call.1} parent=19 // pred_check_branch
          %526 = sbr.rel (%p524) target = $region44
        $region43: #{tpu_custom_call.1} parent=19 // pred_region
          %p527 = scmp.lt.s32.totalorder %s32, 1
          %s528 = scalar_select %p527, %s32, 1
          %s529 = smul.addr %s528, 4
          %s530 = scalar_lea.vmem %s7, %s529
        $region44: #{tpu_custom_call.1} parent=19 // pred_fallthru
          _
        // Predicated region
        $region45: #{tpu_custom_call.1} parent=19 // pred_check
          %p531 = pneg %p229
        $region46: #{tpu_custom_call.1} parent=19 // pred_check_branch
          %533 = sbr.rel (%p531) target = $region48
        $region47: #{tpu_custom_call.1} parent=19 // pred_region
          %p534 = scmp.lt.s32.totalorder %s32, 1
          %s535 = scalar_select %p534, %s32, 1
          %s536 = smul.addr %s535, 4
          %s537 = smul.addr %s536, 4
          %s538 = scalar_lea.vmem %s8, %s537
        $region48: #{tpu_custom_call.1} parent=19 // pred_fallthru
          _
        // Predicated region
        $region49: #{tpu_custom_call.1} parent=19 // pred_check
          %p539 = pneg %p255
        $region50: #{tpu_custom_call.1} parent=19 // pred_check_branch
          %541 = sbr.rel (%p539) target = $region52
        $region51: #{tpu_custom_call.1} parent=19 // pred_region
          %p542 = scmp.lt.s32.totalorder %s32, 1
          %s543 = scalar_select %p542, %s32, 1
          %s544 = scalar_lea.vmem %s9, %s543
        $region52: #{tpu_custom_call.1} parent=19 // pred_fallthru
          _
        // Predicated region
        $region53: #{tpu_custom_call.1} parent=19 // pred_check
          %p545 = pneg %p281
        $region54: #{tpu_custom_call.1} parent=19 // pred_check_branch
          %547 = sbr.rel (%p545) target = $region56
        $region55: #{tpu_custom_call.1} parent=19 // pred_region
          %p548 = scmp.lt.s32.totalorder %s32, 1
          %s549 = scalar_select %p548, %s32, 1
          %s550 = smul.addr %s549, 4
          %s551 = smul.addr %s550, 4
          %s552 = scalar_lea.vmem %s10, %s551
        $region56: #{tpu_custom_call.1} parent=19 // pred_fallthru
          _
        // Predicated region
        $region57: #{tpu_custom_call.1} parent=19 // pred_check
          %p553 = pneg %p307
        $region58: #{tpu_custom_call.1} parent=19 // pred_check_branch
          %555 = sbr.rel (%p553) target = $region60
        $region59: #{tpu_custom_call.1} parent=19 // pred_region
          %p556 = scmp.lt.s32.totalorder %s32, 1
          %s557 = scalar_select %p556, %s32, 1
          %s558 = smul.addr %s557, 4
          %s559 = smul.addr %s558, 4
          %s560 = scalar_lea.vmem %s11, %s559
        $region60: #{tpu_custom_call.1} parent=19 // pred_fallthru
          _
        // Predicated region
        $region61: #{tpu_custom_call.1} parent=19 // pred_check
          %p561 = pneg %p333
        $region62: #{tpu_custom_call.1} parent=19 // pred_check_branch
          %563 = sbr.rel (%p561) target = $region64
        $region63: #{tpu_custom_call.1} parent=19 // pred_region
          %p564 = scmp.lt.s32.totalorder %s32, 1
          %s565 = scalar_select %p564, %s32, 1
          %s566 = scalar_lea.vmem %s12, %s565
        $region64: #{tpu_custom_call.1} parent=19 // pred_fallthru
          _
        // Predicated region
        $region65: #{tpu_custom_call.1} parent=19 // pred_check
          %p567 = pneg %p359
        $region66: #{tpu_custom_call.1} parent=19 // pred_check_branch
          %569 = sbr.rel (%p567) target = $region68
        $region67: #{tpu_custom_call.1} parent=19 // pred_region
          %p570 = scmp.lt.s32.totalorder %s32, 1
          %s571 = scalar_select %p570, %s32, 1
          %s572 = scalar_lea.vmem %s13, %s571
        $region68: #{tpu_custom_call.1} parent=19 // pred_fallthru
          _
        // Predicated region
        $region69: #{tpu_custom_call.1} parent=19 // pred_check
          %p573 = pneg %p385
        $region70: #{tpu_custom_call.1} parent=19 // pred_check_branch
          %575 = sbr.rel (%p573) target = $region72
        $region71: #{tpu_custom_call.1} parent=19 // pred_region
          %p576 = scmp.lt.s32.totalorder %s32, 1
          %s577 = scalar_select %p576, %s32, 1
          %s578 = scalar_lea.vmem %s14, %s577
        $region72: #{tpu_custom_call.1} parent=19 // pred_fallthru
          _
        // Predicated region
        $region73: #{tpu_custom_call.1} parent=19 // pred_check
          %p579 = pneg %p411
        $region74: #{tpu_custom_call.1} parent=19 // pred_check_branch
          %581 = sbr.rel (%p579) target = $region76
        $region75: #{tpu_custom_call.1} parent=19 // pred_region
          %p582 = scmp.lt.s32.totalorder %s32, 1
          %s583 = scalar_select %p582, %s32, 1
          %s584 = smul.addr %s583, 8
          %s585 = smul.addr %s584, 4
          %s586 = scalar_lea.vmem %s15, %s585
        $region76: #{tpu_custom_call.1} parent=19 // pred_fallthru
          _
        // Predicated region
        $region77: #{tpu_custom_call.1} parent=19 // pred_check
          %p587 = pneg %p437
        $region78: #{tpu_custom_call.1} parent=19 // pred_check_branch
          %589 = sbr.rel (%p587) target = $region80
        $region79: #{tpu_custom_call.1} parent=19 // pred_region
          %p590 = scmp.lt.s32.totalorder %s32, 1
          %s591 = scalar_select %p590, %s32, 1
          %s592 = scalar_lea.vmem %s16, %s591
        $region80: #{tpu_custom_call.1} parent=19 // pred_fallthru
          _
      $region20: #{tpu_custom_call.1} parent=5 // pred_fallthru
        _
      %p593 = scmp.le.s32.totalorder 1, %s32
      %p594 = scmp.lt.s32.totalorder %s32, 3
      %p595 = pnand %p593, %p594
      %p596 = pneg %p595
      // Predicated region
      $region81: #{tpu_custom_call.1} parent=5 // pred_check
        _
      $region82: #{tpu_custom_call.1} parent=5 // pred_check_branch
        %598 = sbr.rel (%p595) target = $region84
      $region83: #{tpu_custom_call.1} parent=5 // pred_region
        %s599 = ssub.s32 %s32, 1
        %p600 = pneg %p53
        %p601 = pneg %p50
        %p602 = scmp.lt.s32.totalorder %s37, 1
        %s603 = scalar_select %p602, %s37, 1
        %s604 = smul.addr %s603, 16
        %s605 = smul.addr %s604, 4
        %s606 = scalar_lea.vmem %s2, %s605
        %p607 = pneg %p79
        %p608 = pneg %p76
        %p609 = scmp.lt.s32.totalorder %s37, 1
        %s610 = scalar_select %p609, %s37, 1
        %s611 = smul.addr %s610, 4
        %s612 = scalar_lea.vmem %s3, %s611
        %p613 = pneg %p105
        %p614 = pneg %p102
        %p615 = scmp.lt.s32.totalorder %s37, 1
        %s616 = scalar_select %p615, %s37, 1
        %s617 = smul.addr %s616, 16
        %s618 = smul.addr %s617, 4
        %s619 = scalar_lea.vmem %s4, %s618
        %p620 = pneg %p131
        %p621 = pneg %p128
        %p622 = scmp.lt.s32.totalorder %s37, 1
        %s623 = scalar_select %p622, %s37, 1
        %s624 = smul.addr %s623, 4
        %s625 = scalar_lea.vmem %s5, %s624
        %p626 = pneg %p157
        %p627 = pneg %p154
        %p628 = scmp.lt.s32.totalorder %s37, 1
        %s629 = scalar_select %p628, %s37, 1
        %s630 = smul.addr %s629, 16
        %s631 = smul.addr %s630, 4
        %s632 = scalar_lea.vmem %s6, %s631
        %p633 = pneg %p183
        %p634 = pneg %p180
        %p635 = scmp.lt.s32.totalorder %s37, 1
        %s636 = scalar_select %p635, %s37, 1
        %s637 = smul.addr %s636, 4
        %s638 = scalar_lea.vmem %s7, %s637
        %p639 = pneg %p209
        %p640 = pneg %p206
        %p641 = scmp.lt.s32.totalorder %s37, 1
        %s642 = scalar_select %p641, %s37, 1
        %s643 = smul.addr %s642, 4
        %s644 = smul.addr %s643, 4
        %s645 = scalar_lea.vmem %s8, %s644
        %p646 = pneg %p235
        %p647 = pneg %p232
        %p648 = scmp.lt.s32.totalorder %s37, 1
        %s649 = scalar_select %p648, %s37, 1
        %s650 = scalar_lea.vmem %s9, %s649
        %p651 = pneg %p261
        %p652 = pneg %p258
        %p653 = scmp.lt.s32.totalorder %s37, 1
        %s654 = scalar_select %p653, %s37, 1
        %s655 = smul.addr %s654, 4
        %s656 = smul.addr %s655, 4
        %s657 = scalar_lea.vmem %s10, %s656
        %p658 = pneg %p287
        %p659 = pneg %p284
        %p660 = scmp.lt.s32.totalorder %s37, 1
        %s661 = scalar_select %p660, %s37, 1
        %s662 = smul.addr %s661, 4
        %s663 = smul.addr %s662, 4
        %s664 = scalar_lea.vmem %s11, %s663
        %p665 = pneg %p313
        %p666 = pneg %p310
        %p667 = scmp.lt.s32.totalorder %s37, 1
        %s668 = scalar_select %p667, %s37, 1
        %s669 = scalar_lea.vmem %s12, %s668
        %p670 = pneg %p339
        %p671 = pneg %p336
        %p672 = scmp.lt.s32.totalorder %s37, 1
        %s673 = scalar_select %p672, %s37, 1
        %s674 = scalar_lea.vmem %s13, %s673
        %p675 = pneg %p365
        %p676 = pneg %p362
        %p677 = scmp.lt.s32.totalorder %s37, 1
        %s678 = scalar_select %p677, %s37, 1
        %s679 = scalar_lea.vmem %s14, %s678
        %p680 = pneg %p391
        %p681 = pneg %p388
        %p682 = scmp.lt.s32.totalorder %s37, 1
        %s683 = scalar_select %p682, %s37, 1
        %s684 = smul.addr %s683, 8
        %s685 = smul.addr %s684, 4
        %s686 = scalar_lea.vmem %s15, %s685
        %p687 = pneg %p417
        %p688 = pneg %p414
        %p689 = scmp.lt.s32.totalorder %s37, 1
        %s690 = scalar_select %p689, %s37, 1
        %s691 = scalar_lea.vmem %s16, %s690
        %p692 = pneg %p443
        %p693 = pneg %p440
        %p694 = pneg %p464
        %p695 = pneg %p461
        %p696 = scmp.lt.s32.totalorder %s37, 1
        %s697 = scalar_select %p696, %s37, 1
        %s698 = smul.addr %s697, 16
        %s699 = smul.addr %s698, 4
        %s700 = scalar_lea.vmem %s2, %s699
        %p701 = scmp.lt.s32.totalorder %s37, 1
        %s702 = scalar_select %p701, %s37, 1
        %s703 = smul.addr %s702, 4
        %s704 = scalar_lea.vmem %s3, %s703
        %p705 = scmp.lt.s32.totalorder %s37, 1
        %s706 = scalar_select %p705, %s37, 1
        %s707 = smul.addr %s706, 16
        %s708 = smul.addr %s707, 4
        %s709 = scalar_lea.vmem %s4, %s708
        %p710 = scmp.lt.s32.totalorder %s37, 1
        %s711 = scalar_select %p710, %s37, 1
        %s712 = smul.addr %s711, 4
        %s713 = scalar_lea.vmem %s5, %s712
        %p714 = scmp.lt.s32.totalorder %s37, 1
        %s715 = scalar_select %p714, %s37, 1
        %s716 = smul.addr %s715, 16
        %s717 = smul.addr %s716, 4
        %s718 = scalar_lea.vmem %s6, %s717
        %p719 = scmp.lt.s32.totalorder %s37, 1
        %s720 = scalar_select %p719, %s37, 1
        %s721 = smul.addr %s720, 4
        %s722 = scalar_lea.vmem %s7, %s721
        %p723 = scmp.lt.s32.totalorder %s37, 1
        %s724 = scalar_select %p723, %s37, 1
        %s725 = smul.addr %s724, 4
        %s726 = smul.addr %s725, 4
        %s727 = scalar_lea.vmem %s8, %s726
        %p728 = scmp.lt.s32.totalorder %s37, 1
        %s729 = scalar_select %p728, %s37, 1
        %s730 = scalar_lea.vmem %s9, %s729
        %p731 = scmp.lt.s32.totalorder %s37, 1
        %s732 = scalar_select %p731, %s37, 1
        %s733 = smul.addr %s732, 4
        %s734 = smul.addr %s733, 4
        %s735 = scalar_lea.vmem %s10, %s734
        %p736 = scmp.lt.s32.totalorder %s37, 1
        %s737 = scalar_select %p736, %s37, 1
        %s738 = smul.addr %s737, 4
        %s739 = smul.addr %s738, 4
        %s740 = scalar_lea.vmem %s11, %s739
        %p741 = scmp.lt.s32.totalorder %s37, 1
        %s742 = scalar_select %p741, %s37, 1
        %s743 = scalar_lea.vmem %s12, %s742
        %p744 = scmp.lt.s32.totalorder %s37, 1
        %s745 = scalar_select %p744, %s37, 1
        %s746 = scalar_lea.vmem %s13, %s745
        %p747 = scmp.lt.s32.totalorder %s37, 1
        %s748 = scalar_select %p747, %s37, 1
        %s749 = scalar_lea.vmem %s14, %s748
        %p750 = scmp.lt.s32.totalorder %s37, 1
        %s751 = scalar_select %p750, %s37, 1
        %s752 = smul.addr %s751, 8
        %s753 = smul.addr %s752, 4
        %s754 = scalar_lea.vmem %s15, %s753
        %p755 = scmp.lt.s32.totalorder %s37, 1
        %s756 = scalar_select %p755, %s37, 1
        %s757 = scalar_lea.vmem %s16, %s756
        %p759 = scmp.eq.s32.totalorder %s37, 0
        // Predicated region
        $region85: #{tpu_custom_call.1} parent=83 // pred_check
          %p760 = pneg %p759
        $region86: #{tpu_custom_call.1} parent=83 // pred_check_branch
          %762 = sbr.rel (%p760) target = $region88
        $region87: #{tpu_custom_call.1} parent=83 // pred_region
          %v763 = vld [vmem:[%s1] sm:$0xff]
          %v764 = vld [vmem:[%s1 + $0x8] sm:$0xff]
          %v765 = vld [vmem:[%s1 + $0x10] sm:$0xff]
          %v766 = vld [vmem:[%s1 + $0x18] sm:$0xff]
          %vm767 = vcmask 261120
          %768 = vst.msk [vmem:[#allocation2] sm:$0xff] %vm767, %v763
          %769 = vst.msk [vmem:[#allocation2 + $0x8] sm:$0xff] %vm767, %v764
          %770 = vst.msk [vmem:[#allocation2 + $0x10] sm:$0xff] %vm767, %v765
          %771 = vst.msk [vmem:[#allocation2 + $0x18] sm:$0xff] %vm767, %v766
        $region88: #{tpu_custom_call.1} parent=83 // pred_fallthru
          _
        %v772 = vld [vmem:[#allocation2] sm:$0xff]
        %v773 = vld [vmem:[#allocation2 + $0x8] sm:$0xff]
        %v774 = vld [vmem:[#allocation2 + $0x10] sm:$0xff]
        %v775 = vld [vmem:[#allocation2 + $0x18] sm:$0xff]
        %s776 = sld [smem:[#allocation4 + %s37]]
        %p777 = scmp.eq.s32.totalorder %s776, 1
        %s778 = scalar_select %p777, 1, 0
        %v779 = vstv %s778
        %vm780 = vcmp.eq.s32.totalorder %v779, 1
        %v781 = vsel %vm780, %v774, %v772
        %v782 = vsel %vm780, %v775, %v773
        %v783 = vsel %vm780, %v772, %v774
        %v784 = vsel %vm780, %v773, %v775
        %v785 = vpack.c.bf16 %v773, %v772
        %v786 = vpack.c.bf16 %v775, %v774
        %v787 = vpack.c.bf16 %v782, %v781
        %v788 = vpack.c.bf16 %v784, %v783
        %v789 = vld [vmem:[%s700] sm:$0xf]
        %v790 = vld [vmem:[%s700 + $0x4] sm:$0xf]
        %v791 = vld [vmem:[%s700 + $0x8] sm:$0xf]
        %v792 = vld [vmem:[%s700 + $0xc] sm:$0xf]
        %v793 = vld [vmem:[%s704] sm:$0x1]
        %v795 = vperm.slane %v793, 0
        %v801 = vunpack.c.l.b16 %v789
        %v802 = vunpack.c.l.b16 %v790
        %v803 = vunpack.c.l.b16 %v791
        %v804 = vunpack.c.l.b16 %v792
        %v805 = vpack.c.b16 %v802, %v801
        %v806 = vpack.c.b16 %v804, %v803
        %vm809 = vcmask 261120
        %v811 = vsel %vm809, %v785, 0
        %v814 = vsel %vm809, %v786, 0
        %816 = vmatpush.bf16.msra.mxu0 0
        %817 = vmatpush.bf16.msra.mxu0 0
        %818 = vmatpush.bf16.msra.mxu0 0
        %819 = vmatpush.bf16.msra.mxu0 0
        %820 = vmatpush.bf16.msra.mxu0 0
        %821 = vmatpush.bf16.msra.mxu0 0
        %822 = vmatpush.bf16.msra.mxu0 %v806
        %823 = vmatpush.bf16.msra.mxu0 %v805
        %824 = vmatmul.bf16.gmra.mxu0 %v811
        %v825 = vpop.f32.mrf.mxu0
        %v826 = vadd.f32 %v795, %v825
        %v827 = vpop.f32.mrf.mxu0
        %v828 = vadd.f32 %v795, %v827
        %829 = vmatmul.bf16.gmra.mxu0 %v814
        %v830 = vpop.f32.mrf.mxu0
        %v831 = vadd.f32 %v795, %v830
        %v832 = vpop.f32.mrf.mxu0
        %v833 = vadd.f32 %v795, %v832
        %834 = vdwg.mxu0
        %v835 = vld [vmem:[%s709] sm:$0xf]
        %v836 = vld [vmem:[%s709 + $0x4] sm:$0xf]
        %v837 = vld [vmem:[%s709 + $0x8] sm:$0xf]
        %v838 = vld [vmem:[%s709 + $0xc] sm:$0xf]
        %v839 = vld [vmem:[%s713] sm:$0x1]
        %v841 = vperm.slane %v839, 0
        %v847 = vunpack.c.l.b16 %v835
        %v848 = vunpack.c.l.b16 %v836
        %v849 = vunpack.c.l.b16 %v837
        %v850 = vunpack.c.l.b16 %v838
        %v851 = vpack.c.b16 %v848, %v847
        %v852 = vpack.c.b16 %v850, %v849
        %v856 = vsel %vm809, %v787, 0
        %v859 = vsel %vm809, %v788, 0
        %861 = vmatpush.bf16.msra.mxu0 0
        %862 = vmatpush.bf16.msra.mxu0 0
        %863 = vmatpush.bf16.msra.mxu0 0
        %864 = vmatpush.bf16.msra.mxu0 0
        %865 = vmatpush.bf16.msra.mxu0 0
        %866 = vmatpush.bf16.msra.mxu0 0
        %867 = vmatpush.bf16.msra.mxu0 %v852
        %868 = vmatpush.bf16.msra.mxu0 %v851
        %869 = vmatmul.bf16.gmra.mxu0 %v856
        %v870 = vpop.f32.mrf.mxu0
        %v871 = vadd.f32 %v841, %v870
        %v872 = vpop.f32.mrf.mxu0
        %v873 = vadd.f32 %v841, %v872
        %874 = vmatmul.bf16.gmra.mxu0 %v859
        %v875 = vpop.f32.mrf.mxu0
        %v876 = vadd.f32 %v841, %v875
        %v877 = vpop.f32.mrf.mxu0
        %v878 = vadd.f32 %v841, %v877
        %879 = vdwg.mxu0
        %v880 = vld [vmem:[%s718] sm:$0xf]
        %v881 = vld [vmem:[%s718 + $0x4] sm:$0xf]
        %v882 = vld [vmem:[%s718 + $0x8] sm:$0xf]
        %v883 = vld [vmem:[%s718 + $0xc] sm:$0xf]
        %v884 = vld [vmem:[%s722] sm:$0x1]
        %v886 = vperm.slane %v884, 0
        %v892 = vunpack.c.l.b16 %v880
        %v893 = vunpack.c.l.b16 %v881
        %v894 = vunpack.c.l.b16 %v882
        %v895 = vunpack.c.l.b16 %v883
        %v896 = vpack.c.b16 %v893, %v892
        %v897 = vpack.c.b16 %v895, %v894
        %900 = vmatpush.bf16.msra.mxu0 0
        %901 = vmatpush.bf16.msra.mxu0 0
        %902 = vmatpush.bf16.msra.mxu0 0
        %903 = vmatpush.bf16.msra.mxu0 0
        %904 = vmatpush.bf16.msra.mxu0 0
        %905 = vmatpush.bf16.msra.mxu0 0
        %906 = vmatpush.bf16.msra.mxu0 %v897
        %907 = vmatpush.bf16.msra.mxu0 %v896
        %908 = vmatmul.bf16.gmra.mxu0 %v856
        %v909 = vpop.f32.mrf.mxu0
        %v910 = vadd.f32 %v886, %v909
        %v911 = vpop.f32.mrf.mxu0
        %v912 = vadd.f32 %v886, %v911
        %913 = vmatmul.bf16.gmra.mxu0 %v859
        %v914 = vpop.f32.mrf.mxu0
        %v915 = vadd.f32 %v886, %v914
        %v916 = vpop.f32.mrf.mxu0
        %v917 = vadd.f32 %v886, %v916
        %918 = vdwg.mxu0
        %v919 = vpack.c.bf16 %v826, %v826
        %v920 = vpack.c.bf16 %v828, %v828
        %v921 = vpack.c.bf16 %v831, %v831
        %v922 = vpack.c.bf16 %v833, %v833
        %v923 = vpack.c.bf16 %v871, %v871
        %v924 = vpack.c.bf16 %v873, %v873
        %v925 = vpack.c.bf16 %v876, %v876
        %v926 = vpack.c.bf16 %v878, %v878
        %v927 = vpack.c.bf16 %v910, %v910
        %v928 = vpack.c.bf16 %v912, %v912
        %v929 = vpack.c.bf16 %v915, %v915
        %v930 = vpack.c.bf16 %v917, %v917
        %vm931 = vcmask 64512
        %v933 = vsel %vm931, %v919, 0
        %v936 = vsel %vm931, %v923, 0
        %938 = vmatpush.bf16.xpose.msra.mxu0 0
        %939 = vmatpush.bf16.xpose.msra.mxu0 0
        %940 = vmatpush.bf16.xpose.msra.mxu0 0
        %941 = vmatpush.bf16.xpose.msra.mxu0 0
        %942 = vmatpush.bf16.xpose.msra.mxu0 0
        %943 = vmatpush.bf16.xpose.msra.mxu0 0
        %944 = vmatpush.bf16.xpose.msra.mxu0 0
        %945 = vmatpush.bf16.xpose.msra.mxu0 %v936
        %946 = vmatmul.bf16.gmra.mxu0 %v933
        %v947 = vpop.f32.mrf.mxu0
        %v948 = vadd.f32 0.0, %v947
        %v949 = vpop.f32.mrf.mxu0
        %950 = vdwg.mxu0
        %v952 = vsel %vm931, %v920, 0
        %v955 = vsel %vm931, %v924, 0
        %957 = vmatpush.bf16.xpose.msra.mxu0 0
        %958 = vmatpush.bf16.xpose.msra.mxu0 0
        %959 = vmatpush.bf16.xpose.msra.mxu0 0
        %960 = vmatpush.bf16.xpose.msra.mxu0 0
        %961 = vmatpush.bf16.xpose.msra.mxu0 0
        %962 = vmatpush.bf16.xpose.msra.mxu0 0
        %963 = vmatpush.bf16.xpose.msra.mxu0 0
        %964 = vmatpush.bf16.xpose.msra.mxu0 %v955
        %965 = vmatmul.bf16.gmra.mxu0 %v952
        %v966 = vpop.f32.mrf.mxu0
        %v967 = vadd.f32 0.0, %v966
        %v968 = vpop.f32.mrf.mxu0
        %969 = vdwg.mxu0
        %v971 = vsel %vm931, %v921, 0
        %v974 = vsel %vm931, %v925, 0
        %976 = vmatpush.bf16.xpose.msra.mxu0 0
        %977 = vmatpush.bf16.xpose.msra.mxu0 0
        %978 = vmatpush.bf16.xpose.msra.mxu0 0
        %979 = vmatpush.bf16.xpose.msra.mxu0 0
        %980 = vmatpush.bf16.xpose.msra.mxu0 0
        %981 = vmatpush.bf16.xpose.msra.mxu0 0
        %982 = vmatpush.bf16.xpose.msra.mxu0 0
        %983 = vmatpush.bf16.xpose.msra.mxu0 %v974
        %984 = vmatmul.bf16.gmra.mxu0 %v971
        %v985 = vpop.f32.mrf.mxu0
        %v986 = vadd.f32 0.0, %v985
        %v987 = vpop.f32.mrf.mxu0
        %988 = vdwg.mxu0
        %v990 = vsel %vm931, %v922, 0
        %v993 = vsel %vm931, %v926, 0
        %995 = vmatpush.bf16.xpose.msra.mxu0 0
        %996 = vmatpush.bf16.xpose.msra.mxu0 0
        %997 = vmatpush.bf16.xpose.msra.mxu0 0
        %998 = vmatpush.bf16.xpose.msra.mxu0 0
        %999 = vmatpush.bf16.xpose.msra.mxu0 0
        %1000 = vmatpush.bf16.xpose.msra.mxu0 0
        %1001 = vmatpush.bf16.xpose.msra.mxu0 0
        %1002 = vmatpush.bf16.xpose.msra.mxu0 %v993
        %1003 = vmatmul.bf16.gmra.mxu0 %v990
        %v1004 = vpop.f32.mrf.mxu0
        %v1005 = vadd.f32 0.0, %v1004
        %v1006 = vpop.f32.mrf.mxu0
        %1007 = vdwg.mxu0
        %v1008 = vmul.f32 %v948, 0.35355338
        %v1009 = vmul.f32 %v967, 0.35355338
        %v1010 = vmul.f32 %v986, 0.35355338
        %v1011 = vmul.f32 %v1005, 0.35355338
        %v1012 = vsel %vm931, %v1008, -inf
        %1013 = vmax.xlane.f32.xlu0 %v1012
        %v1014 = vpop.xlane.xlu0 %1013
        %v1015 = vsel %vm931, %v1009, -inf
        %1016 = vmax.xlane.f32.xlu0 %v1015
        %v1017 = vpop.xlane.xlu0 %1016
        %v1018 = vsel %vm931, %v1010, -inf
        %1019 = vmax.xlane.f32.xlu0 %v1018
        %v1020 = vpop.xlane.xlu0 %1019
        %v1021 = vsel %vm931, %v1011, -inf
        %1022 = vmax.xlane.f32.xlu0 %v1021
        %v1023 = vpop.xlane.xlu0 %1022
        %v1024 = vsub.f32 %v1008, %v1014
        %v1025 = vsub.f32 %v1009, %v1017
        %v1026 = vsub.f32 %v1010, %v1020
        %v1027 = vsub.f32 %v1011, %v1023
        %v1028 = vmul.f32 %v1024, 1.442695
        %v1029 = vpow.pop %v1028
        %v1030 = vmul.f32 %v1025, 1.442695
        %v1031 = vpow.pop %v1030
        %v1032 = vmul.f32 %v1026, 1.442695
        %v1033 = vpow.pop %v1032
        %v1034 = vmul.f32 %v1027, 1.442695
        %v1035 = vpow.pop %v1034
        %v1036 = vsel %vm931, %v1029, 0.0
        %1037 = vadd.xlane.f32.xlu0 %v1036
        %v1038 = vpop.xlane.xlu0 %1037
        %v1039 = vsel %vm931, %v1031, 0.0
        %1040 = vadd.xlane.f32.xlu0 %v1039
        %v1041 = vpop.xlane.xlu0 %1040
        %v1042 = vsel %vm931, %v1033, 0.0
        %1043 = vadd.xlane.f32.xlu0 %v1042
        %v1044 = vpop.xlane.xlu0 %1043
        %v1045 = vsel %vm931, %v1035, 0.0
        %1046 = vadd.xlane.f32.xlu0 %v1045
        %v1047 = vpop.xlane.xlu0 %1046
        %v1048 = vrcp.pop %v1038
        %v1049 = vrcp.pop %v1041
        %v1050 = vrcp.pop %v1044
        %v1051 = vrcp.pop %v1047
        %v1052 = vmul.f32 %v1029, %v1048
        %v1053 = vmul.f32 %v1031, %v1049
        %v1054 = vmul.f32 %v1033, %v1050
        %v1055 = vmul.f32 %v1035, %v1051
        %v1056 = vpack.c.bf16 %v1052, %v1052
        %v1057 = vpack.c.bf16 %v1053, %v1053
        %v1058 = vpack.c.bf16 %v1054, %v1054
        %v1059 = vpack.c.bf16 %v1055, %v1055
        %v1061 = vsel %vm931, %v1056, 0
        %vm1063 = vcmask 1043456
        %v1065 = vsel %vm1063, %v927, 0
        %1067 = vmatpush.bf16.msra.mxu0 0
        %1068 = vmatpush.bf16.msra.mxu0 0
        %1069 = vmatpush.bf16.msra.mxu0 0
        %1070 = vmatpush.bf16.msra.mxu0 0
        %1071 = vmatpush.bf16.msra.mxu0 0
        %1072 = vmatpush.bf16.msra.mxu0 0
        %1073 = vmatpush.bf16.msra.mxu0 0
        %1074 = vmatpush.bf16.msra.mxu0 %v1065
        %1075 = vmatmul.bf16.gmra.mxu0 %v1061
        %v1076 = vpop.f32.mrf.mxu0
        %v1077 = vadd.f32 0.0, %v1076
        %v1078 = vpop.f32.mrf.mxu0
        %1079 = vdwg.mxu0
        %v1081 = vsel %vm931, %v1057, 0
        %v1084 = vsel %vm1063, %v928, 0
        %1086 = vmatpush.bf16.msra.mxu0 0
        %1087 = vmatpush.bf16.msra.mxu0 0
        %1088 = vmatpush.bf16.msra.mxu0 0
        %1089 = vmatpush.bf16.msra.mxu0 0
        %1090 = vmatpush.bf16.msra.mxu0 0
        %1091 = vmatpush.bf16.msra.mxu0 0
        %1092 = vmatpush.bf16.msra.mxu0 0
        %1093 = vmatpush.bf16.msra.mxu0 %v1084
        %1094 = vmatmul.bf16.gmra.mxu0 %v1081
        %v1095 = vpop.f32.mrf.mxu0
        %v1096 = vadd.f32 0.0, %v1095
        %v1097 = vpop.f32.mrf.mxu0
        %1098 = vdwg.mxu0
        %v1100 = vsel %vm931, %v1058, 0
        %v1103 = vsel %vm1063, %v929, 0
        %1105 = vmatpush.bf16.msra.mxu0 0
        %1106 = vmatpush.bf16.msra.mxu0 0
        %1107 = vmatpush.bf16.msra.mxu0 0
        %1108 = vmatpush.bf16.msra.mxu0 0
        %1109 = vmatpush.bf16.msra.mxu0 0
        %1110 = vmatpush.bf16.msra.mxu0 0
        %1111 = vmatpush.bf16.msra.mxu0 0
        %1112 = vmatpush.bf16.msra.mxu0 %v1103
        %1113 = vmatmul.bf16.gmra.mxu0 %v1100
        %v1114 = vpop.f32.mrf.mxu0
        %v1115 = vadd.f32 0.0, %v1114
        %v1116 = vpop.f32.mrf.mxu0
        %1117 = vdwg.mxu0
        %v1119 = vsel %vm931, %v1059, 0
        %v1122 = vsel %vm1063, %v930, 0
        %1124 = vmatpush.bf16.msra.mxu0 0
        %1125 = vmatpush.bf16.msra.mxu0 0
        %1126 = vmatpush.bf16.msra.mxu0 0
        %1127 = vmatpush.bf16.msra.mxu0 0
        %1128 = vmatpush.bf16.msra.mxu0 0
        %1129 = vmatpush.bf16.msra.mxu0 0
        %1130 = vmatpush.bf16.msra.mxu0 0
        %1131 = vmatpush.bf16.msra.mxu0 %v1122
        %1132 = vmatmul.bf16.gmra.mxu0 %v1119
        %v1133 = vpop.f32.mrf.mxu0
        %v1134 = vadd.f32 0.0, %v1133
        %v1135 = vpop.f32.mrf.mxu0
        %1136 = vdwg.mxu0
        %v1137 = vpack.c.bf16 %v1096, %v1077
        %v1138 = vpack.c.bf16 %v1134, %v1115
        %v1139 = vld [vmem:[%s727] sm:$0xf]
        %s1140 = scalar_lea.vmem %s700, 16
        %v1141 = vld [vmem:[%s1140] sm:$0xf]
        %v1142 = vld [vmem:[%s1140 + $0x4] sm:$0xf]
        %v1143 = vld [vmem:[%s1140 + $0x8] sm:$0xf]
        %v1144 = vld [vmem:[%s1140 + $0xc] sm:$0xf]
        %s1145 = scalar_lea.vmem %s704, 1
        %v1146 = vld [vmem:[%s1145] sm:$0x1]
        %v1148 = vperm.slane %v1146, 0
        %v1154 = vunpack.c.l.b16 %v1141
        %v1155 = vunpack.c.l.b16 %v1142
        %v1156 = vunpack.c.l.b16 %v1143
        %v1157 = vunpack.c.l.b16 %v1144
        %v1158 = vpack.c.b16 %v1155, %v1154
        %v1159 = vpack.c.b16 %v1157, %v1156
        %1162 = vmatpush.bf16.msra.mxu0 0
        %1163 = vmatpush.bf16.msra.mxu0 0
        %1164 = vmatpush.bf16.msra.mxu0 0
        %1165 = vmatpush.bf16.msra.mxu0 0
        %1166 = vmatpush.bf16.msra.mxu0 0
        %1167 = vmatpush.bf16.msra.mxu0 0
        %1168 = vmatpush.bf16.msra.mxu0 %v1159
        %1169 = vmatpush.bf16.msra.mxu0 %v1158
        %1170 = vmatmul.bf16.gmra.mxu0 %v811
        %v1171 = vpop.f32.mrf.mxu0
        %v1172 = vadd.f32 %v1148, %v1171
        %v1173 = vpop.f32.mrf.mxu0
        %v1174 = vadd.f32 %v1148, %v1173
        %1175 = vmatmul.bf16.gmra.mxu0 %v814
        %v1176 = vpop.f32.mrf.mxu0
        %v1177 = vadd.f32 %v1148, %v1176
        %v1178 = vpop.f32.mrf.mxu0
        %v1179 = vadd.f32 %v1148, %v1178
        %1180 = vdwg.mxu0
        %s1181 = scalar_lea.vmem %s709, 16
        %v1182 = vld [vmem:[%s1181] sm:$0xf]
        %v1183 = vld [vmem:[%s1181 + $0x4] sm:$0xf]
        %v1184 = vld [vmem:[%s1181 + $0x8] sm:$0xf]
        %v1185 = vld [vmem:[%s1181 + $0xc] sm:$0xf]
        %s1186 = scalar_lea.vmem %s713, 1
        %v1187 = vld [vmem:[%s1186] sm:$0x1]
        %v1189 = vperm.slane %v1187, 0
        %v1195 = vunpack.c.l.b16 %v1182
        %v1196 = vunpack.c.l.b16 %v1183
        %v1197 = vunpack.c.l.b16 %v1184
        %v1198 = vunpack.c.l.b16 %v1185
        %v1199 = vpack.c.b16 %v1196, %v1195
        %v1200 = vpack.c.b16 %v1198, %v1197
        %1203 = vmatpush.bf16.msra.mxu0 0
        %1204 = vmatpush.bf16.msra.mxu0 0
        %1205 = vmatpush.bf16.msra.mxu0 0
        %1206 = vmatpush.bf16.msra.mxu0 0
        %1207 = vmatpush.bf16.msra.mxu0 0
        %1208 = vmatpush.bf16.msra.mxu0 0
        %1209 = vmatpush.bf16.msra.mxu0 %v1200
        %1210 = vmatpush.bf16.msra.mxu0 %v1199
        %1211 = vmatmul.bf16.gmra.mxu0 %v856
        %v1212 = vpop.f32.mrf.mxu0
        %v1213 = vadd.f32 %v1189, %v1212
        %v1214 = vpop.f32.mrf.mxu0
        %v1215 = vadd.f32 %v1189, %v1214
        %1216 = vmatmul.bf16.gmra.mxu0 %v859
        %v1217 = vpop.f32.mrf.mxu0
        %v1218 = vadd.f32 %v1189, %v1217
        %v1219 = vpop.f32.mrf.mxu0
        %v1220 = vadd.f32 %v1189, %v1219
        %1221 = vdwg.mxu0
        %s1222 = scalar_lea.vmem %s718, 16
        %v1223 = vld [vmem:[%s1222] sm:$0xf]
        %v1224 = vld [vmem:[%s1222 + $0x4] sm:$0xf]
        %v1225 = vld [vmem:[%s1222 + $0x8] sm:$0xf]
        %v1226 = vld [vmem:[%s1222 + $0xc] sm:$0xf]
        %s1227 = scalar_lea.vmem %s722, 1
        %v1228 = vld [vmem:[%s1227] sm:$0x1]
        %v1230 = vperm.slane %v1228, 0
        %v1236 = vunpack.c.l.b16 %v1223
        %v1237 = vunpack.c.l.b16 %v1224
        %v1238 = vunpack.c.l.b16 %v1225
        %v1239 = vunpack.c.l.b16 %v1226
        %v1240 = vpack.c.b16 %v1237, %v1236
        %v1241 = vpack.c.b16 %v1239, %v1238
        %1244 = vmatpush.bf16.msra.mxu0 0
        %1245 = vmatpush.bf16.msra.mxu0 0
        %1246 = vmatpush.bf16.msra.mxu0 0
        %1247 = vmatpush.bf16.msra.mxu0 0
        %1248 = vmatpush.bf16.msra.mxu0 0
        %1249 = vmatpush.bf16.msra.mxu0 0
        %1250 = vmatpush.bf16.msra.mxu0 %v1241
        %1251 = vmatpush.bf16.msra.mxu0 %v1240
        %1252 = vmatmul.bf16.gmra.mxu0 %v856
        %v1253 = vpop.f32.mrf.mxu0
        %v1254 = vadd.f32 %v1230, %v1253
        %v1255 = vpop.f32.mrf.mxu0
        %v1256 = vadd.f32 %v1230, %v1255
        %1257 = vmatmul.bf16.gmra.mxu0 %v859
        %v1258 = vpop.f32.mrf.mxu0
        %v1259 = vadd.f32 %v1230, %v1258
        %v1260 = vpop.f32.mrf.mxu0
        %v1261 = vadd.f32 %v1230, %v1260
        %1262 = vdwg.mxu0
        %v1263 = vpack.c.bf16 %v1172, %v1172
        %v1264 = vpack.c.bf16 %v1174, %v1174
        %v1265 = vpack.c.bf16 %v1177, %v1177
        %v1266 = vpack.c.bf16 %v1179, %v1179
        %v1267 = vpack.c.bf16 %v1213, %v1213
        %v1268 = vpack.c.bf16 %v1215, %v1215
        %v1269 = vpack.c.bf16 %v1218, %v1218
        %v1270 = vpack.c.bf16 %v1220, %v1220
        %v1271 = vpack.c.bf16 %v1254, %v1254
        %v1272 = vpack.c.bf16 %v1256, %v1256
        %v1273 = vpack.c.bf16 %v1259, %v1259
        %v1274 = vpack.c.bf16 %v1261, %v1261
        %v1276 = vsel %vm931, %v1263, 0
        %v1279 = vsel %vm931, %v1267, 0
        %1281 = vmatpush.bf16.xpose.msra.mxu0 0
        %1282 = vmatpush.bf16.xpose.msra.mxu0 0
        %1283 = vmatpush.bf16.xpose.msra.mxu0 0
        %1284 = vmatpush.bf16.xpose.msra.mxu0 0
        %1285 = vmatpush.bf16.xpose.msra.mxu0 0
        %1286 = vmatpush.bf16.xpose.msra.mxu0 0
        %1287 = vmatpush.bf16.xpose.msra.mxu0 0
        %1288 = vmatpush.bf16.xpose.msra.mxu0 %v1279
        %1289 = vmatmul.bf16.gmra.mxu0 %v1276
        %v1290 = vpop.f32.mrf.mxu0
        %v1291 = vadd.f32 0.0, %v1290
        %v1292 = vpop.f32.mrf.mxu0
        %1293 = vdwg.mxu0
        %v1295 = vsel %vm931, %v1264, 0
        %v1298 = vsel %vm931, %v1268, 0
        %1300 = vmatpush.bf16.xpose.msra.mxu0 0
        %1301 = vmatpush.bf16.xpose.msra.mxu0 0
        %1302 = vmatpush.bf16.xpose.msra.mxu0 0
        %1303 = vmatpush.bf16.xpose.msra.mxu0 0
        %1304 = vmatpush.bf16.xpose.msra.mxu0 0
        %1305 = vmatpush.bf16.xpose.msra.mxu0 0
        %1306 = vmatpush.bf16.xpose.msra.mxu0 0
        %1307 = vmatpush.bf16.xpose.msra.mxu0 %v1298
        %1308 = vmatmul.bf16.gmra.mxu0 %v1295
        %v1309 = vpop.f32.mrf.mxu0
        %v1310 = vadd.f32 0.0, %v1309
        %v1311 = vpop.f32.mrf.mxu0
        %1312 = vdwg.mxu0
        %v1314 = vsel %vm931, %v1265, 0
        %v1317 = vsel %vm931, %v1269, 0
        %1319 = vmatpush.bf16.xpose.msra.mxu0 0
        %1320 = vmatpush.bf16.xpose.msra.mxu0 0
        %1321 = vmatpush.bf16.xpose.msra.mxu0 0
        %1322 = vmatpush.bf16.xpose.msra.mxu0 0
        %1323 = vmatpush.bf16.xpose.msra.mxu0 0
        %1324 = vmatpush.bf16.xpose.msra.mxu0 0
        %1325 = vmatpush.bf16.xpose.msra.mxu0 0
        %1326 = vmatpush.bf16.xpose.msra.mxu0 %v1317
        %1327 = vmatmul.bf16.gmra.mxu0 %v1314
        %v1328 = vpop.f32.mrf.mxu0
        %v1329 = vadd.f32 0.0, %v1328
        %v1330 = vpop.f32.mrf.mxu0
        %1331 = vdwg.mxu0
        %v1333 = vsel %vm931, %v1266, 0
        %v1336 = vsel %vm931, %v1270, 0
        %1338 = vmatpush.bf16.xpose.msra.mxu0 0
        %1339 = vmatpush.bf16.xpose.msra.mxu0 0
        %1340 = vmatpush.bf16.xpose.msra.mxu0 0
        %1341 = vmatpush.bf16.xpose.msra.mxu0 0
        %1342 = vmatpush.bf16.xpose.msra.mxu0 0
        %1343 = vmatpush.bf16.xpose.msra.mxu0 0
        %1344 = vmatpush.bf16.xpose.msra.mxu0 0
        %1345 = vmatpush.bf16.xpose.msra.mxu0 %v1336
        %1346 = vmatmul.bf16.gmra.mxu0 %v1333
        %v1347 = vpop.f32.mrf.mxu0
        %v1348 = vadd.f32 0.0, %v1347
        %v1349 = vpop.f32.mrf.mxu0
        %1350 = vdwg.mxu0
        %v1351 = vmul.f32 %v1291, 0.35355338
        %v1352 = vmul.f32 %v1310, 0.35355338
        %v1353 = vmul.f32 %v1329, 0.35355338
        %v1354 = vmul.f32 %v1348, 0.35355338
        %v1355 = vsel %vm931, %v1351, -inf
        %1356 = vmax.xlane.f32.xlu0 %v1355
        %v1357 = vpop.xlane.xlu0 %1356
        %v1358 = vsel %vm931, %v1352, -inf
        %1359 = vmax.xlane.f32.xlu0 %v1358
        %v1360 = vpop.xlane.xlu0 %1359
        %v1361 = vsel %vm931, %v1353, -inf
        %1362 = vmax.xlane.f32.xlu0 %v1361
        %v1363 = vpop.xlane.xlu0 %1362
        %v1364 = vsel %vm931, %v1354, -inf
        %1365 = vmax.xlane.f32.xlu0 %v1364
        %v1366 = vpop.xlane.xlu0 %1365
        %v1367 = vsub.f32 %v1351, %v1357
        %v1368 = vsub.f32 %v1352, %v1360
        %v1369 = vsub.f32 %v1353, %v1363
        %v1370 = vsub.f32 %v1354, %v1366
        %v1371 = vmul.f32 %v1367, 1.442695
        %v1372 = vpow.pop %v1371
        %v1373 = vmul.f32 %v1368, 1.442695
        %v1374 = vpow.pop %v1373
        %v1375 = vmul.f32 %v1369, 1.442695
        %v1376 = vpow.pop %v1375
        %v1377 = vmul.f32 %v1370, 1.442695
        %v1378 = vpow.pop %v1377
        %v1379 = vsel %vm931, %v1372, 0.0
        %1380 = vadd.xlane.f32.xlu0 %v1379
        %v1381 = vpop.xlane.xlu0 %1380
        %v1382 = vsel %vm931, %v1374, 0.0
        %1383 = vadd.xlane.f32.xlu0 %v1382
        %v1384 = vpop.xlane.xlu0 %1383
        %v1385 = vsel %vm931, %v1376, 0.0
        %1386 = vadd.xlane.f32.xlu0 %v1385
        %v1387 = vpop.xlane.xlu0 %1386
        %v1388 = vsel %vm931, %v1378, 0.0
        %1389 = vadd.xlane.f32.xlu0 %v1388
        %v1390 = vpop.xlane.xlu0 %1389
        %v1391 = vrcp.pop %v1381
        %v1392 = vrcp.pop %v1384
        %v1393 = vrcp.pop %v1387
        %v1394 = vrcp.pop %v1390
        %v1395 = vmul.f32 %v1372, %v1391
        %v1396 = vmul.f32 %v1374, %v1392
        %v1397 = vmul.f32 %v1376, %v1393
        %v1398 = vmul.f32 %v1378, %v1394
        %v1399 = vpack.c.bf16 %v1395, %v1395
        %v1400 = vpack.c.bf16 %v1396, %v1396
        %v1401 = vpack.c.bf16 %v1397, %v1397
        %v1402 = vpack.c.bf16 %v1398, %v1398
        %v1404 = vsel %vm931, %v1399, 0
        %v1407 = vsel %vm1063, %v1271, 0
        %1409 = vmatpush.bf16.msra.mxu0 0
        %1410 = vmatpush.bf16.msra.mxu0 0
        %1411 = vmatpush.bf16.msra.mxu0 0
        %1412 = vmatpush.bf16.msra.mxu0 0
        %1413 = vmatpush.bf16.msra.mxu0 0
        %1414 = vmatpush.bf16.msra.mxu0 0
        %1415 = vmatpush.bf16.msra.mxu0 0
        %1416 = vmatpush.bf16.msra.mxu0 %v1407
        %1417 = vmatmul.bf16.gmra.mxu0 %v1404
        %v1418 = vpop.f32.mrf.mxu0
        %v1419 = vadd.f32 0.0, %v1418
        %v1420 = vpop.f32.mrf.mxu0
        %1421 = vdwg.mxu0
        %v1423 = vsel %vm931, %v1400, 0
        %v1426 = vsel %vm1063, %v1272, 0
        %1428 = vmatpush.bf16.msra.mxu0 0
        %1429 = vmatpush.bf16.msra.mxu0 0
        %1430 = vmatpush.bf16.msra.mxu0 0
        %1431 = vmatpush.bf16.msra.mxu0 0
        %1432 = vmatpush.bf16.msra.mxu0 0
        %1433 = vmatpush.bf16.msra.mxu0 0
        %1434 = vmatpush.bf16.msra.mxu0 0
        %1435 = vmatpush.bf16.msra.mxu0 %v1426
        %1436 = vmatmul.bf16.gmra.mxu0 %v1423
        %v1437 = vpop.f32.mrf.mxu0
        %v1438 = vadd.f32 0.0, %v1437
        %v1439 = vpop.f32.mrf.mxu0
        %1440 = vdwg.mxu0
        %v1442 = vsel %vm931, %v1401, 0
        %v1445 = vsel %vm1063, %v1273, 0
        %1447 = vmatpush.bf16.msra.mxu0 0
        %1448 = vmatpush.bf16.msra.mxu0 0
        %1449 = vmatpush.bf16.msra.mxu0 0
        %1450 = vmatpush.bf16.msra.mxu0 0
        %1451 = vmatpush.bf16.msra.mxu0 0
        %1452 = vmatpush.bf16.msra.mxu0 0
        %1453 = vmatpush.bf16.msra.mxu0 0
        %1454 = vmatpush.bf16.msra.mxu0 %v1445
        %1455 = vmatmul.bf16.gmra.mxu0 %v1442
        %v1456 = vpop.f32.mrf.mxu0
        %v1457 = vadd.f32 0.0, %v1456
        %v1458 = vpop.f32.mrf.mxu0
        %1459 = vdwg.mxu0
        %v1461 = vsel %vm931, %v1402, 0
        %v1464 = vsel %vm1063, %v1274, 0
        %1466 = vmatpush.bf16.msra.mxu0 0
        %1467 = vmatpush.bf16.msra.mxu0 0
        %1468 = vmatpush.bf16.msra.mxu0 0
        %1469 = vmatpush.bf16.msra.mxu0 0
        %1470 = vmatpush.bf16.msra.mxu0 0
        %1471 = vmatpush.bf16.msra.mxu0 0
        %1472 = vmatpush.bf16.msra.mxu0 0
        %1473 = vmatpush.bf16.msra.mxu0 %v1464
        %1474 = vmatmul.bf16.gmra.mxu0 %v1461
        %v1475 = vpop.f32.mrf.mxu0
        %v1476 = vadd.f32 0.0, %v1475
        %v1477 = vpop.f32.mrf.mxu0
        %1478 = vdwg.mxu0
        %v1479 = vpack.c.bf16 %v1438, %v1419
        %v1480 = vpack.c.bf16 %v1476, %v1457
        %s1481 = scalar_lea.vmem %s727, 4
        %v1482 = vld [vmem:[%s1481] sm:$0xf]
        %v1484 = vsel %vm931, %v1479, 0
        %v1487 = vsel %vm931, %v1480, 0
        %v1490 = vsel %vm1063, %v1482, 0
        %1492 = vmatpush.bf16.msra.mxu0 0
        %1493 = vmatpush.bf16.msra.mxu0 0
        %1494 = vmatpush.bf16.msra.mxu0 0
        %1495 = vmatpush.bf16.msra.mxu0 0
        %1496 = vmatpush.bf16.msra.mxu0 0
        %1497 = vmatpush.bf16.msra.mxu0 0
        %1498 = vmatpush.bf16.msra.mxu0 0
        %1499 = vmatpush.bf16.msra.mxu0 %v1490
        %1500 = vmatmul.bf16.gmra.mxu0 %v1484
        %v1501 = vpop.f32.mrf.mxu0
        %v1502 = vadd.f32 0.0, %v1501
        %v1503 = vpop.f32.mrf.mxu0
        %v1504 = vadd.f32 0.0, %v1503
        %1505 = vmatmul.bf16.gmra.mxu0 %v1487
        %v1506 = vpop.f32.mrf.mxu0
        %v1507 = vadd.f32 0.0, %v1506
        %v1508 = vpop.f32.mrf.mxu0
        %v1509 = vadd.f32 0.0, %v1508
        %1510 = vdwg.mxu0
        %v1512 = vsel %vm931, %v1137, 0
        %v1515 = vsel %vm931, %v1138, 0
        %v1518 = vsel %vm1063, %v1139, 0
        %1520 = vmatpush.bf16.msra.mxu0 0
        %1521 = vmatpush.bf16.msra.mxu0 0
        %1522 = vmatpush.bf16.msra.mxu0 0
        %1523 = vmatpush.bf16.msra.mxu0 0
        %1524 = vmatpush.bf16.msra.mxu0 0
        %1525 = vmatpush.bf16.msra.mxu0 0
        %1526 = vmatpush.bf16.msra.mxu0 0
        %1527 = vmatpush.bf16.msra.mxu0 %v1518
        %1528 = vmatmul.bf16.gmra.mxu0 %v1512
        %v1529 = vpop.f32.mrf.mxu0
        %v1530 = vadd.f32 %v1502, %v1529
        %v1531 = vpop.f32.mrf.mxu0
        %v1532 = vadd.f32 %v1504, %v1531
        %1533 = vmatmul.bf16.gmra.mxu0 %v1515
        %v1534 = vpop.f32.mrf.mxu0
        %v1535 = vadd.f32 %v1507, %v1534
        %v1536 = vpop.f32.mrf.mxu0
        %v1537 = vadd.f32 %v1509, %v1536
        %1538 = vdwg.mxu0
        %s1539 = scalar_lea.vmem %s700, 32
        %v1540 = vld [vmem:[%s1539] sm:$0xf]
        %v1541 = vld [vmem:[%s1539 + $0x4] sm:$0xf]
        %v1542 = vld [vmem:[%s1539 + $0x8] sm:$0xf]
        %v1543 = vld [vmem:[%s1539 + $0xc] sm:$0xf]
        %s1544 = scalar_lea.vmem %s704, 2
        %v1545 = vld [vmem:[%s1544] sm:$0x1]
        %v1547 = vperm.slane %v1545, 0
        %v1553 = vunpack.c.l.b16 %v1540
        %v1554 = vunpack.c.l.b16 %v1541
        %v1555 = vunpack.c.l.b16 %v1542
        %v1556 = vunpack.c.l.b16 %v1543
        %v1557 = vpack.c.b16 %v1554, %v1553
        %v1558 = vpack.c.b16 %v1556, %v1555
        %1561 = vmatpush.bf16.msra.mxu0 0
        %1562 = vmatpush.bf16.msra.mxu0 0
        %1563 = vmatpush.bf16.msra.mxu0 0
        %1564 = vmatpush.bf16.msra.mxu0 0
        %1565 = vmatpush.bf16.msra.mxu0 0
        %1566 = vmatpush.bf16.msra.mxu0 0
        %1567 = vmatpush.bf16.msra.mxu0 %v1558
        %1568 = vmatpush.bf16.msra.mxu0 %v1557
        %1569 = vmatmul.bf16.gmra.mxu0 %v811
        %v1570 = vpop.f32.mrf.mxu0
        %v1571 = vadd.f32 %v1547, %v1570
        %v1572 = vpop.f32.mrf.mxu0
        %v1573 = vadd.f32 %v1547, %v1572
        %1574 = vmatmul.bf16.gmra.mxu0 %v814
        %v1575 = vpop.f32.mrf.mxu0
        %v1576 = vadd.f32 %v1547, %v1575
        %v1577 = vpop.f32.mrf.mxu0
        %v1578 = vadd.f32 %v1547, %v1577
        %1579 = vdwg.mxu0
        %s1580 = scalar_lea.vmem %s709, 32
        %v1581 = vld [vmem:[%s1580] sm:$0xf]
        %v1582 = vld [vmem:[%s1580 + $0x4] sm:$0xf]
        %v1583 = vld [vmem:[%s1580 + $0x8] sm:$0xf]
        %v1584 = vld [vmem:[%s1580 + $0xc] sm:$0xf]
        %s1585 = scalar_lea.vmem %s713, 2
        %v1586 = vld [vmem:[%s1585] sm:$0x1]
        %v1588 = vperm.slane %v1586, 0
        %v1594 = vunpack.c.l.b16 %v1581
        %v1595 = vunpack.c.l.b16 %v1582
        %v1596 = vunpack.c.l.b16 %v1583
        %v1597 = vunpack.c.l.b16 %v1584
        %v1598 = vpack.c.b16 %v1595, %v1594
        %v1599 = vpack.c.b16 %v1597, %v1596
        %1602 = vmatpush.bf16.msra.mxu0 0
        %1603 = vmatpush.bf16.msra.mxu0 0
        %1604 = vmatpush.bf16.msra.mxu0 0
        %1605 = vmatpush.bf16.msra.mxu0 0
        %1606 = vmatpush.bf16.msra.mxu0 0
        %1607 = vmatpush.bf16.msra.mxu0 0
        %1608 = vmatpush.bf16.msra.mxu0 %v1599
        %1609 = vmatpush.bf16.msra.mxu0 %v1598
        %1610 = vmatmul.bf16.gmra.mxu0 %v856
        %v1611 = vpop.f32.mrf.mxu0
        %v1612 = vadd.f32 %v1588, %v1611
        %v1613 = vpop.f32.mrf.mxu0
        %v1614 = vadd.f32 %v1588, %v1613
        %1615 = vmatmul.bf16.gmra.mxu0 %v859
        %v1616 = vpop.f32.mrf.mxu0
        %v1617 = vadd.f32 %v1588, %v1616
        %v1618 = vpop.f32.mrf.mxu0
        %v1619 = vadd.f32 %v1588, %v1618
        %1620 = vdwg.mxu0
        %s1621 = scalar_lea.vmem %s718, 32
        %v1622 = vld [vmem:[%s1621] sm:$0xf]
        %v1623 = vld [vmem:[%s1621 + $0x4] sm:$0xf]
        %v1624 = vld [vmem:[%s1621 + $0x8] sm:$0xf]
        %v1625 = vld [vmem:[%s1621 + $0xc] sm:$0xf]
        %s1626 = scalar_lea.vmem %s722, 2
        %v1627 = vld [vmem:[%s1626] sm:$0x1]
        %v1629 = vperm.slane %v1627, 0
        %v1635 = vunpack.c.l.b16 %v1622
        %v1636 = vunpack.c.l.b16 %v1623
        %v1637 = vunpack.c.l.b16 %v1624
        %v1638 = vunpack.c.l.b16 %v1625
        %v1639 = vpack.c.b16 %v1636, %v1635
        %v1640 = vpack.c.b16 %v1638, %v1637
        %1643 = vmatpush.bf16.msra.mxu0 0
        %1644 = vmatpush.bf16.msra.mxu0 0
        %1645 = vmatpush.bf16.msra.mxu0 0
        %1646 = vmatpush.bf16.msra.mxu0 0
        %1647 = vmatpush.bf16.msra.mxu0 0
        %1648 = vmatpush.bf16.msra.mxu0 0
        %1649 = vmatpush.bf16.msra.mxu0 %v1640
        %1650 = vmatpush.bf16.msra.mxu0 %v1639
        %1651 = vmatmul.bf16.gmra.mxu0 %v856
        %v1652 = vpop.f32.mrf.mxu0
        %v1653 = vadd.f32 %v1629, %v1652
        %v1654 = vpop.f32.mrf.mxu0
        %v1655 = vadd.f32 %v1629, %v1654
        %1656 = vmatmul.bf16.gmra.mxu0 %v859
        %v1657 = vpop.f32.mrf.mxu0
        %v1658 = vadd.f32 %v1629, %v1657
        %v1659 = vpop.f32.mrf.mxu0
        %v1660 = vadd.f32 %v1629, %v1659
        %1661 = vdwg.mxu0
        %v1662 = vpack.c.bf16 %v1571, %v1571
        %v1663 = vpack.c.bf16 %v1573, %v1573
        %v1664 = vpack.c.bf16 %v1576, %v1576
        %v1665 = vpack.c.bf16 %v1578, %v1578
        %v1666 = vpack.c.bf16 %v1612, %v1612
        %v1667 = vpack.c.bf16 %v1614, %v1614
        %v1668 = vpack.c.bf16 %v1617, %v1617
        %v1669 = vpack.c.bf16 %v1619, %v1619
        %v1670 = vpack.c.bf16 %v1653, %v1653
        %v1671 = vpack.c.bf16 %v1655, %v1655
        %v1672 = vpack.c.bf16 %v1658, %v1658
        %v1673 = vpack.c.bf16 %v1660, %v1660
        %v1675 = vsel %vm931, %v1662, 0
        %v1678 = vsel %vm931, %v1666, 0
        %1680 = vmatpush.bf16.xpose.msra.mxu0 0
        %1681 = vmatpush.bf16.xpose.msra.mxu0 0
        %1682 = vmatpush.bf16.xpose.msra.mxu0 0
        %1683 = vmatpush.bf16.xpose.msra.mxu0 0
        %1684 = vmatpush.bf16.xpose.msra.mxu0 0
        %1685 = vmatpush.bf16.xpose.msra.mxu0 0
        %1686 = vmatpush.bf16.xpose.msra.mxu0 0
        %1687 = vmatpush.bf16.xpose.msra.mxu0 %v1678
        %1688 = vmatmul.bf16.gmra.mxu0 %v1675
        %v1689 = vpop.f32.mrf.mxu0
        %v1690 = vadd.f32 0.0, %v1689
        %v1691 = vpop.f32.mrf.mxu0
        %1692 = vdwg.mxu0
        %v1694 = vsel %vm931, %v1663, 0
        %v1697 = vsel %vm931, %v1667, 0
        %1699 = vmatpush.bf16.xpose.msra.mxu0 0
        %1700 = vmatpush.bf16.xpose.msra.mxu0 0
        %1701 = vmatpush.bf16.xpose.msra.mxu0 0
        %1702 = vmatpush.bf16.xpose.msra.mxu0 0
        %1703 = vmatpush.bf16.xpose.msra.mxu0 0
        %1704 = vmatpush.bf16.xpose.msra.mxu0 0
        %1705 = vmatpush.bf16.xpose.msra.mxu0 0
        %1706 = vmatpush.bf16.xpose.msra.mxu0 %v1697
        %1707 = vmatmul.bf16.gmra.mxu0 %v1694
        %v1708 = vpop.f32.mrf.mxu0
        %v1709 = vadd.f32 0.0, %v1708
        %v1710 = vpop.f32.mrf.mxu0
        %1711 = vdwg.mxu0
        %v1713 = vsel %vm931, %v1664, 0
        %v1716 = vsel %vm931, %v1668, 0
        %1718 = vmatpush.bf16.xpose.msra.mxu0 0
        %1719 = vmatpush.bf16.xpose.msra.mxu0 0
        %1720 = vmatpush.bf16.xpose.msra.mxu0 0
        %1721 = vmatpush.bf16.xpose.msra.mxu0 0
        %1722 = vmatpush.bf16.xpose.msra.mxu0 0
        %1723 = vmatpush.bf16.xpose.msra.mxu0 0
        %1724 = vmatpush.bf16.xpose.msra.mxu0 0
        %1725 = vmatpush.bf16.xpose.msra.mxu0 %v1716
        %1726 = vmatmul.bf16.gmra.mxu0 %v1713
        %v1727 = vpop.f32.mrf.mxu0
        %v1728 = vadd.f32 0.0, %v1727
        %v1729 = vpop.f32.mrf.mxu0
        %1730 = vdwg.mxu0
        %v1732 = vsel %vm931, %v1665, 0
        %v1735 = vsel %vm931, %v1669, 0
        %1737 = vmatpush.bf16.xpose.msra.mxu0 0
        %1738 = vmatpush.bf16.xpose.msra.mxu0 0
        %1739 = vmatpush.bf16.xpose.msra.mxu0 0
        %1740 = vmatpush.bf16.xpose.msra.mxu0 0
        %1741 = vmatpush.bf16.xpose.msra.mxu0 0
        %1742 = vmatpush.bf16.xpose.msra.mxu0 0
        %1743 = vmatpush.bf16.xpose.msra.mxu0 0
        %1744 = vmatpush.bf16.xpose.msra.mxu0 %v1735
        %1745 = vmatmul.bf16.gmra.mxu0 %v1732
        %v1746 = vpop.f32.mrf.mxu0
        %v1747 = vadd.f32 0.0, %v1746
        %v1748 = vpop.f32.mrf.mxu0
        %1749 = vdwg.mxu0
        %v1750 = vmul.f32 %v1690, 0.35355338
        %v1751 = vmul.f32 %v1709, 0.35355338
        %v1752 = vmul.f32 %v1728, 0.35355338
        %v1753 = vmul.f32 %v1747, 0.35355338
        %v1754 = vsel %vm931, %v1750, -inf
        %1755 = vmax.xlane.f32.xlu0 %v1754
        %v1756 = vpop.xlane.xlu0 %1755
        %v1757 = vsel %vm931, %v1751, -inf
        %1758 = vmax.xlane.f32.xlu0 %v1757
        %v1759 = vpop.xlane.xlu0 %1758
        %v1760 = vsel %vm931, %v1752, -inf
        %1761 = vmax.xlane.f32.xlu0 %v1760
        %v1762 = vpop.xlane.xlu0 %1761
        %v1763 = vsel %vm931, %v1753, -inf
        %1764 = vmax.xlane.f32.xlu0 %v1763
        %v1765 = vpop.xlane.xlu0 %1764
        %v1766 = vsub.f32 %v1750, %v1756
        %v1767 = vsub.f32 %v1751, %v1759
        %v1768 = vsub.f32 %v1752, %v1762
        %v1769 = vsub.f32 %v1753, %v1765
        %v1770 = vmul.f32 %v1766, 1.442695
        %v1771 = vpow.pop %v1770
        %v1772 = vmul.f32 %v1767, 1.442695
        %v1773 = vpow.pop %v1772
        %v1774 = vmul.f32 %v1768, 1.442695
        %v1775 = vpow.pop %v1774
        %v1776 = vmul.f32 %v1769, 1.442695
        %v1777 = vpow.pop %v1776
        %v1778 = vsel %vm931, %v1771, 0.0
        %1779 = vadd.xlane.f32.xlu0 %v1778
        %v1780 = vpop.xlane.xlu0 %1779
        %v1781 = vsel %vm931, %v1773, 0.0
        %1782 = vadd.xlane.f32.xlu0 %v1781
        %v1783 = vpop.xlane.xlu0 %1782
        %v1784 = vsel %vm931, %v1775, 0.0
        %1785 = vadd.xlane.f32.xlu0 %v1784
        %v1786 = vpop.xlane.xlu0 %1785
        %v1787 = vsel %vm931, %v1777, 0.0
        %1788 = vadd.xlane.f32.xlu0 %v1787
        %v1789 = vpop.xlane.xlu0 %1788
        %v1790 = vrcp.pop %v1780
        %v1791 = vrcp.pop %v1783
        %v1792 = vrcp.pop %v1786
        %v1793 = vrcp.pop %v1789
        %v1794 = vmul.f32 %v1771, %v1790
        %v1795 = vmul.f32 %v1773, %v1791
        %v1796 = vmul.f32 %v1775, %v1792
        %v1797 = vmul.f32 %v1777, %v1793
        %v1798 = vpack.c.bf16 %v1794, %v1794
        %v1799 = vpack.c.bf16 %v1795, %v1795
        %v1800 = vpack.c.bf16 %v1796, %v1796
        %v1801 = vpack.c.bf16 %v1797, %v1797
        %v1803 = vsel %vm931, %v1798, 0
        %v1806 = vsel %vm1063, %v1670, 0
        %1808 = vmatpush.bf16.msra.mxu0 0
        %1809 = vmatpush.bf16.msra.mxu0 0
        %1810 = vmatpush.bf16.msra.mxu0 0
        %1811 = vmatpush.bf16.msra.mxu0 0
        %1812 = vmatpush.bf16.msra.mxu0 0
        %1813 = vmatpush.bf16.msra.mxu0 0
        %1814 = vmatpush.bf16.msra.mxu0 0
        %1815 = vmatpush.bf16.msra.mxu0 %v1806
        %1816 = vmatmul.bf16.gmra.mxu0 %v1803
        %v1817 = vpop.f32.mrf.mxu0
        %v1818 = vadd.f32 0.0, %v1817
        %v1819 = vpop.f32.mrf.mxu0
        %1820 = vdwg.mxu0
        %v1822 = vsel %vm931, %v1799, 0
        %v1825 = vsel %vm1063, %v1671, 0
        %1827 = vmatpush.bf16.msra.mxu0 0
        %1828 = vmatpush.bf16.msra.mxu0 0
        %1829 = vmatpush.bf16.msra.mxu0 0
        %1830 = vmatpush.bf16.msra.mxu0 0
        %1831 = vmatpush.bf16.msra.mxu0 0
        %1832 = vmatpush.bf16.msra.mxu0 0
        %1833 = vmatpush.bf16.msra.mxu0 0
        %1834 = vmatpush.bf16.msra.mxu0 %v1825
        %1835 = vmatmul.bf16.gmra.mxu0 %v1822
        %v1836 = vpop.f32.mrf.mxu0
        %v1837 = vadd.f32 0.0, %v1836
        %v1838 = vpop.f32.mrf.mxu0
        %1839 = vdwg.mxu0
        %v1841 = vsel %vm931, %v1800, 0
        %v1844 = vsel %vm1063, %v1672, 0
        %1846 = vmatpush.bf16.msra.mxu0 0
        %1847 = vmatpush.bf16.msra.mxu0 0
        %1848 = vmatpush.bf16.msra.mxu0 0
        %1849 = vmatpush.bf16.msra.mxu0 0
        %1850 = vmatpush.bf16.msra.mxu0 0
        %1851 = vmatpush.bf16.msra.mxu0 0
        %1852 = vmatpush.bf16.msra.mxu0 0
        %1853 = vmatpush.bf16.msra.mxu0 %v1844
        %1854 = vmatmul.bf16.gmra.mxu0 %v1841
        %v1855 = vpop.f32.mrf.mxu0
        %v1856 = vadd.f32 0.0, %v1855
        %v1857 = vpop.f32.mrf.mxu0
        %1858 = vdwg.mxu0
        %v1860 = vsel %vm931, %v1801, 0
        %v1863 = vsel %vm1063, %v1673, 0
        %1865 = vmatpush.bf16.msra.mxu0 0
        %1866 = vmatpush.bf16.msra.mxu0 0
        %1867 = vmatpush.bf16.msra.mxu0 0
        %1868 = vmatpush.bf16.msra.mxu0 0
        %1869 = vmatpush.bf16.msra.mxu0 0
        %1870 = vmatpush.bf16.msra.mxu0 0
        %1871 = vmatpush.bf16.msra.mxu0 0
        %1872 = vmatpush.bf16.msra.mxu0 %v1863
        %1873 = vmatmul.bf16.gmra.mxu0 %v1860
        %v1874 = vpop.f32.mrf.mxu0
        %v1875 = vadd.f32 0.0, %v1874
        %v1876 = vpop.f32.mrf.mxu0
        %1877 = vdwg.mxu0
        %v1878 = vpack.c.bf16 %v1837, %v1818
        %v1879 = vpack.c.bf16 %v1875, %v1856
        %s1880 = scalar_lea.vmem %s727, 8
        %v1881 = vld [vmem:[%s1880] sm:$0xf]
        %v1883 = vsel %vm931, %v1878, 0
        %v1886 = vsel %vm931, %v1879, 0
        %v1889 = vsel %vm1063, %v1881, 0
        %1891 = vmatpush.bf16.msra.mxu0 0
        %1892 = vmatpush.bf16.msra.mxu0 0
        %1893 = vmatpush.bf16.msra.mxu0 0
        %1894 = vmatpush.bf16.msra.mxu0 0
        %1895 = vmatpush.bf16.msra.mxu0 0
        %1896 = vmatpush.bf16.msra.mxu0 0
        %1897 = vmatpush.bf16.msra.mxu0 0
        %1898 = vmatpush.bf16.msra.mxu0 %v1889
        %1899 = vmatmul.bf16.gmra.mxu0 %v1883
        %v1900 = vpop.f32.mrf.mxu0
        %v1901 = vadd.f32 0.0, %v1900
        %v1902 = vpop.f32.mrf.mxu0
        %v1903 = vadd.f32 0.0, %v1902
        %1904 = vmatmul.bf16.gmra.mxu0 %v1886
        %v1905 = vpop.f32.mrf.mxu0
        %v1906 = vadd.f32 0.0, %v1905
        %v1907 = vpop.f32.mrf.mxu0
        %v1908 = vadd.f32 0.0, %v1907
        %1909 = vdwg.mxu0
        %v1910 = vadd.f32 %v1530, %v1901
        %v1911 = vadd.f32 %v1532, %v1903
        %v1912 = vadd.f32 %v1535, %v1906
        %v1913 = vadd.f32 %v1537, %v1908
        %s1914 = scalar_lea.vmem %s700, 48
        %v1915 = vld [vmem:[%s1914] sm:$0xf]
        %v1916 = vld [vmem:[%s1914 + $0x4] sm:$0xf]
        %v1917 = vld [vmem:[%s1914 + $0x8] sm:$0xf]
        %v1918 = vld [vmem:[%s1914 + $0xc] sm:$0xf]
        %s1919 = scalar_lea.vmem %s704, 3
        %v1920 = vld [vmem:[%s1919] sm:$0x1]
        %v1922 = vperm.slane %v1920, 0
        %v1928 = vunpack.c.l.b16 %v1915
        %v1929 = vunpack.c.l.b16 %v1916
        %v1930 = vunpack.c.l.b16 %v1917
        %v1931 = vunpack.c.l.b16 %v1918
        %v1932 = vpack.c.b16 %v1929, %v1928
        %v1933 = vpack.c.b16 %v1931, %v1930
        %1936 = vmatpush.bf16.msra.mxu0 0
        %1937 = vmatpush.bf16.msra.mxu0 0
        %1938 = vmatpush.bf16.msra.mxu0 0
        %1939 = vmatpush.bf16.msra.mxu0 0
        %1940 = vmatpush.bf16.msra.mxu0 0
        %1941 = vmatpush.bf16.msra.mxu0 0
        %1942 = vmatpush.bf16.msra.mxu0 %v1933
        %1943 = vmatpush.bf16.msra.mxu0 %v1932
        %1944 = vmatmul.bf16.gmra.mxu0 %v811
        %v1945 = vpop.f32.mrf.mxu0
        %v1946 = vadd.f32 %v1922, %v1945
        %v1947 = vpop.f32.mrf.mxu0
        %v1948 = vadd.f32 %v1922, %v1947
        %1949 = vmatmul.bf16.gmra.mxu0 %v814
        %v1950 = vpop.f32.mrf.mxu0
        %v1951 = vadd.f32 %v1922, %v1950
        %v1952 = vpop.f32.mrf.mxu0
        %v1953 = vadd.f32 %v1922, %v1952
        %1954 = vdwg.mxu0
        %s1955 = scalar_lea.vmem %s709, 48
        %v1956 = vld [vmem:[%s1955] sm:$0xf]
        %v1957 = vld [vmem:[%s1955 + $0x4] sm:$0xf]
        %v1958 = vld [vmem:[%s1955 + $0x8] sm:$0xf]
        %v1959 = vld [vmem:[%s1955 + $0xc] sm:$0xf]
        %s1960 = scalar_lea.vmem %s713, 3
        %v1961 = vld [vmem:[%s1960] sm:$0x1]
        %v1963 = vperm.slane %v1961, 0
        %v1969 = vunpack.c.l.b16 %v1956
        %v1970 = vunpack.c.l.b16 %v1957
        %v1971 = vunpack.c.l.b16 %v1958
        %v1972 = vunpack.c.l.b16 %v1959
        %v1973 = vpack.c.b16 %v1970, %v1969
        %v1974 = vpack.c.b16 %v1972, %v1971
        %1977 = vmatpush.bf16.msra.mxu0 0
        %1978 = vmatpush.bf16.msra.mxu0 0
        %1979 = vmatpush.bf16.msra.mxu0 0
        %1980 = vmatpush.bf16.msra.mxu0 0
        %1981 = vmatpush.bf16.msra.mxu0 0
        %1982 = vmatpush.bf16.msra.mxu0 0
        %1983 = vmatpush.bf16.msra.mxu0 %v1974
        %1984 = vmatpush.bf16.msra.mxu0 %v1973
        %1985 = vmatmul.bf16.gmra.mxu0 %v856
        %v1986 = vpop.f32.mrf.mxu0
        %v1987 = vadd.f32 %v1963, %v1986
        %v1988 = vpop.f32.mrf.mxu0
        %v1989 = vadd.f32 %v1963, %v1988
        %1990 = vmatmul.bf16.gmra.mxu0 %v859
        %v1991 = vpop.f32.mrf.mxu0
        %v1992 = vadd.f32 %v1963, %v1991
        %v1993 = vpop.f32.mrf.mxu0
        %v1994 = vadd.f32 %v1963, %v1993
        %1995 = vdwg.mxu0
        %s1996 = scalar_lea.vmem %s718, 48
        %v1997 = vld [vmem:[%s1996] sm:$0xf]
        %v1998 = vld [vmem:[%s1996 + $0x4] sm:$0xf]
        %v1999 = vld [vmem:[%s1996 + $0x8] sm:$0xf]
        %v2000 = vld [vmem:[%s1996 + $0xc] sm:$0xf]
        %s2001 = scalar_lea.vmem %s722, 3
        %v2002 = vld [vmem:[%s2001] sm:$0x1]
        %v2004 = vperm.slane %v2002, 0
        %v2010 = vunpack.c.l.b16 %v1997
        %v2011 = vunpack.c.l.b16 %v1998
        %v2012 = vunpack.c.l.b16 %v1999
        %v2013 = vunpack.c.l.b16 %v2000
        %v2014 = vpack.c.b16 %v2011, %v2010
        %v2015 = vpack.c.b16 %v2013, %v2012
        %2018 = vmatpush.bf16.msra.mxu0 0
        %2019 = vmatpush.bf16.msra.mxu0 0
        %2020 = vmatpush.bf16.msra.mxu0 0
        %2021 = vmatpush.bf16.msra.mxu0 0
        %2022 = vmatpush.bf16.msra.mxu0 0
        %2023 = vmatpush.bf16.msra.mxu0 0
        %2024 = vmatpush.bf16.msra.mxu0 %v2015
        %2025 = vmatpush.bf16.msra.mxu0 %v2014
        %2026 = vmatmul.bf16.gmra.mxu0 %v856
        %v2027 = vpop.f32.mrf.mxu0
        %v2028 = vadd.f32 %v2004, %v2027
        %v2029 = vpop.f32.mrf.mxu0
        %v2030 = vadd.f32 %v2004, %v2029
        %2031 = vmatmul.bf16.gmra.mxu0 %v859
        %v2032 = vpop.f32.mrf.mxu0
        %v2033 = vadd.f32 %v2004, %v2032
        %v2034 = vpop.f32.mrf.mxu0
        %v2035 = vadd.f32 %v2004, %v2034
        %2036 = vdwg.mxu0
        %v2037 = vpack.c.bf16 %v1946, %v1946
        %v2038 = vpack.c.bf16 %v1948, %v1948
        %v2039 = vpack.c.bf16 %v1951, %v1951
        %v2040 = vpack.c.bf16 %v1953, %v1953
        %v2041 = vpack.c.bf16 %v1987, %v1987
        %v2042 = vpack.c.bf16 %v1989, %v1989
        %v2043 = vpack.c.bf16 %v1992, %v1992
        %v2044 = vpack.c.bf16 %v1994, %v1994
        %v2045 = vpack.c.bf16 %v2028, %v2028
        %v2046 = vpack.c.bf16 %v2030, %v2030
        %v2047 = vpack.c.bf16 %v2033, %v2033
        %v2048 = vpack.c.bf16 %v2035, %v2035
        %v2050 = vsel %vm931, %v2037, 0
        %v2053 = vsel %vm931, %v2041, 0
        %2055 = vmatpush.bf16.xpose.msra.mxu0 0
        %2056 = vmatpush.bf16.xpose.msra.mxu0 0
        %2057 = vmatpush.bf16.xpose.msra.mxu0 0
        %2058 = vmatpush.bf16.xpose.msra.mxu0 0
        %2059 = vmatpush.bf16.xpose.msra.mxu0 0
        %2060 = vmatpush.bf16.xpose.msra.mxu0 0
        %2061 = vmatpush.bf16.xpose.msra.mxu0 0
        %2062 = vmatpush.bf16.xpose.msra.mxu0 %v2053
        %2063 = vmatmul.bf16.gmra.mxu0 %v2050
        %v2064 = vpop.f32.mrf.mxu0
        %v2065 = vadd.f32 0.0, %v2064
        %v2066 = vpop.f32.mrf.mxu0
        %2067 = vdwg.mxu0
        %v2069 = vsel %vm931, %v2038, 0
        %v2072 = vsel %vm931, %v2042, 0
        %2074 = vmatpush.bf16.xpose.msra.mxu0 0
        %2075 = vmatpush.bf16.xpose.msra.mxu0 0
        %2076 = vmatpush.bf16.xpose.msra.mxu0 0
        %2077 = vmatpush.bf16.xpose.msra.mxu0 0
        %2078 = vmatpush.bf16.xpose.msra.mxu0 0
        %2079 = vmatpush.bf16.xpose.msra.mxu0 0
        %2080 = vmatpush.bf16.xpose.msra.mxu0 0
        %2081 = vmatpush.bf16.xpose.msra.mxu0 %v2072
        %2082 = vmatmul.bf16.gmra.mxu0 %v2069
        %v2083 = vpop.f32.mrf.mxu0
        %v2084 = vadd.f32 0.0, %v2083
        %v2085 = vpop.f32.mrf.mxu0
        %2086 = vdwg.mxu0
        %v2088 = vsel %vm931, %v2039, 0
        %v2091 = vsel %vm931, %v2043, 0
        %2093 = vmatpush.bf16.xpose.msra.mxu0 0
        %2094 = vmatpush.bf16.xpose.msra.mxu0 0
        %2095 = vmatpush.bf16.xpose.msra.mxu0 0
        %2096 = vmatpush.bf16.xpose.msra.mxu0 0
        %2097 = vmatpush.bf16.xpose.msra.mxu0 0
        %2098 = vmatpush.bf16.xpose.msra.mxu0 0
        %2099 = vmatpush.bf16.xpose.msra.mxu0 0
        %2100 = vmatpush.bf16.xpose.msra.mxu0 %v2091
        %2101 = vmatmul.bf16.gmra.mxu0 %v2088
        %v2102 = vpop.f32.mrf.mxu0
        %v2103 = vadd.f32 0.0, %v2102
        %v2104 = vpop.f32.mrf.mxu0
        %2105 = vdwg.mxu0
        %v2107 = vsel %vm931, %v2040, 0
        %v2110 = vsel %vm931, %v2044, 0
        %2112 = vmatpush.bf16.xpose.msra.mxu0 0
        %2113 = vmatpush.bf16.xpose.msra.mxu0 0
        %2114 = vmatpush.bf16.xpose.msra.mxu0 0
        %2115 = vmatpush.bf16.xpose.msra.mxu0 0
        %2116 = vmatpush.bf16.xpose.msra.mxu0 0
        %2117 = vmatpush.bf16.xpose.msra.mxu0 0
        %2118 = vmatpush.bf16.xpose.msra.mxu0 0
        %2119 = vmatpush.bf16.xpose.msra.mxu0 %v2110
        %2120 = vmatmul.bf16.gmra.mxu0 %v2107
        %v2121 = vpop.f32.mrf.mxu0
        %v2122 = vadd.f32 0.0, %v2121
        %v2123 = vpop.f32.mrf.mxu0
        %2124 = vdwg.mxu0
        %v2125 = vmul.f32 %v2065, 0.35355338
        %v2126 = vmul.f32 %v2084, 0.35355338
        %v2127 = vmul.f32 %v2103, 0.35355338
        %v2128 = vmul.f32 %v2122, 0.35355338
        %v2129 = vsel %vm931, %v2125, -inf
        %2130 = vmax.xlane.f32.xlu0 %v2129
        %v2131 = vpop.xlane.xlu0 %2130
        %v2132 = vsel %vm931, %v2126, -inf
        %2133 = vmax.xlane.f32.xlu0 %v2132
        %v2134 = vpop.xlane.xlu0 %2133
        %v2135 = vsel %vm931, %v2127, -inf
        %2136 = vmax.xlane.f32.xlu0 %v2135
        %v2137 = vpop.xlane.xlu0 %2136
        %v2138 = vsel %vm931, %v2128, -inf
        %2139 = vmax.xlane.f32.xlu0 %v2138
        %v2140 = vpop.xlane.xlu0 %2139
        %v2141 = vsub.f32 %v2125, %v2131
        %v2142 = vsub.f32 %v2126, %v2134
        %v2143 = vsub.f32 %v2127, %v2137
        %v2144 = vsub.f32 %v2128, %v2140
        %v2145 = vmul.f32 %v2141, 1.442695
        %v2146 = vpow.pop %v2145
        %v2147 = vmul.f32 %v2142, 1.442695
        %v2148 = vpow.pop %v2147
        %v2149 = vmul.f32 %v2143, 1.442695
        %v2150 = vpow.pop %v2149
        %v2151 = vmul.f32 %v2144, 1.442695
        %v2152 = vpow.pop %v2151
        %v2153 = vsel %vm931, %v2146, 0.0
        %2154 = vadd.xlane.f32.xlu0 %v2153
        %v2155 = vpop.xlane.xlu0 %2154
        %v2156 = vsel %vm931, %v2148, 0.0
        %2157 = vadd.xlane.f32.xlu0 %v2156
        %v2158 = vpop.xlane.xlu0 %2157
        %v2159 = vsel %vm931, %v2150, 0.0
        %2160 = vadd.xlane.f32.xlu0 %v2159
        %v2161 = vpop.xlane.xlu0 %2160
        %v2162 = vsel %vm931, %v2152, 0.0
        %2163 = vadd.xlane.f32.xlu0 %v2162
        %v2164 = vpop.xlane.xlu0 %2163
        %v2165 = vrcp.pop %v2155
        %v2166 = vrcp.pop %v2158
        %v2167 = vrcp.pop %v2161
        %v2168 = vrcp.pop %v2164
        %v2169 = vmul.f32 %v2146, %v2165
        %v2170 = vmul.f32 %v2148, %v2166
        %v2171 = vmul.f32 %v2150, %v2167
        %v2172 = vmul.f32 %v2152, %v2168
        %v2173 = vpack.c.bf16 %v2169, %v2169
        %v2174 = vpack.c.bf16 %v2170, %v2170
        %v2175 = vpack.c.bf16 %v2171, %v2171
        %v2176 = vpack.c.bf16 %v2172, %v2172
        %v2178 = vsel %vm931, %v2173, 0
        %v2181 = vsel %vm1063, %v2045, 0
        %2183 = vmatpush.bf16.msra.mxu0 0
        %2184 = vmatpush.bf16.msra.mxu0 0
        %2185 = vmatpush.bf16.msra.mxu0 0
        %2186 = vmatpush.bf16.msra.mxu0 0
        %2187 = vmatpush.bf16.msra.mxu0 0
        %2188 = vmatpush.bf16.msra.mxu0 0
        %2189 = vmatpush.bf16.msra.mxu0 0
        %2190 = vmatpush.bf16.msra.mxu0 %v2181
        %2191 = vmatmul.bf16.gmra.mxu0 %v2178
        %v2192 = vpop.f32.mrf.mxu0
        %v2193 = vadd.f32 0.0, %v2192
        %v2194 = vpop.f32.mrf.mxu0
        %2195 = vdwg.mxu0
        %v2197 = vsel %vm931, %v2174, 0
        %v2200 = vsel %vm1063, %v2046, 0
        %2202 = vmatpush.bf16.msra.mxu0 0
        %2203 = vmatpush.bf16.msra.mxu0 0
        %2204 = vmatpush.bf16.msra.mxu0 0
        %2205 = vmatpush.bf16.msra.mxu0 0
        %2206 = vmatpush.bf16.msra.mxu0 0
        %2207 = vmatpush.bf16.msra.mxu0 0
        %2208 = vmatpush.bf16.msra.mxu0 0
        %2209 = vmatpush.bf16.msra.mxu0 %v2200
        %2210 = vmatmul.bf16.gmra.mxu0 %v2197
        %v2211 = vpop.f32.mrf.mxu0
        %v2212 = vadd.f32 0.0, %v2211
        %v2213 = vpop.f32.mrf.mxu0
        %2214 = vdwg.mxu0
        %v2216 = vsel %vm931, %v2175, 0
        %v2219 = vsel %vm1063, %v2047, 0
        %2221 = vmatpush.bf16.msra.mxu0 0
        %2222 = vmatpush.bf16.msra.mxu0 0
        %2223 = vmatpush.bf16.msra.mxu0 0
        %2224 = vmatpush.bf16.msra.mxu0 0
        %2225 = vmatpush.bf16.msra.mxu0 0
        %2226 = vmatpush.bf16.msra.mxu0 0
        %2227 = vmatpush.bf16.msra.mxu0 0
        %2228 = vmatpush.bf16.msra.mxu0 %v2219
        %2229 = vmatmul.bf16.gmra.mxu0 %v2216
        %v2230 = vpop.f32.mrf.mxu0
        %v2231 = vadd.f32 0.0, %v2230
        %v2232 = vpop.f32.mrf.mxu0
        %2233 = vdwg.mxu0
        %v2235 = vsel %vm931, %v2176, 0
        %v2238 = vsel %vm1063, %v2048, 0
        %2240 = vmatpush.bf16.msra.mxu0 0
        %2241 = vmatpush.bf16.msra.mxu0 0
        %2242 = vmatpush.bf16.msra.mxu0 0
        %2243 = vmatpush.bf16.msra.mxu0 0
        %2244 = vmatpush.bf16.msra.mxu0 0
        %2245 = vmatpush.bf16.msra.mxu0 0
        %2246 = vmatpush.bf16.msra.mxu0 0
        %2247 = vmatpush.bf16.msra.mxu0 %v2238
        %2248 = vmatmul.bf16.gmra.mxu0 %v2235
        %v2249 = vpop.f32.mrf.mxu0
        %v2250 = vadd.f32 0.0, %v2249
        %v2251 = vpop.f32.mrf.mxu0
        %2252 = vdwg.mxu0
        %v2253 = vpack.c.bf16 %v2212, %v2193
        %v2254 = vpack.c.bf16 %v2250, %v2231
        %s2255 = scalar_lea.vmem %s727, 12
        %v2256 = vld [vmem:[%s2255] sm:$0xf]
        %v2258 = vsel %vm931, %v2253, 0
        %v2261 = vsel %vm931, %v2254, 0
        %v2264 = vsel %vm1063, %v2256, 0
        %2266 = vmatpush.bf16.msra.mxu0 0
        %2267 = vmatpush.bf16.msra.mxu0 0
        %2268 = vmatpush.bf16.msra.mxu0 0
        %2269 = vmatpush.bf16.msra.mxu0 0
        %2270 = vmatpush.bf16.msra.mxu0 0
        %2271 = vmatpush.bf16.msra.mxu0 0
        %2272 = vmatpush.bf16.msra.mxu0 0
        %2273 = vmatpush.bf16.msra.mxu0 %v2264
        %2274 = vmatmul.bf16.gmra.mxu0 %v2258
        %v2275 = vpop.f32.mrf.mxu0
        %v2276 = vadd.f32 0.0, %v2275
        %v2277 = vpop.f32.mrf.mxu0
        %v2278 = vadd.f32 0.0, %v2277
        %2279 = vmatmul.bf16.gmra.mxu0 %v2261
        %v2280 = vpop.f32.mrf.mxu0
        %v2281 = vadd.f32 0.0, %v2280
        %v2282 = vpop.f32.mrf.mxu0
        %v2283 = vadd.f32 0.0, %v2282
        %2284 = vdwg.mxu0
        %v2285 = vadd.f32 %v1910, %v2276
        %v2286 = vadd.f32 %v1911, %v2278
        %v2287 = vadd.f32 %v1912, %v2281
        %v2288 = vadd.f32 %v1913, %v2283
        %v2289 = vld [vmem:[%s730] sm:$0x1]
        %v2291 = vperm.slane %v2289, 0
        %v2293 = vadd.f32 %v2285, %v2291
        %v2294 = vadd.f32 %v2286, %v2291
        %v2295 = vadd.f32 %v2287, %v2291
        %v2296 = vadd.f32 %v2288, %v2291
        %v2297 = vld [vmem:[%s735] sm:$0xf]
        %v2298 = vld [vmem:[%s735 + $0x4] sm:$0xf]
        %v2299 = vld [vmem:[%s735 + $0x8] sm:$0xf]
        %v2300 = vld [vmem:[%s735 + $0xc] sm:$0xf]
        %v2301 = vpack.c.bf16 %v2294, %v2293
        %v2302 = vpack.c.bf16 %v2296, %v2295
        %v2303 = vld [vmem:[%s740] sm:$0xf]
        %v2304 = vld [vmem:[%s740 + $0x4] sm:$0xf]
        %v2305 = vld [vmem:[%s740 + $0x8] sm:$0xf]
        %v2306 = vld [vmem:[%s740 + $0xc] sm:$0xf]
        %v2311 = vunpack.c.l.b16 %v2303
        %v2312 = vunpack.c.l.b16 %v2304
        %v2313 = vunpack.c.l.b16 %v2305
        %v2314 = vunpack.c.l.b16 %v2306
        %v2315 = vpack.c.b16 %v2312, %v2311
        %v2316 = vpack.c.b16 %v2314, %v2313
        %v2320 = vsel %vm809, %v2301, 0
        %v2323 = vsel %vm809, %v2302, 0
        %2325 = vmatpush.bf16.msra.mxu0 0
        %2326 = vmatpush.bf16.msra.mxu0 0
        %2327 = vmatpush.bf16.msra.mxu0 0
        %2328 = vmatpush.bf16.msra.mxu0 0
        %2329 = vmatpush.bf16.msra.mxu0 0
        %2330 = vmatpush.bf16.msra.mxu0 0
        %2331 = vmatpush.bf16.msra.mxu0 %v2316
        %2332 = vmatpush.bf16.msra.mxu0 %v2315
        %2333 = vmatmul.bf16.gmra.mxu0 %v2320
        %v2334 = vpop.f32.mrf.mxu0
        %v2335 = vadd.f32 0.0, %v2334
        %v2336 = vpop.f32.mrf.mxu0
        %v2337 = vadd.f32 0.0, %v2336
        %2338 = vmatmul.bf16.gmra.mxu0 %v2323
        %v2339 = vpop.f32.mrf.mxu0
        %v2340 = vadd.f32 0.0, %v2339
        %v2341 = vpop.f32.mrf.mxu0
        %v2342 = vadd.f32 0.0, %v2341
        %2343 = vdwg.mxu0
        %v2348 = vunpack.c.l.b16 %v2297
        %v2349 = vunpack.c.l.b16 %v2298
        %v2350 = vunpack.c.l.b16 %v2299
        %v2351 = vunpack.c.l.b16 %v2300
        %v2352 = vpack.c.b16 %v2349, %v2348
        %v2353 = vpack.c.b16 %v2351, %v2350
        %2356 = vmatpush.bf16.msra.mxu0 0
        %2357 = vmatpush.bf16.msra.mxu0 0
        %2358 = vmatpush.bf16.msra.mxu0 0
        %2359 = vmatpush.bf16.msra.mxu0 0
        %2360 = vmatpush.bf16.msra.mxu0 0
        %2361 = vmatpush.bf16.msra.mxu0 0
        %2362 = vmatpush.bf16.msra.mxu0 %v2353
        %2363 = vmatpush.bf16.msra.mxu0 %v2352
        %2364 = vmatmul.bf16.gmra.mxu0 %v811
        %v2365 = vpop.f32.mrf.mxu0
        %v2366 = vadd.f32 %v2335, %v2365
        %v2367 = vpop.f32.mrf.mxu0
        %v2368 = vadd.f32 %v2337, %v2367
        %2369 = vmatmul.bf16.gmra.mxu0 %v814
        %v2370 = vpop.f32.mrf.mxu0
        %v2371 = vadd.f32 %v2340, %v2370
        %v2372 = vpop.f32.mrf.mxu0
        %v2373 = vadd.f32 %v2342, %v2372
        %2374 = vdwg.mxu0
        %v2375 = vld [vmem:[%s743] sm:$0x1]
        %v2377 = vperm.slane %v2375, 0
        %v2379 = vadd.f32 %v2366, %v2377
        %v2380 = vadd.f32 %v2368, %v2377
        %v2381 = vadd.f32 %v2371, %v2377
        %v2382 = vadd.f32 %v2373, %v2377
        %vm2383 = vcmask 523264
        %v2384 = vsel %vm2383, %v2379, 0.0
        %v2385 = vsel %vm2383, %v2380, 0.0
        %v2386 = vadd.f32 %v2384, %v2385
        %v2387 = vrot.slane %v2386, 4
        %v2388 = vadd.f32 %v2386, %v2387
        %v2389 = vrot.slane %v2388, 2
        %v2390 = vadd.f32 %v2388, %v2389
        %v2391 = vrot.slane %v2390, 1
        %v2392 = vadd.f32 %v2390, %v2391
        %v2393 = vsel %vm2383, %v2381, 0.0
        %v2394 = vsel %vm2383, %v2382, 0.0
        %v2395 = vadd.f32 %v2393, %v2394
        %v2396 = vrot.slane %v2395, 4
        %v2397 = vadd.f32 %v2395, %v2396
        %v2398 = vrot.slane %v2397, 2
        %v2399 = vadd.f32 %v2397, %v2398
        %v2400 = vrot.slane %v2399, 1
        %v2401 = vadd.f32 %v2399, %v2400
        %v2402 = vrcp.pop 16.0
        %v2403 = vmul.f32 16.0, %v2402
        %v2404 = vsub.f32 1.0, %v2403
        %v2405 = vmul.f32 %v2402, %v2404
        %v2406 = vadd.f32 %v2402, %v2405
        %vm2407 = vweird.f32 %v2402
        %v2408 = vsel %vm2407, %v2402, %v2406
        %v2409 = vmul.f32 %v2392, %v2408
        %v2410 = vmul.f32 %v2401, %v2408
        %v2411 = vmul.f32 %v2379, %v2379
        %v2412 = vmul.f32 %v2380, %v2380
        %v2413 = vmul.f32 %v2381, %v2381
        %v2414 = vmul.f32 %v2382, %v2382
        %v2415 = vsel %vm2383, %v2411, 0.0
        %v2416 = vsel %vm2383, %v2412, 0.0
        %v2417 = vadd.f32 %v2415, %v2416
        %v2418 = vrot.slane %v2417, 4
        %v2419 = vadd.f32 %v2417, %v2418
        %v2420 = vrot.slane %v2419, 2
        %v2421 = vadd.f32 %v2419, %v2420
        %v2422 = vrot.slane %v2421, 1
        %v2423 = vadd.f32 %v2421, %v2422
        %v2424 = vsel %vm2383, %v2413, 0.0
        %v2425 = vsel %vm2383, %v2414, 0.0
        %v2426 = vadd.f32 %v2424, %v2425
        %v2427 = vrot.slane %v2426, 4
        %v2428 = vadd.f32 %v2426, %v2427
        %v2429 = vrot.slane %v2428, 2
        %v2430 = vadd.f32 %v2428, %v2429
        %v2431 = vrot.slane %v2430, 1
        %v2432 = vadd.f32 %v2430, %v2431
        %v2433 = vmul.f32 %v2423, %v2408
        %v2434 = vmul.f32 %v2432, %v2408
        %v2435 = vmul.f32 %v2409, %v2409
        %v2436 = vmul.f32 %v2410, %v2410
        %v2437 = vsub.f32 %v2433, %v2435
        %v2438 = vsub.f32 %v2434, %v2436
        %v2439 = vsub.f32 %v2379, %v2409
        %v2440 = vsub.f32 %v2380, %v2409
        %v2441 = vsub.f32 %v2381, %v2410
        %v2442 = vsub.f32 %v2382, %v2410
        %v2443 = vadd.f32 %v2437, 1e-05
        %v2444 = vadd.f32 %v2438, 1e-05
        %v2445 = vrsqrt.pop %v2443
        %v2446 = vmul.f32 %v2445, %v2443
        %v2447 = vmul.f32 %v2446, %v2445
        %v2448 = vmul.f32 0.5, %v2447
        %v2449 = vsub.f32 1.5, %v2448
        %v2450 = vmul.f32 %v2445, %v2449
        %vm2451 = vweird.f32 %v2443
        %vm2452 = vweird.f32 %v2445
        %vm2453 = vmor %vm2451, %vm2452
        %v2454 = vsel %vm2453, %v2445, %v2450
        %v2455 = vrsqrt.pop %v2444
        %v2456 = vmul.f32 %v2455, %v2444
        %v2457 = vmul.f32 %v2456, %v2455
        %v2458 = vmul.f32 0.5, %v2457
        %v2459 = vsub.f32 1.5, %v2458
        %v2460 = vmul.f32 %v2455, %v2459
        %vm2461 = vweird.f32 %v2444
        %vm2462 = vweird.f32 %v2455
        %vm2463 = vmor %vm2461, %vm2462
        %v2464 = vsel %vm2463, %v2455, %v2460
        %v2465 = vmul.f32 %v2439, %v2454
        %v2466 = vmul.f32 %v2440, %v2454
        %v2467 = vmul.f32 %v2441, %v2464
        %v2468 = vmul.f32 %v2442, %v2464
        %v2469 = vld [vmem:[%s746] sm:$0x1]
        %v2471 = vperm.slane %v2469, 0
        %v2473 = vmul.f32 %v2465, %v2471
        %v2474 = vmul.f32 %v2466, %v2471
        %v2475 = vmul.f32 %v2467, %v2471
        %v2476 = vmul.f32 %v2468, %v2471
        %v2477 = vld [vmem:[%s749] sm:$0x1]
        %v2479 = vperm.slane %v2477, 0
        %v2481 = vadd.f32 %v2473, %v2479
        %v2482 = vadd.f32 %v2474, %v2479
        %v2483 = vadd.f32 %v2475, %v2479
        %v2484 = vadd.f32 %v2476, %v2479
        %v2485 = vmax.f32 %v2481, 0.0
        %v2486 = vmax.f32 %v2482, 0.0
        %v2487 = vmax.f32 %v2483, 0.0
        %v2488 = vmax.f32 %v2484, 0.0
        %v2489 = vpack.c.bf16 %v2486, %v2485
        %v2490 = vpack.c.bf16 %v2488, %v2487
        %v2491 = vld [vmem:[%s754] sm:$0xf]
        %v2492 = vld [vmem:[%s754 + $0x4] sm:$0xf]
        %v2493 = vld [vmem:[%s754 + $0x8] sm:$0xf]
        %v2494 = vld [vmem:[%s754 + $0xc] sm:$0xf]
        %v2495 = vld [vmem:[%s754 + $0x10] sm:$0xf]
        %v2496 = vld [vmem:[%s754 + $0x14] sm:$0xf]
        %v2497 = vld [vmem:[%s754 + $0x18] sm:$0xf]
        %v2498 = vld [vmem:[%s754 + $0x1c] sm:$0xf]
        %v2499 = vld [vmem:[%s757] sm:$0x1]
        %v2501 = vperm.slane %v2499, 0
        %v2511 = vunpack.c.l.b16 %v2491
        %v2512 = vunpack.c.l.b16 %v2492
        %v2513 = vunpack.c.l.b16 %v2493
        %v2514 = vunpack.c.l.b16 %v2494
        %v2515 = vunpack.c.l.b16 %v2495
        %v2516 = vunpack.c.l.b16 %v2496
        %v2517 = vunpack.c.l.b16 %v2497
        %v2518 = vunpack.c.l.b16 %v2498
        %v2519 = vpack.c.b16 %v2512, %v2511
        %v2520 = vpack.c.b16 %v2514, %v2513
        %v2521 = vpack.c.b16 %v2516, %v2515
        %v2522 = vpack.c.b16 %v2518, %v2517
        %v2528 = vsel %vm2383, %v2489, 0
        %v2531 = vsel %vm2383, %v2490, 0
        %2533 = vmatpush.bf16.msra.mxu0 0
        %2534 = vmatpush.bf16.msra.mxu0 0
        %2535 = vmatpush.bf16.msra.mxu0 0
        %2536 = vmatpush.bf16.msra.mxu0 0
        %2537 = vmatpush.bf16.msra.mxu0 %v2522
        %2538 = vmatpush.bf16.msra.mxu0 %v2521
        %2539 = vmatpush.bf16.msra.mxu0 %v2520
        %2540 = vmatpush.bf16.msra.mxu0 %v2519
        %2541 = vmatmul.bf16.gmra.mxu0 %v2528
        %v2542 = vpop.f32.mrf.mxu0
        %v2543 = vadd.f32 %v2501, %v2542
        %v2544 = vpop.f32.mrf.mxu0
        %v2545 = vadd.f32 %v2501, %v2544
        %2546 = vmatmul.bf16.gmra.mxu0 %v2531
        %v2547 = vpop.f32.mrf.mxu0
        %v2548 = vadd.f32 %v2501, %v2547
        %v2549 = vpop.f32.mrf.mxu0
        %v2550 = vadd.f32 %v2501, %v2549
        %2551 = vdwg.mxu0
        %v2552 = vadd.f32 %v772, %v2543
        %v2553 = vadd.f32 %v773, %v2545
        %v2554 = vadd.f32 %v774, %v2548
        %v2555 = vadd.f32 %v775, %v2550
        %2556 = vst.msk [vmem:[#allocation2] sm:$0xff] %vm809, %v2552
        %2557 = vst.msk [vmem:[#allocation2 + $0x8] sm:$0xff] %vm809, %v2553
        %2558 = vst.msk [vmem:[#allocation2 + $0x10] sm:$0xff] %vm809, %v2554
        %2559 = vst.msk [vmem:[#allocation2 + $0x18] sm:$0xff] %vm809, %v2555
        %2560 = vst.msk [vmem:[#allocation5] sm:$0xff] %vm809, %v2552
        %2561 = vst.msk [vmem:[#allocation5 + $0x8] sm:$0xff] %vm809, %v2553
        %2562 = vst.msk [vmem:[#allocation5 + $0x10] sm:$0xff] %vm809, %v2554
        %2563 = vst.msk [vmem:[#allocation5 + $0x18] sm:$0xff] %vm809, %v2555
        // Predicated region
        $region89: #{tpu_custom_call.1} parent=83 // pred_check
          %p2564 = pneg %p461
        $region90: #{tpu_custom_call.1} parent=83 // pred_check_branch
          %2566 = sbr.rel (%p2564) target = $region92
        $region91: #{tpu_custom_call.1} parent=83 // pred_region
          %2568 = vsyncadd [#allocation6], 0
          %s2569 = sshll.u32 [#allocation5], 4
          %s2570 = int_to_ptr.vmem [resolvable:$true] %s2569
          %s2571 = sshll.u32 %s17, 4
          %s2572 = int_to_ptr.hbm [resolvable:$true] %s2571
          %2577 = dma.vmem_to_hbm [thread:$0]  %s2570, 512, %s2572, [#allocation6], 128, 128, 8
        $region92: #{tpu_custom_call.1} parent=83 // pred_fallthru
          _
        // Predicated region
        $region93: #{tpu_custom_call.1} parent=83 // pred_check
          %p2578 = pneg %p461
        $region94: #{tpu_custom_call.1} parent=83 // pred_check_branch
          %2580 = sbr.rel (%p2578) target = $region96
        $region95: #{tpu_custom_call.1} parent=83 // pred_region
          %2582 = dma.done [#allocation6], 512
        $region96: #{tpu_custom_call.1} parent=83 // pred_fallthru
          _
      $region84: #{tpu_custom_call.1} parent=5 // pred_fallthru
        _
      %p2583 = scmp.le.s32.totalorder 2, %s32
      // Predicated region
      $region97: #{tpu_custom_call.1} parent=5 // pred_check
        %p2584 = pneg %p2583
      $region98: #{tpu_custom_call.1} parent=5 // pred_check_branch
        %2586 = sbr.rel (%p2584) target = $region100
      $region99: #{tpu_custom_call.1} parent=5 // pred_region
        %s2587 = ssub.s32 %s32, 2
      $region100: #{tpu_custom_call.1} parent=5 // pred_fallthru
        _
    $region6: #{tpu_custom_call.1} parent=1 // loop_footer
      %s36 = sadd.s32 1, %s32
    $region7: #{tpu_custom_call.1} parent=1 // loop_footer_branch
      %31 = sbr.rel target = $region3
    $region8: #{tpu_custom_call.1} parent=1 // loop_exit
      _
    %2588 = vsyncpa [#allocation6], 1
    %s2589 = scalar_lea.sflag [#allocation6], 1
    %2590 = vsyncpa %s2589, 1

</llo_original>
